<compile_context>
chip_gen: v6e
topology: v6e:2x2x1
jax: 0.10.0
libtpu: 0.0.40
codegen_flags: <defaults>
</compile_context>

<pallas_src>
import functools

import jax
import jax.numpy as jnp
from jax import lax
from jax.experimental import pallas as pl
from jax.experimental.pallas import tpu as pltpu


def _cnn2d_layer_kernel(xpad_ref, w_ref, b_ref, gamma_ref, beta_ref,
                        act_ref, conv_ref, patch_ref, *,
                        KH, KW, eps, negative_slope):
    """Fused conv (im2col + one MXU matmul) + bias + BatchNorm(batch stats)
    + LeakyReLU for the WHOLE batch in one grid step.

    xpad_ref : (N, Hp, Wp, Cin)   spatially pre-padded input, NHWC
    w_ref    : (Cout, K=KH*KW*Cin) weight, column order (kh, kw, cin)
    b_ref, gamma_ref, beta_ref : (Cout, 1)
    act_ref  : (N, Cout, Ho*Wo)   LeakyReLU(BN(conv)) -- flattened NCHW
    conv_ref : (N, Cout, Ho*Wo)   conv output          -- flattened NCHW
    patch_ref: (N*Ho*Wo, K)       VMEM scratch (2-D im2col patch matrix)
    """
    N, Hp, Wp, Cin = xpad_ref.shape
    Cout, K = w_ref.shape
    Ho = Hp - KH + 1
    Wo = Wp - KW + 1
    HW = Ho * Wo
    NHW = N * HW

    # ---- im2col: one batched store per (kh, kw) tap, column order (kh,kw,ci)
    for kh in range(KH):
        for kw in range(KW):
            c0 = (kh * KW + kw) * Cin
            patch_ref[:, c0:c0 + Cin] = (
                xpad_ref[:, kh:kh + Ho, kw:kw + Wo, :].reshape(NHW, Cin))
    # TODO(synk): with Cin=4 each tap store is only 4 lanes wide; for large
    # Ho*Wo fold Cin into the input lane dim (or, on v7x, accumulate KH*KW
    # shifted dot_generals into the MRB) to widen these stores.

    # ---- single fused MXU matmul, channel-major output: (Cout,K) x (NHW,K)^T
    acc = lax.dot_general(
        w_ref[...], patch_ref[...],
        dimension_numbers=(((1,), (1,)), ((), ())),
        preferred_element_type=jnp.float32,
        precision=lax.Precision.HIGHEST)          # match f32 nn.Conv2d numerics
    acc = acc + b_ref[...]                        # (Cout, NHW) conv output

    # ---- BatchNorm2d training-mode batch stats (biased variance),
    #      centered two-pass form for numerical stability.
    inv_count = 1.0 / NHW
    mean = jnp.sum(acc, axis=1, keepdims=True) * inv_count            # (Cout,1)
    centered = acc - mean
    var = jnp.sum(centered * centered, axis=1, keepdims=True) * inv_count
    scale = gamma_ref[...] * lax.rsqrt(var + eps)                      # (Cout,1)
    y = centered * scale + beta_ref[...]
    act = jnp.where(y >= 0, y, negative_slope * y)                     # LeakyReLU

    # ---- lane-dense (Cout, Ho*Wo) stores, already flattened NCHW ----
    for n in range(N):
        conv_ref[n] = acc[:, n * HW:(n + 1) * HW]
        act_ref[n] = act[:, n * HW:(n + 1) * HW]


def cnn2d_layer(x_nchw, w_oihw, bias, gamma, beta, *,
                padding=1, eps=1e-5, negative_slope=0.01):
    """Equivalent of CNN2dLayer.forward: returns (act(bn(conv(x))), conv(x))."""
    N, Cin, H, W = x_nchw.shape
    Cout, _, KH, KW = w_oihw.shape
    # TODO(synk): stride=1 / dilation=1 are hard-coded in the Ho/Wo + im2col math.
    Hp, Wp = H + 2 * padding, W + 2 * padding
    Ho, Wo = Hp - KH + 1, Wp - KW + 1
    HW = Ho * Wo
    K = KH * KW * Cin

    # Input layout glue (one fused XLA pass over the small input). Outputs come
    # back from the kernel already in flattened NCHW, so no output transposes.
    x_nhwc = jnp.transpose(x_nchw, (0, 2, 3, 1)).astype(jnp.float32)
    xpad = jnp.pad(x_nhwc,
                   ((0, 0), (padding, padding), (padding, padding), (0, 0)))

    # weight -> (Cout, KH*KW*Cin), column order (kh, kw, cin) matching im2col
    w_t = jnp.transpose(w_oihw, (0, 2, 3, 1)).reshape(Cout, K).astype(jnp.float32)
    b_col = bias.reshape(Cout, 1).astype(jnp.float32)
    g_col = gamma.reshape(Cout, 1).astype(jnp.float32)
    be_col = beta.reshape(Cout, 1).astype(jnp.float32)

    act_flat, conv_flat = pl.pallas_call(
        functools.partial(_cnn2d_layer_kernel, KH=KH, KW=KW, eps=eps,
                          negative_slope=negative_slope),
        grid=(1,),
        in_specs=[
            pl.BlockSpec((N, Hp, Wp, Cin), lambda i: (0, 0, 0, 0)),
            pl.BlockSpec((Cout, K), lambda i: (0, 0)),
            pl.BlockSpec((Cout, 1), lambda i: (0, 0)),
            pl.BlockSpec((Cout, 1), lambda i: (0, 0)),
            pl.BlockSpec((Cout, 1), lambda i: (0, 0)),
        ],
        out_specs=(
            pl.BlockSpec((N, Cout, HW), lambda i: (0, 0, 0)),
            pl.BlockSpec((N, Cout, HW), lambda i: (0, 0, 0)),
        ),
        out_shape=(
            jax.ShapeDtypeStruct((N, Cout, HW), jnp.float32),
            jax.ShapeDtypeStruct((N, Cout, HW), jnp.float32),
        ),
        scratch_shapes=[pltpu.VMEM((N * HW, K), jnp.float32)],
        compiler_params=pltpu.CompilerParams(
            dimension_semantics=("arbitrary",)),
    )(xpad, w_t, b_col, g_col, be_col)
    # TODO(synk): when Ho*Wo grows, tile the conv over output-row blocks with a
    # +/-padding halo, budget the patch against 64 MiB VMEM on v7x, keep a
    # >=2-way "parallel" grid axis for the two TensorCores, and move the
    # (then-cheap) BN/act epilogue into fused XLA or a final grid step.
    # TODO(synk): running_mean / running_var side-effect updates of
    # nn.BatchNorm2d (training mode) are not materialized here.

    return (act_flat.reshape(N, Cout, Ho, Wo),
            conv_flat.reshape(N, Cout, Ho, Wo))


def _reference(x, w, b, gamma, beta, *, padding, eps, negative_slope):
    conv = lax.conv_general_dilated(
        x, w, window_strides=(1, 1),
        padding=[(padding, padding), (padding, padding)],
        dimension_numbers=("NCHW", "OIHW", "NCHW"),
        precision=lax.Precision.HIGHEST) + b.reshape(1, -1, 1, 1)
    mean = jnp.mean(conv, axis=(0, 2, 3), keepdims=True)
    var = jnp.mean((conv - mean) ** 2, axis=(0, 2, 3), keepdims=True)
    y = (conv - mean) * lax.rsqrt(var + eps) * gamma.reshape(1, -1, 1, 1) \
        + beta.reshape(1, -1, 1, 1)
    act = jnp.where(y >= 0, y, negative_slope * y)
    return act, conv


if __name__ == "__main__":
    # pars = {'conv': dict(in_channels=4, out_channels=8, kernel_size=3, padding=1),
    #         'bn':   dict(num_features=8),
    #         'act':  dict(negative_slope=0.01)}
    N, Cin, H, W = 2, 4, 16, 16
    Cout, Kk = 8, 3

    key = jax.random.PRNGKey(0)
    kx, kwt, kb, kg, kbe = jax.random.split(key, 5)

    x = jax.random.normal(kx, (N, Cin, H, W), dtype=jnp.float32)
    w = jax.random.normal(kwt, (Cout, Cin, Kk, Kk), dtype=jnp.float32) * 0.1
    b = jax.random.normal(kb, (Cout,), dtype=jnp.float32) * 0.1
    gamma = 1.0 + 0.1 * jax.random.normal(kg, (Cout,), dtype=jnp.float32)
    beta = 0.1 * jax.random.normal(kbe, (Cout,), dtype=jnp.float32)

    act_out, conv_out = cnn2d_layer(x, w, b, gamma, beta,
                                    padding=1, eps=1e-5, negative_slope=0.01)
    jax.block_until_ready((act_out, conv_out))

    assert act_out.shape == (N, Cout, H, W)
    assert conv_out.shape == (N, Cout, H, W)

    act_ref, conv_ref = _reference(x, w, b, gamma, beta,
                                   padding=1, eps=1e-5, negative_slope=0.01)
    assert jnp.allclose(conv_out, conv_ref, atol=1e-3, rtol=1e-3)
    assert jnp.allclose(act_out, act_ref, atol=1e-3, rtol=1e-3)

    print("KERNEL_OK")
</pallas_src>

<mosaic_0001>
module attributes {stable_mosaic.version = 11 : i64} {
  func.func @_cnn2d_layer_kernel(%arg0: i32, %arg1: memref<2x18x18x4xf32, #tpu.memory_space<vmem>>, %arg2: memref<8x36xf32, #tpu.memory_space<vmem>>, %arg3: memref<8x1xf32, #tpu.memory_space<vmem>>, %arg4: memref<8x1xf32, #tpu.memory_space<vmem>>, %arg5: memref<8x1xf32, #tpu.memory_space<vmem>>, %arg6: memref<2x8x256xf32, #tpu.memory_space<vmem>>, %arg7: memref<2x8x256xf32, #tpu.memory_space<vmem>>, %arg8: memref<512x36xf32, #tpu.memory_space<vmem>>) attributes {dimension_semantics = [#tpu.dimension_semantics<arbitrary>], iteration_bounds = array<i64: 1>, scalar_prefetch = 0 : i64, scratch_operands = 1 : i64, tpu.core_type = #tpu.core_type<tc>, window_params = [{pipeline_mode = #tpu.pipeline_mode<synchronous>, transform_indices = @transform_0, window_bounds = array<i64: 2, 18, 18, 4>}, {pipeline_mode = #tpu.pipeline_mode<synchronous>, transform_indices = @transform_1, window_bounds = array<i64: 8, 36>}, {pipeline_mode = #tpu.pipeline_mode<synchronous>, transform_indices = @transform_2, window_bounds = array<i64: 8, 1>}, {pipeline_mode = #tpu.pipeline_mode<synchronous>, transform_indices = @transform_3, window_bounds = array<i64: 8, 1>}, {pipeline_mode = #tpu.pipeline_mode<synchronous>, transform_indices = @transform_4, window_bounds = array<i64: 8, 1>}, {pipeline_mode = #tpu.pipeline_mode<synchronous>, transform_indices = @transform_5, window_bounds = array<i64: 2, 8, 256>}, {pipeline_mode = #tpu.pipeline_mode<synchronous>, transform_indices = @transform_6, window_bounds = array<i64: 2, 8, 256>}]} {
    %c0 = arith.constant 0 : index
    %c0_0 = arith.constant 0 : index
    %c0_1 = arith.constant 0 : index
    %c0_2 = arith.constant 0 : index
    %0 = vector.load %arg1[%c0, %c0_0, %c0_1, %c0_2] : memref<2x18x18x4xf32, #tpu.memory_space<vmem>>, vector<2x16x16x4xf32>
    %1 = vector.shape_cast %0 : vector<2x16x16x4xf32> to vector<512x4xf32>
    %c0_3 = arith.constant 0 : index
    %c0_4 = arith.constant 0 : index
    %2 = vector.load %arg8[%c0_3, %c0_4] : memref<512x36xf32, #tpu.memory_space<vmem>>, vector<512x4xf32>
    tpu.vector_store %arg8[%c0_3, %c0_4], %1 {strides = array<i32>} : memref<512x36xf32, #tpu.memory_space<vmem>>, vector<512x4xf32>,
    %c0_5 = arith.constant 0 : index
    %c0_6 = arith.constant 0 : index
    %c1 = arith.constant 1 : index
    %c0_7 = arith.constant 0 : index
    %3 = vector.load %arg1[%c0_5, %c0_6, %c1, %c0_7] : memref<2x18x18x4xf32, #tpu.memory_space<vmem>>, vector<2x16x16x4xf32>
    %4 = vector.shape_cast %3 : vector<2x16x16x4xf32> to vector<512x4xf32>
    %c0_8 = arith.constant 0 : index
    %c4 = arith.constant 4 : index
    %5 = vector.load %arg8[%c0_8, %c4] : memref<512x36xf32, #tpu.memory_space<vmem>>, vector<512x4xf32>
    tpu.vector_store %arg8[%c0_8, %c4], %4 {strides = array<i32>} : memref<512x36xf32, #tpu.memory_space<vmem>>, vector<512x4xf32>,
    %c0_9 = arith.constant 0 : index
    %c0_10 = arith.constant 0 : index
    %c2 = arith.constant 2 : index
    %c0_11 = arith.constant 0 : index
    %6 = vector.load %arg1[%c0_9, %c0_10, %c2, %c0_11] : memref<2x18x18x4xf32, #tpu.memory_space<vmem>>, vector<2x16x16x4xf32>
    %7 = vector.shape_cast %6 : vector<2x16x16x4xf32> to vector<512x4xf32>
    %c0_12 = arith.constant 0 : index
    %c8 = arith.constant 8 : index
    %8 = vector.load %arg8[%c0_12, %c8] : memref<512x36xf32, #tpu.memory_space<vmem>>, vector<512x4xf32>
    tpu.vector_store %arg8[%c0_12, %c8], %7 {strides = array<i32>} : memref<512x36xf32, #tpu.memory_space<vmem>>, vector<512x4xf32>,
    %c0_13 = arith.constant 0 : index
    %c1_14 = arith.constant 1 : index
    %c0_15 = arith.constant 0 : index
    %c0_16 = arith.constant 0 : index
    %9 = vector.load %arg1[%c0_13, %c1_14, %c0_15, %c0_16] : memref<2x18x18x4xf32, #tpu.memory_space<vmem>>, vector<2x16x16x4xf32>
    %10 = vector.shape_cast %9 : vector<2x16x16x4xf32> to vector<512x4xf32>
    %c0_17 = arith.constant 0 : index
    %c12 = arith.constant 12 : index
    %11 = vector.load %arg8[%c0_17, %c12] : memref<512x36xf32, #tpu.memory_space<vmem>>, vector<512x4xf32>
    tpu.vector_store %arg8[%c0_17, %c12], %10 {strides = array<i32>} : memref<512x36xf32, #tpu.memory_space<vmem>>, vector<512x4xf32>,
    %c0_18 = arith.constant 0 : index
    %c1_19 = arith.constant 1 : index
    %c1_20 = arith.constant 1 : index
    %c0_21 = arith.constant 0 : index
    %12 = vector.load %arg1[%c0_18, %c1_19, %c1_20, %c0_21] : memref<2x18x18x4xf32, #tpu.memory_space<vmem>>, vector<2x16x16x4xf32>
    %13 = vector.shape_cast %12 : vector<2x16x16x4xf32> to vector<512x4xf32>
    %c0_22 = arith.constant 0 : index
    %c16 = arith.constant 16 : index
    %14 = vector.load %arg8[%c0_22, %c16] : memref<512x36xf32, #tpu.memory_space<vmem>>, vector<512x4xf32>
    tpu.vector_store %arg8[%c0_22, %c16], %13 {strides = array<i32>} : memref<512x36xf32, #tpu.memory_space<vmem>>, vector<512x4xf32>,
    %c0_23 = arith.constant 0 : index
    %c1_24 = arith.constant 1 : index
    %c2_25 = arith.constant 2 : index
    %c0_26 = arith.constant 0 : index
    %15 = vector.load %arg1[%c0_23, %c1_24, %c2_25, %c0_26] : memref<2x18x18x4xf32, #tpu.memory_space<vmem>>, vector<2x16x16x4xf32>
    %16 = vector.shape_cast %15 : vector<2x16x16x4xf32> to vector<512x4xf32>
    %c0_27 = arith.constant 0 : index
    %c20 = arith.constant 20 : index
    %17 = vector.load %arg8[%c0_27, %c20] : memref<512x36xf32, #tpu.memory_space<vmem>>, vector<512x4xf32>
    tpu.vector_store %arg8[%c0_27, %c20], %16 {strides = array<i32>} : memref<512x36xf32, #tpu.memory_space<vmem>>, vector<512x4xf32>,
    %c0_28 = arith.constant 0 : index
    %c2_29 = arith.constant 2 : index
    %c0_30 = arith.constant 0 : index
    %c0_31 = arith.constant 0 : index
    %18 = vector.load %arg1[%c0_28, %c2_29, %c0_30, %c0_31] : memref<2x18x18x4xf32, #tpu.memory_space<vmem>>, vector<2x16x16x4xf32>
    %19 = vector.shape_cast %18 : vector<2x16x16x4xf32> to vector<512x4xf32>
    %c0_32 = arith.constant 0 : index
    %c24 = arith.constant 24 : index
    %20 = vector.load %arg8[%c0_32, %c24] : memref<512x36xf32, #tpu.memory_space<vmem>>, vector<512x4xf32>
    tpu.vector_store %arg8[%c0_32, %c24], %19 {strides = array<i32>} : memref<512x36xf32, #tpu.memory_space<vmem>>, vector<512x4xf32>,
    %c0_33 = arith.constant 0 : index
    %c2_34 = arith.constant 2 : index
    %c1_35 = arith.constant 1 : index
    %c0_36 = arith.constant 0 : index
    %21 = vector.load %arg1[%c0_33, %c2_34, %c1_35, %c0_36] : memref<2x18x18x4xf32, #tpu.memory_space<vmem>>, vector<2x16x16x4xf32>
    %22 = vector.shape_cast %21 : vector<2x16x16x4xf32> to vector<512x4xf32>
    %c0_37 = arith.constant 0 : index
    %c28 = arith.constant 28 : index
    %23 = vector.load %arg8[%c0_37, %c28] : memref<512x36xf32, #tpu.memory_space<vmem>>, vector<512x4xf32>
    tpu.vector_store %arg8[%c0_37, %c28], %22 {strides = array<i32>} : memref<512x36xf32, #tpu.memory_space<vmem>>, vector<512x4xf32>,
    %c0_38 = arith.constant 0 : index
    %c2_39 = arith.constant 2 : index
    %c2_40 = arith.constant 2 : index
    %c0_41 = arith.constant 0 : index
    %24 = vector.load %arg1[%c0_38, %c2_39, %c2_40, %c0_41] : memref<2x18x18x4xf32, #tpu.memory_space<vmem>>, vector<2x16x16x4xf32>
    %25 = vector.shape_cast %24 : vector<2x16x16x4xf32> to vector<512x4xf32>
    %c0_42 = arith.constant 0 : index
    %c32 = arith.constant 32 : index
    %26 = vector.load %arg8[%c0_42, %c32] : memref<512x36xf32, #tpu.memory_space<vmem>>, vector<512x4xf32>
    tpu.vector_store %arg8[%c0_42, %c32], %25 {strides = array<i32>} : memref<512x36xf32, #tpu.memory_space<vmem>>, vector<512x4xf32>,
    %c0_43 = arith.constant 0 : index
    %c0_44 = arith.constant 0 : index
    %27 = vector.load %arg2[%c0_43, %c0_44] : memref<8x36xf32, #tpu.memory_space<vmem>>, vector<8x36xf32>
    %c0_45 = arith.constant 0 : index
    %c0_46 = arith.constant 0 : index
    %28 = vector.load %arg8[%c0_45, %c0_46] : memref<512x36xf32, #tpu.memory_space<vmem>>, vector<512x36xf32>
    %cst = arith.constant dense<0.000000e+00> : vector<8x512xf32>
    %29 = tpu.matmul %27, %28, %cst {dimension_numbers = #tpu.dot_dimension_numbers<[1], [1], [0], [0], [0, 0, 1, 0], [], []>, precision = #tpu.contract_precision<fp32>} : vector<8x36xf32>, vector<512x36xf32>, vector<8x512xf32> -> vector<8x512xf32>
    %c0_47 = arith.constant 0 : index
    %c0_48 = arith.constant 0 : index
    %30 = vector.load %arg3[%c0_47, %c0_48] : memref<8x1xf32, #tpu.memory_space<vmem>>, vector<8x1xf32>
    %31 = vector.broadcast %30 : vector<8x1xf32> to vector<8x512xf32>
    %32 = arith.addf %29, %31 : vector<8x512xf32>
    %cst_49 = arith.constant dense<0.000000e+00> : vector<8xf32>
    %33 = vector.multi_reduction <add>, %32, %cst_49 [1] : vector<8x512xf32> to vector<8xf32>
    %34 = vector.shape_cast %33 : vector<8xf32> to vector<8x1xf32>
    %cst_50 = arith.constant 0.001953125 : f32
    %35 = vector.broadcast %cst_50 : f32 to vector<8x1xf32>
    %36 = arith.mulf %34, %35 : vector<8x1xf32>
    %37 = vector.broadcast %36 : vector<8x1xf32> to vector<8x512xf32>
    %38 = arith.subf %32, %37 : vector<8x512xf32>
    %39 = arith.mulf %38, %38 : vector<8x512xf32>
    %cst_51 = arith.constant dense<0.000000e+00> : vector<8xf32>
    %40 = vector.multi_reduction <add>, %39, %cst_51 [1] : vector<8x512xf32> to vector<8xf32>
    %41 = vector.shape_cast %40 : vector<8xf32> to vector<8x1xf32>
    %cst_52 = arith.constant 0.001953125 : f32
    %42 = vector.broadcast %cst_52 : f32 to vector<8x1xf32>
    %43 = arith.mulf %41, %42 : vector<8x1xf32>
    %c0_53 = arith.constant 0 : index
    %c0_54 = arith.constant 0 : index
    %44 = vector.load %arg4[%c0_53, %c0_54] : memref<8x1xf32, #tpu.memory_space<vmem>>, vector<8x1xf32>
    %cst_55 = arith.constant 9.99999974E-6 : f32
    %45 = vector.broadcast %cst_55 : f32 to vector<8x1xf32>
    %46 = arith.addf %43, %45 : vector<8x1xf32>
    %47 = math.rsqrt %46 : vector<8x1xf32>
    %48 = arith.mulf %44, %47 : vector<8x1xf32>
    %49 = vector.broadcast %48 : vector<8x1xf32> to vector<8x512xf32>
    %50 = arith.mulf %38, %49 : vector<8x512xf32>
    %c0_56 = arith.constant 0 : index
    %c0_57 = arith.constant 0 : index
    %51 = vector.load %arg5[%c0_56, %c0_57] : memref<8x1xf32, #tpu.memory_space<vmem>>, vector<8x1xf32>
    %52 = vector.broadcast %51 : vector<8x1xf32> to vector<8x512xf32>
    %53 = arith.addf %50, %52 : vector<8x512xf32>
    %cst_58 = arith.constant 0.000000e+00 : f32
    %54 = vector.broadcast %cst_58 : f32 to vector<8x512xf32>
    %55 = arith.cmpf oge, %53, %54 : vector<8x512xf32>
    %cst_59 = arith.constant 0.00999999977 : f32
    %56 = vector.broadcast %cst_59 : f32 to vector<8x512xf32>
    %57 = arith.mulf %56, %53 : vector<8x512xf32>
    %58 = arith.select %55, %53, %57 : vector<8x512xi1>, vector<8x512xf32>
    %59 = vector.extract_strided_slice %32 {offsets = [0, 0], sizes = [8, 256], strides = [1, 1]} : vector<8x512xf32> to vector<8x256xf32>
    %c0_60 = arith.constant 0 : index
    %c0_61 = arith.constant 0 : index
    %c0_62 = arith.constant 0 : index
    %60 = vector.load %arg7[%c0_60, %c0_61, %c0_62] : memref<2x8x256xf32, #tpu.memory_space<vmem>>, vector<1x8x256xf32>
    %61 = vector.shape_cast %60 : vector<1x8x256xf32> to vector<8x256xf32>
    %62 = vector.shape_cast %59 : vector<8x256xf32> to vector<1x8x256xf32>
    tpu.vector_store %arg7[%c0_60, %c0_61, %c0_62], %62 {strides = array<i32>} : memref<2x8x256xf32, #tpu.memory_space<vmem>>, vector<1x8x256xf32>,
    %63 = vector.extract_strided_slice %58 {offsets = [0, 0], sizes = [8, 256], strides = [1, 1]} : vector<8x512xf32> to vector<8x256xf32>
    %c0_63 = arith.constant 0 : index
    %c0_64 = arith.constant 0 : index
    %c0_65 = arith.constant 0 : index
    %64 = vector.load %arg6[%c0_63, %c0_64, %c0_65] : memref<2x8x256xf32, #tpu.memory_space<vmem>>, vector<1x8x256xf32>
    %65 = vector.shape_cast %64 : vector<1x8x256xf32> to vector<8x256xf32>
    %66 = vector.shape_cast %63 : vector<8x256xf32> to vector<1x8x256xf32>
    tpu.vector_store %arg6[%c0_63, %c0_64, %c0_65], %66 {strides = array<i32>} : memref<2x8x256xf32, #tpu.memory_space<vmem>>, vector<1x8x256xf32>,
    %67 = vector.extract_strided_slice %32 {offsets = [0, 256], sizes = [8, 256], strides = [1, 1]} : vector<8x512xf32> to vector<8x256xf32>
    %c1_66 = arith.constant 1 : index
    %c0_67 = arith.constant 0 : index
    %c0_68 = arith.constant 0 : index
    %68 = vector.load %arg7[%c1_66, %c0_67, %c0_68] : memref<2x8x256xf32, #tpu.memory_space<vmem>>, vector<1x8x256xf32>
    %69 = vector.shape_cast %68 : vector<1x8x256xf32> to vector<8x256xf32>
    %70 = vector.shape_cast %67 : vector<8x256xf32> to vector<1x8x256xf32>
    tpu.vector_store %arg7[%c1_66, %c0_67, %c0_68], %70 {strides = array<i32>} : memref<2x8x256xf32, #tpu.memory_space<vmem>>, vector<1x8x256xf32>,
    %71 = vector.extract_strided_slice %58 {offsets = [0, 256], sizes = [8, 256], strides = [1, 1]} : vector<8x512xf32> to vector<8x256xf32>
    %c1_69 = arith.constant 1 : index
    %c0_70 = arith.constant 0 : index
    %c0_71 = arith.constant 0 : index
    %72 = vector.load %arg6[%c1_69, %c0_70, %c0_71] : memref<2x8x256xf32, #tpu.memory_space<vmem>>, vector<1x8x256xf32>
    %73 = vector.shape_cast %72 : vector<1x8x256xf32> to vector<8x256xf32>
    %74 = vector.shape_cast %71 : vector<8x256xf32> to vector<1x8x256xf32>
    tpu.vector_store %arg6[%c1_69, %c0_70, %c0_71], %74 {strides = array<i32>} : memref<2x8x256xf32, #tpu.memory_space<vmem>>, vector<1x8x256xf32>,
    return
  }
  func.func @transform_0(%arg0: i32) -> (i32, i32, i32, i32) {
    %c0_i32 = arith.constant 0 : i32
    %c0_i32_0 = arith.constant 0 : i32
    %c0_i32_1 = arith.constant 0 : i32
    %c0_i32_2 = arith.constant 0 : i32
    %c0_i32_3 = arith.constant 0 : i32
    return %c0_i32, %c0_i32_0, %c0_i32_1, %c0_i32_2 : i32, i32, i32, i32
  }
  func.func @transform_1(%arg0: i32) -> (i32, i32) {
    %c0_i32 = arith.constant 0 : i32
    %c0_i32_0 = arith.constant 0 : i32
    %c0_i32_1 = arith.constant 0 : i32
    return %c0_i32, %c0_i32_0 : i32, i32
  }
  func.func @transform_2(%arg0: i32) -> (i32, i32) {
    %c0_i32 = arith.constant 0 : i32
    %c0_i32_0 = arith.constant 0 : i32
    %c0_i32_1 = arith.constant 0 : i32
    return %c0_i32, %c0_i32_0 : i32, i32
  }
  func.func @transform_3(%arg0: i32) -> (i32, i32) {
    %c0_i32 = arith.constant 0 : i32
    %c0_i32_0 = arith.constant 0 : i32
    %c0_i32_1 = arith.constant 0 : i32
    return %c0_i32, %c0_i32_0 : i32, i32
  }
  func.func @transform_4(%arg0: i32) -> (i32, i32) {
    %c0_i32 = arith.constant 0 : i32
    %c0_i32_0 = arith.constant 0 : i32
    %c0_i32_1 = arith.constant 0 : i32
    return %c0_i32, %c0_i32_0 : i32, i32
  }
  func.func @transform_5(%arg0: i32) -> (i32, i32, i32) {
    %c0_i32 = arith.constant 0 : i32
    %c0_i32_0 = arith.constant 0 : i32
    %c0_i32_1 = arith.constant 0 : i32
    %c0_i32_2 = arith.constant 0 : i32
    return %c0_i32, %c0_i32_0, %c0_i32_1 : i32, i32, i32
  }
  func.func @transform_6(%arg0: i32) -> (i32, i32, i32) {
    %c0_i32 = arith.constant 0 : i32
    %c0_i32_0 = arith.constant 0 : i32
    %c0_i32_1 = arith.constant 0 : i32
    %c0_i32_2 = arith.constant 0 : i32
    return %c0_i32, %c0_i32_0, %c0_i32_1 : i32, i32, i32
  }
}

</mosaic_0001>

<llo_original>
// kernel: tpu_custom_call.1
$region0: #{tpu_custom_call.1}
  #allocation0 [shape = 'u32[]', space=smem, size = 0x4, offset = 0x4, fixed_abs, tag = 'smem constant byte address 0x4 - core index']
  #allocation1 [shape = 'u32[144,128]{1,0:T(1,128)}', space=vmem, size = 0x12000, scoped, tag = 'internal scratch']
  #allocation2 [shape = 'f32[512,36]{1,0:T(8,128)}', space=vmem, size = 0x40000, scoped, tag = 'scratch operand']
  %s0 = inlined_call_operand.vmem [shape: f32[2,18,18,4], index: 0, kind: input, shape index: {}]
  %s1 = inlined_call_operand.vmem [shape: f32[8,36], index: 1, kind: input, shape index: {}]
  %s2 = inlined_call_operand.vmem [shape: f32[8,1], index: 2, kind: input, shape index: {}]
  %s3 = inlined_call_operand.vmem [shape: f32[8,1], index: 3, kind: input, shape index: {}]
  %s4 = inlined_call_operand.vmem [shape: f32[8,1], index: 4, kind: input, shape index: {}]
  %s5 = inlined_call_operand.hbm [shape: f32[2,8,256], index: 5, kind: output, shape index: {0}]
  %s6 = inlined_call_operand.hbm [shape: f32[2,8,256], index: 6, kind: output, shape index: {1}]
  %7 = xla_tuple %s5, %s6
  %s8 = sld [smem:[#allocation0]]
  $region38: #{tpu_custom_call.1} parent=0
    _
  %s10 = ssub.s32 1, %s8
  %s11 = scalar_select 0, %s10, %s8
  $region1: #{tpu_custom_call.1} parent=0
    #allocation3 [shape = 'u8[16384]{0}', space=vmem, size = 0x4000, scoped, tag = 'output window, operand 0, single buffered']
    #allocation4 [shape = 's32[1]{0}', space=sflag, size = 0x4, scoped, tag = 'scoped memory for tpu_custom_call.1']
    #allocation5 [shape = 'u8[16384]{0}', space=vmem, size = 0x4000, scoped, tag = 'output window, operand 1, single buffered']
    #allocation6 [shape = 's32[1]{0}', space=sflag, size = 0x4, scoped, tag = 'scoped memory for tpu_custom_call.1']
    %12 = vsyncpa [#allocation4], 0
    %13 = vsyncpa [#allocation6], 0
    // Predicated region
    $region2: #{tpu_custom_call.1} parent=1 // pred_check
      _
    $region3: #{tpu_custom_call.1} parent=1 // pred_check_branch
      %15 = sbr.rel (0) target = $region5
    $region4: #{tpu_custom_call.1} parent=1 // pred_region
      _
    $region5: #{tpu_custom_call.1} parent=1 // pred_fallthru
      _
    // Predicated region
    $region6: #{tpu_custom_call.1} parent=1 // pred_check
      _
    $region7: #{tpu_custom_call.1} parent=1 // pred_check_branch
      %17 = sbr.rel (0) target = $region9
    $region8: #{tpu_custom_call.1} parent=1 // pred_region
      _
    $region9: #{tpu_custom_call.1} parent=1 // pred_fallthru
      _
    // Predicated region
    $region10: #{tpu_custom_call.1} parent=1 // pred_check
      _
    $region11: #{tpu_custom_call.1} parent=1 // pred_check_branch
      %19 = sbr.rel (0) target = $region13
    $region12: #{tpu_custom_call.1} parent=1 // pred_region
      _
    $region13: #{tpu_custom_call.1} parent=1 // pred_fallthru
      _
    // Predicated region
    $region14: #{tpu_custom_call.1} parent=1 // pred_check
      _
    $region15: #{tpu_custom_call.1} parent=1 // pred_check_branch
      %21 = sbr.rel (0) target = $region17
    $region16: #{tpu_custom_call.1} parent=1 // pred_region
      _
    $region17: #{tpu_custom_call.1} parent=1 // pred_fallthru
      _
    // Predicated region
    $region18: #{tpu_custom_call.1} parent=1 // pred_check
      _
    $region19: #{tpu_custom_call.1} parent=1 // pred_check_branch
      %23 = sbr.rel (0) target = $region21
    $region20: #{tpu_custom_call.1} parent=1 // pred_region
      _
    $region21: #{tpu_custom_call.1} parent=1 // pred_fallthru
      _
    %v24 = vld [vmem:[%s0] sm:$0xff]
    %v25 = vld [vmem:[%s0 + $0x8] sm:$0xff]
    %v26 = vld [vmem:[%s0 + $0x18] sm:$0xff]
    %v27 = vld [vmem:[%s0 + $0x20] sm:$0xff]
    %v28 = vld [vmem:[%s0 + $0x30] sm:$0xff]
    %v29 = vld [vmem:[%s0 + $0x38] sm:$0xff]
    %v30 = vld [vmem:[%s0 + $0x48] sm:$0xff]
    %v31 = vld [vmem:[%s0 + $0x50] sm:$0xff]
    %v32 = vld [vmem:[%s0 + $0x60] sm:$0xff]
    %v33 = vld [vmem:[%s0 + $0x68] sm:$0xff]
    %v34 = vld [vmem:[%s0 + $0x78] sm:$0xff]
    %v35 = vld [vmem:[%s0 + $0x80] sm:$0xff]
    %v36 = vld [vmem:[%s0 + $0x90] sm:$0xff]
    %v37 = vld [vmem:[%s0 + $0x98] sm:$0xff]
    %v38 = vld [vmem:[%s0 + $0xa8] sm:$0xff]
    %v39 = vld [vmem:[%s0 + $0xb0] sm:$0xff]
    %v40 = vld [vmem:[%s0 + $0xc0] sm:$0xff]
    %v41 = vld [vmem:[%s0 + $0xc8] sm:$0xff]
    %v42 = vld [vmem:[%s0 + $0xd8] sm:$0xff]
    %v43 = vld [vmem:[%s0 + $0xe0] sm:$0xff]
    %v44 = vld [vmem:[%s0 + $0xf0] sm:$0xff]
    %v45 = vld [vmem:[%s0 + $0xf8] sm:$0xff]
    %v46 = vld [vmem:[%s0 + $0x108] sm:$0xff]
    %v47 = vld [vmem:[%s0 + $0x110] sm:$0xff]
    %v48 = vld [vmem:[%s0 + $0x120] sm:$0xff]
    %v49 = vld [vmem:[%s0 + $0x128] sm:$0xff]
    %v50 = vld [vmem:[%s0 + $0x138] sm:$0xff]
    %v51 = vld [vmem:[%s0 + $0x140] sm:$0xff]
    %v52 = vld [vmem:[%s0 + $0x150] sm:$0xff]
    %v53 = vld [vmem:[%s0 + $0x158] sm:$0xff]
    %v54 = vld [vmem:[%s0 + $0x168] sm:$0xff]
    %v55 = vld [vmem:[%s0 + $0x170] sm:$0xff]
    %v56 = vld [vmem:[%s0 + $0x1b0] sm:$0xff]
    %v57 = vld [vmem:[%s0 + $0x1b8] sm:$0xff]
    %v58 = vld [vmem:[%s0 + $0x1c8] sm:$0xff]
    %v59 = vld [vmem:[%s0 + $0x1d0] sm:$0xff]
    %v60 = vld [vmem:[%s0 + $0x1e0] sm:$0xff]
    %v61 = vld [vmem:[%s0 + $0x1e8] sm:$0xff]
    %v62 = vld [vmem:[%s0 + $0x1f8] sm:$0xff]
    %v63 = vld [vmem:[%s0 + $0x200] sm:$0xff]
    %v64 = vld [vmem:[%s0 + $0x210] sm:$0xff]
    %v65 = vld [vmem:[%s0 + $0x218] sm:$0xff]
    %v66 = vld [vmem:[%s0 + $0x228] sm:$0xff]
    %v67 = vld [vmem:[%s0 + $0x230] sm:$0xff]
    %v68 = vld [vmem:[%s0 + $0x240] sm:$0xff]
    %v69 = vld [vmem:[%s0 + $0x248] sm:$0xff]
    %v70 = vld [vmem:[%s0 + $0x258] sm:$0xff]
    %v71 = vld [vmem:[%s0 + $0x260] sm:$0xff]
    %v72 = vld [vmem:[%s0 + $0x270] sm:$0xff]
    %v73 = vld [vmem:[%s0 + $0x278] sm:$0xff]
    %v74 = vld [vmem:[%s0 + $0x288] sm:$0xff]
    %v75 = vld [vmem:[%s0 + $0x290] sm:$0xff]
    %v76 = vld [vmem:[%s0 + $0x2a0] sm:$0xff]
    %v77 = vld [vmem:[%s0 + $0x2a8] sm:$0xff]
    %v78 = vld [vmem:[%s0 + $0x2b8] sm:$0xff]
    %v79 = vld [vmem:[%s0 + $0x2c0] sm:$0xff]
    %v80 = vld [vmem:[%s0 + $0x2d0] sm:$0xff]
    %v81 = vld [vmem:[%s0 + $0x2d8] sm:$0xff]
    %v82 = vld [vmem:[%s0 + $0x2e8] sm:$0xff]
    %v83 = vld [vmem:[%s0 + $0x2f0] sm:$0xff]
    %v84 = vld [vmem:[%s0 + $0x300] sm:$0xff]
    %v85 = vld [vmem:[%s0 + $0x308] sm:$0xff]
    %v86 = vld [vmem:[%s0 + $0x318] sm:$0xff]
    %v87 = vld [vmem:[%s0 + $0x320] sm:$0xff]
    %vm88 = vcmask 31744
    %89 = vst.msk [vmem:[#allocation2] sm:$0xff] %vm88, %v24
    %90 = vst.msk [vmem:[#allocation2 + $0x8] sm:$0xff] %vm88, %v25
    %91 = vst.msk [vmem:[#allocation2 + $0x10] sm:$0xff] %vm88, %v26
    %92 = vst.msk [vmem:[#allocation2 + $0x18] sm:$0xff] %vm88, %v27
    %93 = vst.msk [vmem:[#allocation2 + $0x20] sm:$0xff] %vm88, %v28
    %94 = vst.msk [vmem:[#allocation2 + $0x28] sm:$0xff] %vm88, %v29
    %95 = vst.msk [vmem:[#allocation2 + $0x30] sm:$0xff] %vm88, %v30
    %96 = vst.msk [vmem:[#allocation2 + $0x38] sm:$0xff] %vm88, %v31
    %97 = vst.msk [vmem:[#allocation2 + $0x40] sm:$0xff] %vm88, %v32
    %98 = vst.msk [vmem:[#allocation2 + $0x48] sm:$0xff] %vm88, %v33
    %99 = vst.msk [vmem:[#allocation2 + $0x50] sm:$0xff] %vm88, %v34
    %100 = vst.msk [vmem:[#allocation2 + $0x58] sm:$0xff] %vm88, %v35
    %101 = vst.msk [vmem:[#allocation2 + $0x60] sm:$0xff] %vm88, %v36
    %102 = vst.msk [vmem:[#allocation2 + $0x68] sm:$0xff] %vm88, %v37
    %103 = vst.msk [vmem:[#allocation2 + $0x70] sm:$0xff] %vm88, %v38
    %104 = vst.msk [vmem:[#allocation2 + $0x78] sm:$0xff] %vm88, %v39
    %105 = vst.msk [vmem:[#allocation2 + $0x80] sm:$0xff] %vm88, %v40
    %106 = vst.msk [vmem:[#allocation2 + $0x88] sm:$0xff] %vm88, %v41
    %107 = vst.msk [vmem:[#allocation2 + $0x90] sm:$0xff] %vm88, %v42
    %108 = vst.msk [vmem:[#allocation2 + $0x98] sm:$0xff] %vm88, %v43
    %109 = vst.msk [vmem:[#allocation2 + $0xa0] sm:$0xff] %vm88, %v44
    %110 = vst.msk [vmem:[#allocation2 + $0xa8] sm:$0xff] %vm88, %v45
    %111 = vst.msk [vmem:[#allocation2 + $0xb0] sm:$0xff] %vm88, %v46
    %112 = vst.msk [vmem:[#allocation2 + $0xb8] sm:$0xff] %vm88, %v47
    %113 = vst.msk [vmem:[#allocation2 + $0xc0] sm:$0xff] %vm88, %v48
    %114 = vst.msk [vmem:[#allocation2 + $0xc8] sm:$0xff] %vm88, %v49
    %115 = vst.msk [vmem:[#allocation2 + $0xd0] sm:$0xff] %vm88, %v50
    %116 = vst.msk [vmem:[#allocation2 + $0xd8] sm:$0xff] %vm88, %v51
    %117 = vst.msk [vmem:[#allocation2 + $0xe0] sm:$0xff] %vm88, %v52
    %118 = vst.msk [vmem:[#allocation2 + $0xe8] sm:$0xff] %vm88, %v53
    %119 = vst.msk [vmem:[#allocation2 + $0xf0] sm:$0xff] %vm88, %v54
    %120 = vst.msk [vmem:[#allocation2 + $0xf8] sm:$0xff] %vm88, %v55
    %121 = vst.msk [vmem:[#allocation2 + $0x100] sm:$0xff] %vm88, %v56
    %122 = vst.msk [vmem:[#allocation2 + $0x108] sm:$0xff] %vm88, %v57
    %123 = vst.msk [vmem:[#allocation2 + $0x110] sm:$0xff] %vm88, %v58
    %124 = vst.msk [vmem:[#allocation2 + $0x118] sm:$0xff] %vm88, %v59
    %125 = vst.msk [vmem:[#allocation2 + $0x120] sm:$0xff] %vm88, %v60
    %126 = vst.msk [vmem:[#allocation2 + $0x128] sm:$0xff] %vm88, %v61
    %127 = vst.msk [vmem:[#allocation2 + $0x130] sm:$0xff] %vm88, %v62
    %128 = vst.msk [vmem:[#allocation2 + $0x138] sm:$0xff] %vm88, %v63
    %129 = vst.msk [vmem:[#allocation2 + $0x140] sm:$0xff] %vm88, %v64
    %130 = vst.msk [vmem:[#allocation2 + $0x148] sm:$0xff] %vm88, %v65
    %131 = vst.msk [vmem:[#allocation2 + $0x150] sm:$0xff] %vm88, %v66
    %132 = vst.msk [vmem:[#allocation2 + $0x158] sm:$0xff] %vm88, %v67
    %133 = vst.msk [vmem:[#allocation2 + $0x160] sm:$0xff] %vm88, %v68
    %134 = vst.msk [vmem:[#allocation2 + $0x168] sm:$0xff] %vm88, %v69
    %135 = vst.msk [vmem:[#allocation2 + $0x170] sm:$0xff] %vm88, %v70
    %136 = vst.msk [vmem:[#allocation2 + $0x178] sm:$0xff] %vm88, %v71
    %137 = vst.msk [vmem:[#allocation2 + $0x180] sm:$0xff] %vm88, %v72
    %138 = vst.msk [vmem:[#allocation2 + $0x188] sm:$0xff] %vm88, %v73
    %139 = vst.msk [vmem:[#allocation2 + $0x190] sm:$0xff] %vm88, %v74
    %140 = vst.msk [vmem:[#allocation2 + $0x198] sm:$0xff] %vm88, %v75
    %141 = vst.msk [vmem:[#allocation2 + $0x1a0] sm:$0xff] %vm88, %v76
    %142 = vst.msk [vmem:[#allocation2 + $0x1a8] sm:$0xff] %vm88, %v77
    %143 = vst.msk [vmem:[#allocation2 + $0x1b0] sm:$0xff] %vm88, %v78
    %144 = vst.msk [vmem:[#allocation2 + $0x1b8] sm:$0xff] %vm88, %v79
    %145 = vst.msk [vmem:[#allocation2 + $0x1c0] sm:$0xff] %vm88, %v80
    %146 = vst.msk [vmem:[#allocation2 + $0x1c8] sm:$0xff] %vm88, %v81
    %147 = vst.msk [vmem:[#allocation2 + $0x1d0] sm:$0xff] %vm88, %v82
    %148 = vst.msk [vmem:[#allocation2 + $0x1d8] sm:$0xff] %vm88, %v83
    %149 = vst.msk [vmem:[#allocation2 + $0x1e0] sm:$0xff] %vm88, %v84
    %150 = vst.msk [vmem:[#allocation2 + $0x1e8] sm:$0xff] %vm88, %v85
    %151 = vst.msk [vmem:[#allocation2 + $0x1f0] sm:$0xff] %vm88, %v86
    %152 = vst.msk [vmem:[#allocation2 + $0x1f8] sm:$0xff] %vm88, %v87
    %v153 = vld [vmem:[%s0 + $0x1] sm:$0xff]
    %v154 = vld [vmem:[%s0 + $0x9] sm:$0xff]
    %v155 = vld [vmem:[%s0 + $0x19] sm:$0xff]
    %v156 = vld [vmem:[%s0 + $0x21] sm:$0xff]
    %v157 = vld [vmem:[%s0 + $0x31] sm:$0xff]
    %v158 = vld [vmem:[%s0 + $0x39] sm:$0xff]
    %v159 = vld [vmem:[%s0 + $0x49] sm:$0xff]
    %v160 = vld [vmem:[%s0 + $0x51] sm:$0xff]
    %v161 = vld [vmem:[%s0 + $0x61] sm:$0xff]
    %v162 = vld [vmem:[%s0 + $0x69] sm:$0xff]
    %v163 = vld [vmem:[%s0 + $0x79] sm:$0xff]
    %v164 = vld [vmem:[%s0 + $0x81] sm:$0xff]
    %v165 = vld [vmem:[%s0 + $0x91] sm:$0xff]
    %v166 = vld [vmem:[%s0 + $0x99] sm:$0xff]
    %v167 = vld [vmem:[%s0 + $0xa9] sm:$0xff]
    %v168 = vld [vmem:[%s0 + $0xb1] sm:$0xff]
    %v169 = vld [vmem:[%s0 + $0xc1] sm:$0xff]
    %v170 = vld [vmem:[%s0 + $0xc9] sm:$0xff]
    %v171 = vld [vmem:[%s0 + $0xd9] sm:$0xff]
    %v172 = vld [vmem:[%s0 + $0xe1] sm:$0xff]
    %v173 = vld [vmem:[%s0 + $0xf1] sm:$0xff]
    %v174 = vld [vmem:[%s0 + $0xf9] sm:$0xff]
    %v175 = vld [vmem:[%s0 + $0x109] sm:$0xff]
    %v176 = vld [vmem:[%s0 + $0x111] sm:$0xff]
    %v177 = vld [vmem:[%s0 + $0x121] sm:$0xff]
    %v178 = vld [vmem:[%s0 + $0x129] sm:$0xff]
    %v179 = vld [vmem:[%s0 + $0x139] sm:$0xff]
    %v180 = vld [vmem:[%s0 + $0x141] sm:$0xff]
    %v181 = vld [vmem:[%s0 + $0x151] sm:$0xff]
    %v182 = vld [vmem:[%s0 + $0x159] sm:$0xff]
    %v183 = vld [vmem:[%s0 + $0x169] sm:$0xff]
    %v184 = vld [vmem:[%s0 + $0x171] sm:$0xff]
    %v185 = vld [vmem:[%s0 + $0x1b1] sm:$0xff]
    %v186 = vld [vmem:[%s0 + $0x1b9] sm:$0xff]
    %v187 = vld [vmem:[%s0 + $0x1c9] sm:$0xff]
    %v188 = vld [vmem:[%s0 + $0x1d1] sm:$0xff]
    %v189 = vld [vmem:[%s0 + $0x1e1] sm:$0xff]
    %v190 = vld [vmem:[%s0 + $0x1e9] sm:$0xff]
    %v191 = vld [vmem:[%s0 + $0x1f9] sm:$0xff]
    %v192 = vld [vmem:[%s0 + $0x201] sm:$0xff]
    %v193 = vld [vmem:[%s0 + $0x211] sm:$0xff]
    %v194 = vld [vmem:[%s0 + $0x219] sm:$0xff]
    %v195 = vld [vmem:[%s0 + $0x229] sm:$0xff]
    %v196 = vld [vmem:[%s0 + $0x231] sm:$0xff]
    %v197 = vld [vmem:[%s0 + $0x241] sm:$0xff]
    %v198 = vld [vmem:[%s0 + $0x249] sm:$0xff]
    %v199 = vld [vmem:[%s0 + $0x259] sm:$0xff]
    %v200 = vld [vmem:[%s0 + $0x261] sm:$0xff]
    %v201 = vld [vmem:[%s0 + $0x271] sm:$0xff]
    %v202 = vld [vmem:[%s0 + $0x279] sm:$0xff]
    %v203 = vld [vmem:[%s0 + $0x289] sm:$0xff]
    %v204 = vld [vmem:[%s0 + $0x291] sm:$0xff]
    %v205 = vld [vmem:[%s0 + $0x2a1] sm:$0xff]
    %v206 = vld [vmem:[%s0 + $0x2a9] sm:$0xff]
    %v207 = vld [vmem:[%s0 + $0x2b9] sm:$0xff]
    %v208 = vld [vmem:[%s0 + $0x2c1] sm:$0xff]
    %v209 = vld [vmem:[%s0 + $0x2d1] sm:$0xff]
    %v210 = vld [vmem:[%s0 + $0x2d9] sm:$0xff]
    %v211 = vld [vmem:[%s0 + $0x2e9] sm:$0xff]
    %v212 = vld [vmem:[%s0 + $0x2f1] sm:$0xff]
    %v213 = vld [vmem:[%s0 + $0x301] sm:$0xff]
    %v214 = vld [vmem:[%s0 + $0x309] sm:$0xff]
    %v215 = vld [vmem:[%s0 + $0x319] sm:$0xff]
    %v216 = vld [vmem:[%s0 + $0x321] sm:$0xff]
    %281 = vrot.lane.b32.xlu0 %v153, 4
    %v282 = vpop.permute.xlu0 %281
    %283 = vrot.lane.b32.xlu0 %v154, 4
    %v284 = vpop.permute.xlu0 %283
    %285 = vrot.lane.b32.xlu0 %v155, 4
    %v286 = vpop.permute.xlu0 %285
    %287 = vrot.lane.b32.xlu0 %v156, 4
    %v288 = vpop.permute.xlu0 %287
    %289 = vrot.lane.b32.xlu0 %v157, 4
    %v290 = vpop.permute.xlu0 %289
    %291 = vrot.lane.b32.xlu0 %v158, 4
    %v292 = vpop.permute.xlu0 %291
    %293 = vrot.lane.b32.xlu0 %v159, 4
    %v294 = vpop.permute.xlu0 %293
    %295 = vrot.lane.b32.xlu0 %v160, 4
    %v296 = vpop.permute.xlu0 %295
    %297 = vrot.lane.b32.xlu0 %v161, 4
    %v298 = vpop.permute.xlu0 %297
    %299 = vrot.lane.b32.xlu0 %v162, 4
    %v300 = vpop.permute.xlu0 %299
    %301 = vrot.lane.b32.xlu0 %v163, 4
    %v302 = vpop.permute.xlu0 %301
    %303 = vrot.lane.b32.xlu0 %v164, 4
    %v304 = vpop.permute.xlu0 %303
    %305 = vrot.lane.b32.xlu0 %v165, 4
    %v306 = vpop.permute.xlu0 %305
    %307 = vrot.lane.b32.xlu0 %v166, 4
    %v308 = vpop.permute.xlu0 %307
    %309 = vrot.lane.b32.xlu0 %v167, 4
    %v310 = vpop.permute.xlu0 %309
    %311 = vrot.lane.b32.xlu0 %v168, 4
    %v312 = vpop.permute.xlu0 %311
    %313 = vrot.lane.b32.xlu0 %v169, 4
    %v314 = vpop.permute.xlu0 %313
    %315 = vrot.lane.b32.xlu0 %v170, 4
    %v316 = vpop.permute.xlu0 %315
    %317 = vrot.lane.b32.xlu0 %v171, 4
    %v318 = vpop.permute.xlu0 %317
    %319 = vrot.lane.b32.xlu0 %v172, 4
    %v320 = vpop.permute.xlu0 %319
    %321 = vrot.lane.b32.xlu0 %v173, 4
    %v322 = vpop.permute.xlu0 %321
    %323 = vrot.lane.b32.xlu0 %v174, 4
    %v324 = vpop.permute.xlu0 %323
    %325 = vrot.lane.b32.xlu0 %v175, 4
    %v326 = vpop.permute.xlu0 %325
    %327 = vrot.lane.b32.xlu0 %v176, 4
    %v328 = vpop.permute.xlu0 %327
    %329 = vrot.lane.b32.xlu0 %v177, 4
    %v330 = vpop.permute.xlu0 %329
    %331 = vrot.lane.b32.xlu0 %v178, 4
    %v332 = vpop.permute.xlu0 %331
    %333 = vrot.lane.b32.xlu0 %v179, 4
    %v334 = vpop.permute.xlu0 %333
    %335 = vrot.lane.b32.xlu0 %v180, 4
    %v336 = vpop.permute.xlu0 %335
    %337 = vrot.lane.b32.xlu0 %v181, 4
    %v338 = vpop.permute.xlu0 %337
    %339 = vrot.lane.b32.xlu0 %v182, 4
    %v340 = vpop.permute.xlu0 %339
    %341 = vrot.lane.b32.xlu0 %v183, 4
    %v342 = vpop.permute.xlu0 %341
    %343 = vrot.lane.b32.xlu0 %v184, 4
    %v344 = vpop.permute.xlu0 %343
    %345 = vrot.lane.b32.xlu0 %v185, 4
    %v346 = vpop.permute.xlu0 %345
    %347 = vrot.lane.b32.xlu0 %v186, 4
    %v348 = vpop.permute.xlu0 %347
    %349 = vrot.lane.b32.xlu0 %v187, 4
    %v350 = vpop.permute.xlu0 %349
    %351 = vrot.lane.b32.xlu0 %v188, 4
    %v352 = vpop.permute.xlu0 %351
    %353 = vrot.lane.b32.xlu0 %v189, 4
    %v354 = vpop.permute.xlu0 %353
    %355 = vrot.lane.b32.xlu0 %v190, 4
    %v356 = vpop.permute.xlu0 %355
    %357 = vrot.lane.b32.xlu0 %v191, 4
    %v358 = vpop.permute.xlu0 %357
    %359 = vrot.lane.b32.xlu0 %v192, 4
    %v360 = vpop.permute.xlu0 %359
    %361 = vrot.lane.b32.xlu0 %v193, 4
    %v362 = vpop.permute.xlu0 %361
    %363 = vrot.lane.b32.xlu0 %v194, 4
    %v364 = vpop.permute.xlu0 %363
    %365 = vrot.lane.b32.xlu0 %v195, 4
    %v366 = vpop.permute.xlu0 %365
    %367 = vrot.lane.b32.xlu0 %v196, 4
    %v368 = vpop.permute.xlu0 %367
    %369 = vrot.lane.b32.xlu0 %v197, 4
    %v370 = vpop.permute.xlu0 %369
    %371 = vrot.lane.b32.xlu0 %v198, 4
    %v372 = vpop.permute.xlu0 %371
    %373 = vrot.lane.b32.xlu0 %v199, 4
    %v374 = vpop.permute.xlu0 %373
    %375 = vrot.lane.b32.xlu0 %v200, 4
    %v376 = vpop.permute.xlu0 %375
    %377 = vrot.lane.b32.xlu0 %v201, 4
    %v378 = vpop.permute.xlu0 %377
    %379 = vrot.lane.b32.xlu0 %v202, 4
    %v380 = vpop.permute.xlu0 %379
    %381 = vrot.lane.b32.xlu0 %v203, 4
    %v382 = vpop.permute.xlu0 %381
    %383 = vrot.lane.b32.xlu0 %v204, 4
    %v384 = vpop.permute.xlu0 %383
    %385 = vrot.lane.b32.xlu0 %v205, 4
    %v386 = vpop.permute.xlu0 %385
    %387 = vrot.lane.b32.xlu0 %v206, 4
    %v388 = vpop.permute.xlu0 %387
    %389 = vrot.lane.b32.xlu0 %v207, 4
    %v390 = vpop.permute.xlu0 %389
    %391 = vrot.lane.b32.xlu0 %v208, 4
    %v392 = vpop.permute.xlu0 %391
    %393 = vrot.lane.b32.xlu0 %v209, 4
    %v394 = vpop.permute.xlu0 %393
    %395 = vrot.lane.b32.xlu0 %v210, 4
    %v396 = vpop.permute.xlu0 %395
    %397 = vrot.lane.b32.xlu0 %v211, 4
    %v398 = vpop.permute.xlu0 %397
    %399 = vrot.lane.b32.xlu0 %v212, 4
    %v400 = vpop.permute.xlu0 %399
    %401 = vrot.lane.b32.xlu0 %v213, 4
    %v402 = vpop.permute.xlu0 %401
    %403 = vrot.lane.b32.xlu0 %v214, 4
    %v404 = vpop.permute.xlu0 %403
    %405 = vrot.lane.b32.xlu0 %v215, 4
    %v406 = vpop.permute.xlu0 %405
    %407 = vrot.lane.b32.xlu0 %v216, 4
    %v408 = vpop.permute.xlu0 %407
    %vm473 = vcmask 64544
    %474 = vst.msk [vmem:[#allocation2] sm:$0xff] %vm473, %v282
    %475 = vst.msk [vmem:[#allocation2 + $0x8] sm:$0xff] %vm473, %v284
    %476 = vst.msk [vmem:[#allocation2 + $0x10] sm:$0xff] %vm473, %v286
    %477 = vst.msk [vmem:[#allocation2 + $0x18] sm:$0xff] %vm473, %v288
    %478 = vst.msk [vmem:[#allocation2 + $0x20] sm:$0xff] %vm473, %v290
    %479 = vst.msk [vmem:[#allocation2 + $0x28] sm:$0xff] %vm473, %v292
    %480 = vst.msk [vmem:[#allocation2 + $0x30] sm:$0xff] %vm473, %v294
    %481 = vst.msk [vmem:[#allocation2 + $0x38] sm:$0xff] %vm473, %v296
    %482 = vst.msk [vmem:[#allocation2 + $0x40] sm:$0xff] %vm473, %v298
    %483 = vst.msk [vmem:[#allocation2 + $0x48] sm:$0xff] %vm473, %v300
    %484 = vst.msk [vmem:[#allocation2 + $0x50] sm:$0xff] %vm473, %v302
    %485 = vst.msk [vmem:[#allocation2 + $0x58] sm:$0xff] %vm473, %v304
    %486 = vst.msk [vmem:[#allocation2 + $0x60] sm:$0xff] %vm473, %v306
    %487 = vst.msk [vmem:[#allocation2 + $0x68] sm:$0xff] %vm473, %v308
    %488 = vst.msk [vmem:[#allocation2 + $0x70] sm:$0xff] %vm473, %v310
    %489 = vst.msk [vmem:[#allocation2 + $0x78] sm:$0xff] %vm473, %v312
    %490 = vst.msk [vmem:[#allocation2 + $0x80] sm:$0xff] %vm473, %v314
    %491 = vst.msk [vmem:[#allocation2 + $0x88] sm:$0xff] %vm473, %v316
    %492 = vst.msk [vmem:[#allocation2 + $0x90] sm:$0xff] %vm473, %v318
    %493 = vst.msk [vmem:[#allocation2 + $0x98] sm:$0xff] %vm473, %v320
    %494 = vst.msk [vmem:[#allocation2 + $0xa0] sm:$0xff] %vm473, %v322
    %495 = vst.msk [vmem:[#allocation2 + $0xa8] sm:$0xff] %vm473, %v324
    %496 = vst.msk [vmem:[#allocation2 + $0xb0] sm:$0xff] %vm473, %v326
    %497 = vst.msk [vmem:[#allocation2 + $0xb8] sm:$0xff] %vm473, %v328
    %498 = vst.msk [vmem:[#allocation2 + $0xc0] sm:$0xff] %vm473, %v330
    %499 = vst.msk [vmem:[#allocation2 + $0xc8] sm:$0xff] %vm473, %v332
    %500 = vst.msk [vmem:[#allocation2 + $0xd0] sm:$0xff] %vm473, %v334
    %501 = vst.msk [vmem:[#allocation2 + $0xd8] sm:$0xff] %vm473, %v336
    %502 = vst.msk [vmem:[#allocation2 + $0xe0] sm:$0xff] %vm473, %v338
    %503 = vst.msk [vmem:[#allocation2 + $0xe8] sm:$0xff] %vm473, %v340
    %504 = vst.msk [vmem:[#allocation2 + $0xf0] sm:$0xff] %vm473, %v342
    %505 = vst.msk [vmem:[#allocation2 + $0xf8] sm:$0xff] %vm473, %v344
    %506 = vst.msk [vmem:[#allocation2 + $0x100] sm:$0xff] %vm473, %v346
    %507 = vst.msk [vmem:[#allocation2 + $0x108] sm:$0xff] %vm473, %v348
    %508 = vst.msk [vmem:[#allocation2 + $0x110] sm:$0xff] %vm473, %v350
    %509 = vst.msk [vmem:[#allocation2 + $0x118] sm:$0xff] %vm473, %v352
    %510 = vst.msk [vmem:[#allocation2 + $0x120] sm:$0xff] %vm473, %v354
    %511 = vst.msk [vmem:[#allocation2 + $0x128] sm:$0xff] %vm473, %v356
    %512 = vst.msk [vmem:[#allocation2 + $0x130] sm:$0xff] %vm473, %v358
    %513 = vst.msk [vmem:[#allocation2 + $0x138] sm:$0xff] %vm473, %v360
    %514 = vst.msk [vmem:[#allocation2 + $0x140] sm:$0xff] %vm473, %v362
    %515 = vst.msk [vmem:[#allocation2 + $0x148] sm:$0xff] %vm473, %v364
    %516 = vst.msk [vmem:[#allocation2 + $0x150] sm:$0xff] %vm473, %v366
    %517 = vst.msk [vmem:[#allocation2 + $0x158] sm:$0xff] %vm473, %v368
    %518 = vst.msk [vmem:[#allocation2 + $0x160] sm:$0xff] %vm473, %v370
    %519 = vst.msk [vmem:[#allocation2 + $0x168] sm:$0xff] %vm473, %v372
    %520 = vst.msk [vmem:[#allocation2 + $0x170] sm:$0xff] %vm473, %v374
    %521 = vst.msk [vmem:[#allocation2 + $0x178] sm:$0xff] %vm473, %v376
    %522 = vst.msk [vmem:[#allocation2 + $0x180] sm:$0xff] %vm473, %v378
    %523 = vst.msk [vmem:[#allocation2 + $0x188] sm:$0xff] %vm473, %v380
    %524 = vst.msk [vmem:[#allocation2 + $0x190] sm:$0xff] %vm473, %v382
    %525 = vst.msk [vmem:[#allocation2 + $0x198] sm:$0xff] %vm473, %v384
    %526 = vst.msk [vmem:[#allocation2 + $0x1a0] sm:$0xff] %vm473, %v386
    %527 = vst.msk [vmem:[#allocation2 + $0x1a8] sm:$0xff] %vm473, %v388
    %528 = vst.msk [vmem:[#allocation2 + $0x1b0] sm:$0xff] %vm473, %v390
    %529 = vst.msk [vmem:[#allocation2 + $0x1b8] sm:$0xff] %vm473, %v392
    %530 = vst.msk [vmem:[#allocation2 + $0x1c0] sm:$0xff] %vm473, %v394
    %531 = vst.msk [vmem:[#allocation2 + $0x1c8] sm:$0xff] %vm473, %v396
    %532 = vst.msk [vmem:[#allocation2 + $0x1d0] sm:$0xff] %vm473, %v398
    %533 = vst.msk [vmem:[#allocation2 + $0x1d8] sm:$0xff] %vm473, %v400
    %534 = vst.msk [vmem:[#allocation2 + $0x1e0] sm:$0xff] %vm473, %v402
    %535 = vst.msk [vmem:[#allocation2 + $0x1e8] sm:$0xff] %vm473, %v404
    %536 = vst.msk [vmem:[#allocation2 + $0x1f0] sm:$0xff] %vm473, %v406
    %537 = vst.msk [vmem:[#allocation2 + $0x1f8] sm:$0xff] %vm473, %v408
    %v538 = vld [vmem:[%s0 + $0x2] sm:$0xff]
    %v539 = vld [vmem:[%s0 + $0xa] sm:$0xff]
    %v540 = vld [vmem:[%s0 + $0x1a] sm:$0xff]
    %v541 = vld [vmem:[%s0 + $0x22] sm:$0xff]
    %v542 = vld [vmem:[%s0 + $0x32] sm:$0xff]
    %v543 = vld [vmem:[%s0 + $0x3a] sm:$0xff]
    %v544 = vld [vmem:[%s0 + $0x4a] sm:$0xff]
    %v545 = vld [vmem:[%s0 + $0x52] sm:$0xff]
    %v546 = vld [vmem:[%s0 + $0x62] sm:$0xff]
    %v547 = vld [vmem:[%s0 + $0x6a] sm:$0xff]
    %v548 = vld [vmem:[%s0 + $0x7a] sm:$0xff]
    %v549 = vld [vmem:[%s0 + $0x82] sm:$0xff]
    %v550 = vld [vmem:[%s0 + $0x92] sm:$0xff]
    %v551 = vld [vmem:[%s0 + $0x9a] sm:$0xff]
    %v552 = vld [vmem:[%s0 + $0xaa] sm:$0xff]
    %v553 = vld [vmem:[%s0 + $0xb2] sm:$0xff]
    %v554 = vld [vmem:[%s0 + $0xc2] sm:$0xff]
    %v555 = vld [vmem:[%s0 + $0xca] sm:$0xff]
    %v556 = vld [vmem:[%s0 + $0xda] sm:$0xff]
    %v557 = vld [vmem:[%s0 + $0xe2] sm:$0xff]
    %v558 = vld [vmem:[%s0 + $0xf2] sm:$0xff]
    %v559 = vld [vmem:[%s0 + $0xfa] sm:$0xff]
    %v560 = vld [vmem:[%s0 + $0x10a] sm:$0xff]
    %v561 = vld [vmem:[%s0 + $0x112] sm:$0xff]
    %v562 = vld [vmem:[%s0 + $0x122] sm:$0xff]
    %v563 = vld [vmem:[%s0 + $0x12a] sm:$0xff]
    %v564 = vld [vmem:[%s0 + $0x13a] sm:$0xff]
    %v565 = vld [vmem:[%s0 + $0x142] sm:$0xff]
    %v566 = vld [vmem:[%s0 + $0x152] sm:$0xff]
    %v567 = vld [vmem:[%s0 + $0x15a] sm:$0xff]
    %v568 = vld [vmem:[%s0 + $0x16a] sm:$0xff]
    %v569 = vld [vmem:[%s0 + $0x172] sm:$0xff]
    %v570 = vld [vmem:[%s0 + $0x1b2] sm:$0xff]
    %v571 = vld [vmem:[%s0 + $0x1ba] sm:$0xff]
    %v572 = vld [vmem:[%s0 + $0x1ca] sm:$0xff]
    %v573 = vld [vmem:[%s0 + $0x1d2] sm:$0xff]
    %v574 = vld [vmem:[%s0 + $0x1e2] sm:$0xff]
    %v575 = vld [vmem:[%s0 + $0x1ea] sm:$0xff]
    %v576 = vld [vmem:[%s0 + $0x1fa] sm:$0xff]
    %v577 = vld [vmem:[%s0 + $0x202] sm:$0xff]
    %v578 = vld [vmem:[%s0 + $0x212] sm:$0xff]
    %v579 = vld [vmem:[%s0 + $0x21a] sm:$0xff]
    %v580 = vld [vmem:[%s0 + $0x22a] sm:$0xff]
    %v581 = vld [vmem:[%s0 + $0x232] sm:$0xff]
    %v582 = vld [vmem:[%s0 + $0x242] sm:$0xff]
    %v583 = vld [vmem:[%s0 + $0x24a] sm:$0xff]
    %v584 = vld [vmem:[%s0 + $0x25a] sm:$0xff]
    %v585 = vld [vmem:[%s0 + $0x262] sm:$0xff]
    %v586 = vld [vmem:[%s0 + $0x272] sm:$0xff]
    %v587 = vld [vmem:[%s0 + $0x27a] sm:$0xff]
    %v588 = vld [vmem:[%s0 + $0x28a] sm:$0xff]
    %v589 = vld [vmem:[%s0 + $0x292] sm:$0xff]
    %v590 = vld [vmem:[%s0 + $0x2a2] sm:$0xff]
    %v591 = vld [vmem:[%s0 + $0x2aa] sm:$0xff]
    %v592 = vld [vmem:[%s0 + $0x2ba] sm:$0xff]
    %v593 = vld [vmem:[%s0 + $0x2c2] sm:$0xff]
    %v594 = vld [vmem:[%s0 + $0x2d2] sm:$0xff]
    %v595 = vld [vmem:[%s0 + $0x2da] sm:$0xff]
    %v596 = vld [vmem:[%s0 + $0x2ea] sm:$0xff]
    %v597 = vld [vmem:[%s0 + $0x2f2] sm:$0xff]
    %v598 = vld [vmem:[%s0 + $0x302] sm:$0xff]
    %v599 = vld [vmem:[%s0 + $0x30a] sm:$0xff]
    %v600 = vld [vmem:[%s0 + $0x31a] sm:$0xff]
    %v601 = vld [vmem:[%s0 + $0x322] sm:$0xff]
    %666 = vrot.lane.b32.xlu0 %v538, 8
    %v667 = vpop.permute.xlu0 %666
    %668 = vrot.lane.b32.xlu0 %v539, 8
    %v669 = vpop.permute.xlu0 %668
    %670 = vrot.lane.b32.xlu0 %v540, 8
    %v671 = vpop.permute.xlu0 %670
    %672 = vrot.lane.b32.xlu0 %v541, 8
    %v673 = vpop.permute.xlu0 %672
    %674 = vrot.lane.b32.xlu0 %v542, 8
    %v675 = vpop.permute.xlu0 %674
    %676 = vrot.lane.b32.xlu0 %v543, 8
    %v677 = vpop.permute.xlu0 %676
    %678 = vrot.lane.b32.xlu0 %v544, 8
    %v679 = vpop.permute.xlu0 %678
    %680 = vrot.lane.b32.xlu0 %v545, 8
    %v681 = vpop.permute.xlu0 %680
    %682 = vrot.lane.b32.xlu0 %v546, 8
    %v683 = vpop.permute.xlu0 %682
    %684 = vrot.lane.b32.xlu0 %v547, 8
    %v685 = vpop.permute.xlu0 %684
    %686 = vrot.lane.b32.xlu0 %v548, 8
    %v687 = vpop.permute.xlu0 %686
    %688 = vrot.lane.b32.xlu0 %v549, 8
    %v689 = vpop.permute.xlu0 %688
    %690 = vrot.lane.b32.xlu0 %v550, 8
    %v691 = vpop.permute.xlu0 %690
    %692 = vrot.lane.b32.xlu0 %v551, 8
    %v693 = vpop.permute.xlu0 %692
    %694 = vrot.lane.b32.xlu0 %v552, 8
    %v695 = vpop.permute.xlu0 %694
    %696 = vrot.lane.b32.xlu0 %v553, 8
    %v697 = vpop.permute.xlu0 %696
    %698 = vrot.lane.b32.xlu0 %v554, 8
    %v699 = vpop.permute.xlu0 %698
    %700 = vrot.lane.b32.xlu0 %v555, 8
    %v701 = vpop.permute.xlu0 %700
    %702 = vrot.lane.b32.xlu0 %v556, 8
    %v703 = vpop.permute.xlu0 %702
    %704 = vrot.lane.b32.xlu0 %v557, 8
    %v705 = vpop.permute.xlu0 %704
    %706 = vrot.lane.b32.xlu0 %v558, 8
    %v707 = vpop.permute.xlu0 %706
    %708 = vrot.lane.b32.xlu0 %v559, 8
    %v709 = vpop.permute.xlu0 %708
    %710 = vrot.lane.b32.xlu0 %v560, 8
    %v711 = vpop.permute.xlu0 %710
    %712 = vrot.lane.b32.xlu0 %v561, 8
    %v713 = vpop.permute.xlu0 %712
    %714 = vrot.lane.b32.xlu0 %v562, 8
    %v715 = vpop.permute.xlu0 %714
    %716 = vrot.lane.b32.xlu0 %v563, 8
    %v717 = vpop.permute.xlu0 %716
    %718 = vrot.lane.b32.xlu0 %v564, 8
    %v719 = vpop.permute.xlu0 %718
    %720 = vrot.lane.b32.xlu0 %v565, 8
    %v721 = vpop.permute.xlu0 %720
    %722 = vrot.lane.b32.xlu0 %v566, 8
    %v723 = vpop.permute.xlu0 %722
    %724 = vrot.lane.b32.xlu0 %v567, 8
    %v725 = vpop.permute.xlu0 %724
    %726 = vrot.lane.b32.xlu0 %v568, 8
    %v727 = vpop.permute.xlu0 %726
    %728 = vrot.lane.b32.xlu0 %v569, 8
    %v729 = vpop.permute.xlu0 %728
    %730 = vrot.lane.b32.xlu0 %v570, 8
    %v731 = vpop.permute.xlu0 %730
    %732 = vrot.lane.b32.xlu0 %v571, 8
    %v733 = vpop.permute.xlu0 %732
    %734 = vrot.lane.b32.xlu0 %v572, 8
    %v735 = vpop.permute.xlu0 %734
    %736 = vrot.lane.b32.xlu0 %v573, 8
    %v737 = vpop.permute.xlu0 %736
    %738 = vrot.lane.b32.xlu0 %v574, 8
    %v739 = vpop.permute.xlu0 %738
    %740 = vrot.lane.b32.xlu0 %v575, 8
    %v741 = vpop.permute.xlu0 %740
    %742 = vrot.lane.b32.xlu0 %v576, 8
    %v743 = vpop.permute.xlu0 %742
    %744 = vrot.lane.b32.xlu0 %v577, 8
    %v745 = vpop.permute.xlu0 %744
    %746 = vrot.lane.b32.xlu0 %v578, 8
    %v747 = vpop.permute.xlu0 %746
    %748 = vrot.lane.b32.xlu0 %v579, 8
    %v749 = vpop.permute.xlu0 %748
    %750 = vrot.lane.b32.xlu0 %v580, 8
    %v751 = vpop.permute.xlu0 %750
    %752 = vrot.lane.b32.xlu0 %v581, 8
    %v753 = vpop.permute.xlu0 %752
    %754 = vrot.lane.b32.xlu0 %v582, 8
    %v755 = vpop.permute.xlu0 %754
    %756 = vrot.lane.b32.xlu0 %v583, 8
    %v757 = vpop.permute.xlu0 %756
    %758 = vrot.lane.b32.xlu0 %v584, 8
    %v759 = vpop.permute.xlu0 %758
    %760 = vrot.lane.b32.xlu0 %v585, 8
    %v761 = vpop.permute.xlu0 %760
    %762 = vrot.lane.b32.xlu0 %v586, 8
    %v763 = vpop.permute.xlu0 %762
    %764 = vrot.lane.b32.xlu0 %v587, 8
    %v765 = vpop.permute.xlu0 %764
    %766 = vrot.lane.b32.xlu0 %v588, 8
    %v767 = vpop.permute.xlu0 %766
    %768 = vrot.lane.b32.xlu0 %v589, 8
    %v769 = vpop.permute.xlu0 %768
    %770 = vrot.lane.b32.xlu0 %v590, 8
    %v771 = vpop.permute.xlu0 %770
    %772 = vrot.lane.b32.xlu0 %v591, 8
    %v773 = vpop.permute.xlu0 %772
    %774 = vrot.lane.b32.xlu0 %v592, 8
    %v775 = vpop.permute.xlu0 %774
    %776 = vrot.lane.b32.xlu0 %v593, 8
    %v777 = vpop.permute.xlu0 %776
    %778 = vrot.lane.b32.xlu0 %v594, 8
    %v779 = vpop.permute.xlu0 %778
    %780 = vrot.lane.b32.xlu0 %v595, 8
    %v781 = vpop.permute.xlu0 %780
    %782 = vrot.lane.b32.xlu0 %v596, 8
    %v783 = vpop.permute.xlu0 %782
    %784 = vrot.lane.b32.xlu0 %v597, 8
    %v785 = vpop.permute.xlu0 %784
    %786 = vrot.lane.b32.xlu0 %v598, 8
    %v787 = vpop.permute.xlu0 %786
    %788 = vrot.lane.b32.xlu0 %v599, 8
    %v789 = vpop.permute.xlu0 %788
    %790 = vrot.lane.b32.xlu0 %v600, 8
    %v791 = vpop.permute.xlu0 %790
    %792 = vrot.lane.b32.xlu0 %v601, 8
    %v793 = vpop.permute.xlu0 %792
    %vm858 = vcmask 97344
    %859 = vst.msk [vmem:[#allocation2] sm:$0xff] %vm858, %v667
    %860 = vst.msk [vmem:[#allocation2 + $0x8] sm:$0xff] %vm858, %v669
    %861 = vst.msk [vmem:[#allocation2 + $0x10] sm:$0xff] %vm858, %v671
    %862 = vst.msk [vmem:[#allocation2 + $0x18] sm:$0xff] %vm858, %v673
    %863 = vst.msk [vmem:[#allocation2 + $0x20] sm:$0xff] %vm858, %v675
    %864 = vst.msk [vmem:[#allocation2 + $0x28] sm:$0xff] %vm858, %v677
    %865 = vst.msk [vmem:[#allocation2 + $0x30] sm:$0xff] %vm858, %v679
    %866 = vst.msk [vmem:[#allocation2 + $0x38] sm:$0xff] %vm858, %v681
    %867 = vst.msk [vmem:[#allocation2 + $0x40] sm:$0xff] %vm858, %v683
    %868 = vst.msk [vmem:[#allocation2 + $0x48] sm:$0xff] %vm858, %v685
    %869 = vst.msk [vmem:[#allocation2 + $0x50] sm:$0xff] %vm858, %v687
    %870 = vst.msk [vmem:[#allocation2 + $0x58] sm:$0xff] %vm858, %v689
    %871 = vst.msk [vmem:[#allocation2 + $0x60] sm:$0xff] %vm858, %v691
    %872 = vst.msk [vmem:[#allocation2 + $0x68] sm:$0xff] %vm858, %v693
    %873 = vst.msk [vmem:[#allocation2 + $0x70] sm:$0xff] %vm858, %v695
    %874 = vst.msk [vmem:[#allocation2 + $0x78] sm:$0xff] %vm858, %v697
    %875 = vst.msk [vmem:[#allocation2 + $0x80] sm:$0xff] %vm858, %v699
    %876 = vst.msk [vmem:[#allocation2 + $0x88] sm:$0xff] %vm858, %v701
    %877 = vst.msk [vmem:[#allocation2 + $0x90] sm:$0xff] %vm858, %v703
    %878 = vst.msk [vmem:[#allocation2 + $0x98] sm:$0xff] %vm858, %v705
    %879 = vst.msk [vmem:[#allocation2 + $0xa0] sm:$0xff] %vm858, %v707
    %880 = vst.msk [vmem:[#allocation2 + $0xa8] sm:$0xff] %vm858, %v709
    %881 = vst.msk [vmem:[#allocation2 + $0xb0] sm:$0xff] %vm858, %v711
    %882 = vst.msk [vmem:[#allocation2 + $0xb8] sm:$0xff] %vm858, %v713
    %883 = vst.msk [vmem:[#allocation2 + $0xc0] sm:$0xff] %vm858, %v715
    %884 = vst.msk [vmem:[#allocation2 + $0xc8] sm:$0xff] %vm858, %v717
    %885 = vst.msk [vmem:[#allocation2 + $0xd0] sm:$0xff] %vm858, %v719
    %886 = vst.msk [vmem:[#allocation2 + $0xd8] sm:$0xff] %vm858, %v721
    %887 = vst.msk [vmem:[#allocation2 + $0xe0] sm:$0xff] %vm858, %v723
    %888 = vst.msk [vmem:[#allocation2 + $0xe8] sm:$0xff] %vm858, %v725
    %889 = vst.msk [vmem:[#allocation2 + $0xf0] sm:$0xff] %vm858, %v727
    %890 = vst.msk [vmem:[#allocation2 + $0xf8] sm:$0xff] %vm858, %v729
    %891 = vst.msk [vmem:[#allocation2 + $0x100] sm:$0xff] %vm858, %v731
    %892 = vst.msk [vmem:[#allocation2 + $0x108] sm:$0xff] %vm858, %v733
    %893 = vst.msk [vmem:[#allocation2 + $0x110] sm:$0xff] %vm858, %v735
    %894 = vst.msk [vmem:[#allocation2 + $0x118] sm:$0xff] %vm858, %v737
    %895 = vst.msk [vmem:[#allocation2 + $0x120] sm:$0xff] %vm858, %v739
    %896 = vst.msk [vmem:[#allocation2 + $0x128] sm:$0xff] %vm858, %v741
    %897 = vst.msk [vmem:[#allocation2 + $0x130] sm:$0xff] %vm858, %v743
    %898 = vst.msk [vmem:[#allocation2 + $0x138] sm:$0xff] %vm858, %v745
    %899 = vst.msk [vmem:[#allocation2 + $0x140] sm:$0xff] %vm858, %v747
    %900 = vst.msk [vmem:[#allocation2 + $0x148] sm:$0xff] %vm858, %v749
    %901 = vst.msk [vmem:[#allocation2 + $0x150] sm:$0xff] %vm858, %v751
    %902 = vst.msk [vmem:[#allocation2 + $0x158] sm:$0xff] %vm858, %v753
    %903 = vst.msk [vmem:[#allocation2 + $0x160] sm:$0xff] %vm858, %v755
    %904 = vst.msk [vmem:[#allocation2 + $0x168] sm:$0xff] %vm858, %v757
    %905 = vst.msk [vmem:[#allocation2 + $0x170] sm:$0xff] %vm858, %v759
    %906 = vst.msk [vmem:[#allocation2 + $0x178] sm:$0xff] %vm858, %v761
    %907 = vst.msk [vmem:[#allocation2 + $0x180] sm:$0xff] %vm858, %v763
    %908 = vst.msk [vmem:[#allocation2 + $0x188] sm:$0xff] %vm858, %v765
    %909 = vst.msk [vmem:[#allocation2 + $0x190] sm:$0xff] %vm858, %v767
    %910 = vst.msk [vmem:[#allocation2 + $0x198] sm:$0xff] %vm858, %v769
    %911 = vst.msk [vmem:[#allocation2 + $0x1a0] sm:$0xff] %vm858, %v771
    %912 = vst.msk [vmem:[#allocation2 + $0x1a8] sm:$0xff] %vm858, %v773
    %913 = vst.msk [vmem:[#allocation2 + $0x1b0] sm:$0xff] %vm858, %v775
    %914 = vst.msk [vmem:[#allocation2 + $0x1b8] sm:$0xff] %vm858, %v777
    %915 = vst.msk [vmem:[#allocation2 + $0x1c0] sm:$0xff] %vm858, %v779
    %916 = vst.msk [vmem:[#allocation2 + $0x1c8] sm:$0xff] %vm858, %v781
    %917 = vst.msk [vmem:[#allocation2 + $0x1d0] sm:$0xff] %vm858, %v783
    %918 = vst.msk [vmem:[#allocation2 + $0x1d8] sm:$0xff] %vm858, %v785
    %919 = vst.msk [vmem:[#allocation2 + $0x1e0] sm:$0xff] %vm858, %v787
    %920 = vst.msk [vmem:[#allocation2 + $0x1e8] sm:$0xff] %vm858, %v789
    %921 = vst.msk [vmem:[#allocation2 + $0x1f0] sm:$0xff] %vm858, %v791
    %922 = vst.msk [vmem:[#allocation2 + $0x1f8] sm:$0xff] %vm858, %v793
    %s923 = scalar_lea.vmem %s0, 24
    %v924 = vld [vmem:[%s923] sm:$0xff]
    %v925 = vld [vmem:[%s923 + $0x8] sm:$0xff]
    %v926 = vld [vmem:[%s923 + $0x18] sm:$0xff]
    %v927 = vld [vmem:[%s923 + $0x20] sm:$0xff]
    %v928 = vld [vmem:[%s923 + $0x30] sm:$0xff]
    %v929 = vld [vmem:[%s923 + $0x38] sm:$0xff]
    %v930 = vld [vmem:[%s923 + $0x48] sm:$0xff]
    %v931 = vld [vmem:[%s923 + $0x50] sm:$0xff]
    %v932 = vld [vmem:[%s923 + $0x60] sm:$0xff]
    %v933 = vld [vmem:[%s923 + $0x68] sm:$0xff]
    %v934 = vld [vmem:[%s923 + $0x78] sm:$0xff]
    %v935 = vld [vmem:[%s923 + $0x80] sm:$0xff]
    %v936 = vld [vmem:[%s923 + $0x90] sm:$0xff]
    %v937 = vld [vmem:[%s923 + $0x98] sm:$0xff]
    %v938 = vld [vmem:[%s923 + $0xa8] sm:$0xff]
    %v939 = vld [vmem:[%s923 + $0xb0] sm:$0xff]
    %v940 = vld [vmem:[%s923 + $0xc0] sm:$0xff]
    %v941 = vld [vmem:[%s923 + $0xc8] sm:$0xff]
    %v942 = vld [vmem:[%s923 + $0xd8] sm:$0xff]
    %v943 = vld [vmem:[%s923 + $0xe0] sm:$0xff]
    %v944 = vld [vmem:[%s923 + $0xf0] sm:$0xff]
    %v945 = vld [vmem:[%s923 + $0xf8] sm:$0xff]
    %v946 = vld [vmem:[%s923 + $0x108] sm:$0xff]
    %v947 = vld [vmem:[%s923 + $0x110] sm:$0xff]
    %v948 = vld [vmem:[%s923 + $0x120] sm:$0xff]
    %v949 = vld [vmem:[%s923 + $0x128] sm:$0xff]
    %v950 = vld [vmem:[%s923 + $0x138] sm:$0xff]
    %v951 = vld [vmem:[%s923 + $0x140] sm:$0xff]
    %v952 = vld [vmem:[%s923 + $0x150] sm:$0xff]
    %v953 = vld [vmem:[%s923 + $0x158] sm:$0xff]
    %v954 = vld [vmem:[%s923 + $0x168] sm:$0xff]
    %v955 = vld [vmem:[%s923 + $0x170] sm:$0xff]
    %v956 = vld [vmem:[%s923 + $0x1b0] sm:$0xff]
    %v957 = vld [vmem:[%s923 + $0x1b8] sm:$0xff]
    %v958 = vld [vmem:[%s923 + $0x1c8] sm:$0xff]
    %v959 = vld [vmem:[%s923 + $0x1d0] sm:$0xff]
    %v960 = vld [vmem:[%s923 + $0x1e0] sm:$0xff]
    %v961 = vld [vmem:[%s923 + $0x1e8] sm:$0xff]
    %v962 = vld [vmem:[%s923 + $0x1f8] sm:$0xff]
    %v963 = vld [vmem:[%s923 + $0x200] sm:$0xff]
    %v964 = vld [vmem:[%s923 + $0x210] sm:$0xff]
    %v965 = vld [vmem:[%s923 + $0x218] sm:$0xff]
    %v966 = vld [vmem:[%s923 + $0x228] sm:$0xff]
    %v967 = vld [vmem:[%s923 + $0x230] sm:$0xff]
    %v968 = vld [vmem:[%s923 + $0x240] sm:$0xff]
    %v969 = vld [vmem:[%s923 + $0x248] sm:$0xff]
    %v970 = vld [vmem:[%s923 + $0x258] sm:$0xff]
    %v971 = vld [vmem:[%s923 + $0x260] sm:$0xff]
    %v972 = vld [vmem:[%s923 + $0x270] sm:$0xff]
    %v973 = vld [vmem:[%s923 + $0x278] sm:$0xff]
    %v974 = vld [vmem:[%s923 + $0x288] sm:$0xff]
    %v975 = vld [vmem:[%s923 + $0x290] sm:$0xff]
    %v976 = vld [vmem:[%s923 + $0x2a0] sm:$0xff]
    %v977 = vld [vmem:[%s923 + $0x2a8] sm:$0xff]
    %v978 = vld [vmem:[%s923 + $0x2b8] sm:$0xff]
    %v979 = vld [vmem:[%s923 + $0x2c0] sm:$0xff]
    %v980 = vld [vmem:[%s923 + $0x2d0] sm:$0xff]
    %v981 = vld [vmem:[%s923 + $0x2d8] sm:$0xff]
    %v982 = vld [vmem:[%s923 + $0x2e8] sm:$0xff]
    %v983 = vld [vmem:[%s923 + $0x2f0] sm:$0xff]
    %v984 = vld [vmem:[%s923 + $0x300] sm:$0xff]
    %v985 = vld [vmem:[%s923 + $0x308] sm:$0xff]
    %v986 = vld [vmem:[%s923 + $0x318] sm:$0xff]
    %v987 = vld [vmem:[%s923 + $0x320] sm:$0xff]
    %1052 = vrot.lane.b32.xlu0 %v924, 12
    %v1053 = vpop.permute.xlu0 %1052
    %1054 = vrot.lane.b32.xlu0 %v925, 12
    %v1055 = vpop.permute.xlu0 %1054
    %1056 = vrot.lane.b32.xlu0 %v926, 12
    %v1057 = vpop.permute.xlu0 %1056
    %1058 = vrot.lane.b32.xlu0 %v927, 12
    %v1059 = vpop.permute.xlu0 %1058
    %1060 = vrot.lane.b32.xlu0 %v928, 12
    %v1061 = vpop.permute.xlu0 %1060
    %1062 = vrot.lane.b32.xlu0 %v929, 12
    %v1063 = vpop.permute.xlu0 %1062
    %1064 = vrot.lane.b32.xlu0 %v930, 12
    %v1065 = vpop.permute.xlu0 %1064
    %1066 = vrot.lane.b32.xlu0 %v931, 12
    %v1067 = vpop.permute.xlu0 %1066
    %1068 = vrot.lane.b32.xlu0 %v932, 12
    %v1069 = vpop.permute.xlu0 %1068
    %1070 = vrot.lane.b32.xlu0 %v933, 12
    %v1071 = vpop.permute.xlu0 %1070
    %1072 = vrot.lane.b32.xlu0 %v934, 12
    %v1073 = vpop.permute.xlu0 %1072
    %1074 = vrot.lane.b32.xlu0 %v935, 12
    %v1075 = vpop.permute.xlu0 %1074
    %1076 = vrot.lane.b32.xlu0 %v936, 12
    %v1077 = vpop.permute.xlu0 %1076
    %1078 = vrot.lane.b32.xlu0 %v937, 12
    %v1079 = vpop.permute.xlu0 %1078
    %1080 = vrot.lane.b32.xlu0 %v938, 12
    %v1081 = vpop.permute.xlu0 %1080
    %1082 = vrot.lane.b32.xlu0 %v939, 12
    %v1083 = vpop.permute.xlu0 %1082
    %1084 = vrot.lane.b32.xlu0 %v940, 12
    %v1085 = vpop.permute.xlu0 %1084
    %1086 = vrot.lane.b32.xlu0 %v941, 12
    %v1087 = vpop.permute.xlu0 %1086
    %1088 = vrot.lane.b32.xlu0 %v942, 12
    %v1089 = vpop.permute.xlu0 %1088
    %1090 = vrot.lane.b32.xlu0 %v943, 12
    %v1091 = vpop.permute.xlu0 %1090
    %1092 = vrot.lane.b32.xlu0 %v944, 12
    %v1093 = vpop.permute.xlu0 %1092
    %1094 = vrot.lane.b32.xlu0 %v945, 12
    %v1095 = vpop.permute.xlu0 %1094
    %1096 = vrot.lane.b32.xlu0 %v946, 12
    %v1097 = vpop.permute.xlu0 %1096
    %1098 = vrot.lane.b32.xlu0 %v947, 12
    %v1099 = vpop.permute.xlu0 %1098
    %1100 = vrot.lane.b32.xlu0 %v948, 12
    %v1101 = vpop.permute.xlu0 %1100
    %1102 = vrot.lane.b32.xlu0 %v949, 12
    %v1103 = vpop.permute.xlu0 %1102
    %1104 = vrot.lane.b32.xlu0 %v950, 12
    %v1105 = vpop.permute.xlu0 %1104
    %1106 = vrot.lane.b32.xlu0 %v951, 12
    %v1107 = vpop.permute.xlu0 %1106
    %1108 = vrot.lane.b32.xlu0 %v952, 12
    %v1109 = vpop.permute.xlu0 %1108
    %1110 = vrot.lane.b32.xlu0 %v953, 12
    %v1111 = vpop.permute.xlu0 %1110
    %1112 = vrot.lane.b32.xlu0 %v954, 12
    %v1113 = vpop.permute.xlu0 %1112
    %1114 = vrot.lane.b32.xlu0 %v955, 12
    %v1115 = vpop.permute.xlu0 %1114
    %1116 = vrot.lane.b32.xlu0 %v956, 12
    %v1117 = vpop.permute.xlu0 %1116
    %1118 = vrot.lane.b32.xlu0 %v957, 12
    %v1119 = vpop.permute.xlu0 %1118
    %1120 = vrot.lane.b32.xlu0 %v958, 12
    %v1121 = vpop.permute.xlu0 %1120
    %1122 = vrot.lane.b32.xlu0 %v959, 12
    %v1123 = vpop.permute.xlu0 %1122
    %1124 = vrot.lane.b32.xlu0 %v960, 12
    %v1125 = vpop.permute.xlu0 %1124
    %1126 = vrot.lane.b32.xlu0 %v961, 12
    %v1127 = vpop.permute.xlu0 %1126
    %1128 = vrot.lane.b32.xlu0 %v962, 12
    %v1129 = vpop.permute.xlu0 %1128
    %1130 = vrot.lane.b32.xlu0 %v963, 12
    %v1131 = vpop.permute.xlu0 %1130
    %1132 = vrot.lane.b32.xlu0 %v964, 12
    %v1133 = vpop.permute.xlu0 %1132
    %1134 = vrot.lane.b32.xlu0 %v965, 12
    %v1135 = vpop.permute.xlu0 %1134
    %1136 = vrot.lane.b32.xlu0 %v966, 12
    %v1137 = vpop.permute.xlu0 %1136
    %1138 = vrot.lane.b32.xlu0 %v967, 12
    %v1139 = vpop.permute.xlu0 %1138
    %1140 = vrot.lane.b32.xlu0 %v968, 12
    %v1141 = vpop.permute.xlu0 %1140
    %1142 = vrot.lane.b32.xlu0 %v969, 12
    %v1143 = vpop.permute.xlu0 %1142
    %1144 = vrot.lane.b32.xlu0 %v970, 12
    %v1145 = vpop.permute.xlu0 %1144
    %1146 = vrot.lane.b32.xlu0 %v971, 12
    %v1147 = vpop.permute.xlu0 %1146
    %1148 = vrot.lane.b32.xlu0 %v972, 12
    %v1149 = vpop.permute.xlu0 %1148
    %1150 = vrot.lane.b32.xlu0 %v973, 12
    %v1151 = vpop.permute.xlu0 %1150
    %1152 = vrot.lane.b32.xlu0 %v974, 12
    %v1153 = vpop.permute.xlu0 %1152
    %1154 = vrot.lane.b32.xlu0 %v975, 12
    %v1155 = vpop.permute.xlu0 %1154
    %1156 = vrot.lane.b32.xlu0 %v976, 12
    %v1157 = vpop.permute.xlu0 %1156
    %1158 = vrot.lane.b32.xlu0 %v977, 12
    %v1159 = vpop.permute.xlu0 %1158
    %1160 = vrot.lane.b32.xlu0 %v978, 12
    %v1161 = vpop.permute.xlu0 %1160
    %1162 = vrot.lane.b32.xlu0 %v979, 12
    %v1163 = vpop.permute.xlu0 %1162
    %1164 = vrot.lane.b32.xlu0 %v980, 12
    %v1165 = vpop.permute.xlu0 %1164
    %1166 = vrot.lane.b32.xlu0 %v981, 12
    %v1167 = vpop.permute.xlu0 %1166
    %1168 = vrot.lane.b32.xlu0 %v982, 12
    %v1169 = vpop.permute.xlu0 %1168
    %1170 = vrot.lane.b32.xlu0 %v983, 12
    %v1171 = vpop.permute.xlu0 %1170
    %1172 = vrot.lane.b32.xlu0 %v984, 12
    %v1173 = vpop.permute.xlu0 %1172
    %1174 = vrot.lane.b32.xlu0 %v985, 12
    %v1175 = vpop.permute.xlu0 %1174
    %1176 = vrot.lane.b32.xlu0 %v986, 12
    %v1177 = vpop.permute.xlu0 %1176
    %1178 = vrot.lane.b32.xlu0 %v987, 12
    %v1179 = vpop.permute.xlu0 %1178
    %vm1244 = vcmask 130144
    %1245 = vst.msk [vmem:[#allocation2] sm:$0xff] %vm1244, %v1053
    %1246 = vst.msk [vmem:[#allocation2 + $0x8] sm:$0xff] %vm1244, %v1055
    %1247 = vst.msk [vmem:[#allocation2 + $0x10] sm:$0xff] %vm1244, %v1057
    %1248 = vst.msk [vmem:[#allocation2 + $0x18] sm:$0xff] %vm1244, %v1059
    %1249 = vst.msk [vmem:[#allocation2 + $0x20] sm:$0xff] %vm1244, %v1061
    %1250 = vst.msk [vmem:[#allocation2 + $0x28] sm:$0xff] %vm1244, %v1063
    %1251 = vst.msk [vmem:[#allocation2 + $0x30] sm:$0xff] %vm1244, %v1065
    %1252 = vst.msk [vmem:[#allocation2 + $0x38] sm:$0xff] %vm1244, %v1067
    %1253 = vst.msk [vmem:[#allocation2 + $0x40] sm:$0xff] %vm1244, %v1069
    %1254 = vst.msk [vmem:[#allocation2 + $0x48] sm:$0xff] %vm1244, %v1071
    %1255 = vst.msk [vmem:[#allocation2 + $0x50] sm:$0xff] %vm1244, %v1073
    %1256 = vst.msk [vmem:[#allocation2 + $0x58] sm:$0xff] %vm1244, %v1075
    %1257 = vst.msk [vmem:[#allocation2 + $0x60] sm:$0xff] %vm1244, %v1077
    %1258 = vst.msk [vmem:[#allocation2 + $0x68] sm:$0xff] %vm1244, %v1079
    %1259 = vst.msk [vmem:[#allocation2 + $0x70] sm:$0xff] %vm1244, %v1081
    %1260 = vst.msk [vmem:[#allocation2 + $0x78] sm:$0xff] %vm1244, %v1083
    %1261 = vst.msk [vmem:[#allocation2 + $0x80] sm:$0xff] %vm1244, %v1085
    %1262 = vst.msk [vmem:[#allocation2 + $0x88] sm:$0xff] %vm1244, %v1087
    %1263 = vst.msk [vmem:[#allocation2 + $0x90] sm:$0xff] %vm1244, %v1089
    %1264 = vst.msk [vmem:[#allocation2 + $0x98] sm:$0xff] %vm1244, %v1091
    %1265 = vst.msk [vmem:[#allocation2 + $0xa0] sm:$0xff] %vm1244, %v1093
    %1266 = vst.msk [vmem:[#allocation2 + $0xa8] sm:$0xff] %vm1244, %v1095
    %1267 = vst.msk [vmem:[#allocation2 + $0xb0] sm:$0xff] %vm1244, %v1097
    %1268 = vst.msk [vmem:[#allocation2 + $0xb8] sm:$0xff] %vm1244, %v1099
    %1269 = vst.msk [vmem:[#allocation2 + $0xc0] sm:$0xff] %vm1244, %v1101
    %1270 = vst.msk [vmem:[#allocation2 + $0xc8] sm:$0xff] %vm1244, %v1103
    %1271 = vst.msk [vmem:[#allocation2 + $0xd0] sm:$0xff] %vm1244, %v1105
    %1272 = vst.msk [vmem:[#allocation2 + $0xd8] sm:$0xff] %vm1244, %v1107
    %1273 = vst.msk [vmem:[#allocation2 + $0xe0] sm:$0xff] %vm1244, %v1109
    %1274 = vst.msk [vmem:[#allocation2 + $0xe8] sm:$0xff] %vm1244, %v1111
    %1275 = vst.msk [vmem:[#allocation2 + $0xf0] sm:$0xff] %vm1244, %v1113
    %1276 = vst.msk [vmem:[#allocation2 + $0xf8] sm:$0xff] %vm1244, %v1115
    %1277 = vst.msk [vmem:[#allocation2 + $0x100] sm:$0xff] %vm1244, %v1117
    %1278 = vst.msk [vmem:[#allocation2 + $0x108] sm:$0xff] %vm1244, %v1119
    %1279 = vst.msk [vmem:[#allocation2 + $0x110] sm:$0xff] %vm1244, %v1121
    %1280 = vst.msk [vmem:[#allocation2 + $0x118] sm:$0xff] %vm1244, %v1123
    %1281 = vst.msk [vmem:[#allocation2 + $0x120] sm:$0xff] %vm1244, %v1125
    %1282 = vst.msk [vmem:[#allocation2 + $0x128] sm:$0xff] %vm1244, %v1127
    %1283 = vst.msk [vmem:[#allocation2 + $0x130] sm:$0xff] %vm1244, %v1129
    %1284 = vst.msk [vmem:[#allocation2 + $0x138] sm:$0xff] %vm1244, %v1131
    %1285 = vst.msk [vmem:[#allocation2 + $0x140] sm:$0xff] %vm1244, %v1133
    %1286 = vst.msk [vmem:[#allocation2 + $0x148] sm:$0xff] %vm1244, %v1135
    %1287 = vst.msk [vmem:[#allocation2 + $0x150] sm:$0xff] %vm1244, %v1137
    %1288 = vst.msk [vmem:[#allocation2 + $0x158] sm:$0xff] %vm1244, %v1139
    %1289 = vst.msk [vmem:[#allocation2 + $0x160] sm:$0xff] %vm1244, %v1141
    %1290 = vst.msk [vmem:[#allocation2 + $0x168] sm:$0xff] %vm1244, %v1143
    %1291 = vst.msk [vmem:[#allocation2 + $0x170] sm:$0xff] %vm1244, %v1145
    %1292 = vst.msk [vmem:[#allocation2 + $0x178] sm:$0xff] %vm1244, %v1147
    %1293 = vst.msk [vmem:[#allocation2 + $0x180] sm:$0xff] %vm1244, %v1149
    %1294 = vst.msk [vmem:[#allocation2 + $0x188] sm:$0xff] %vm1244, %v1151
    %1295 = vst.msk [vmem:[#allocation2 + $0x190] sm:$0xff] %vm1244, %v1153
    %1296 = vst.msk [vmem:[#allocation2 + $0x198] sm:$0xff] %vm1244, %v1155
    %1297 = vst.msk [vmem:[#allocation2 + $0x1a0] sm:$0xff] %vm1244, %v1157
    %1298 = vst.msk [vmem:[#allocation2 + $0x1a8] sm:$0xff] %vm1244, %v1159
    %1299 = vst.msk [vmem:[#allocation2 + $0x1b0] sm:$0xff] %vm1244, %v1161
    %1300 = vst.msk [vmem:[#allocation2 + $0x1b8] sm:$0xff] %vm1244, %v1163
    %1301 = vst.msk [vmem:[#allocation2 + $0x1c0] sm:$0xff] %vm1244, %v1165
    %1302 = vst.msk [vmem:[#allocation2 + $0x1c8] sm:$0xff] %vm1244, %v1167
    %1303 = vst.msk [vmem:[#allocation2 + $0x1d0] sm:$0xff] %vm1244, %v1169
    %1304 = vst.msk [vmem:[#allocation2 + $0x1d8] sm:$0xff] %vm1244, %v1171
    %1305 = vst.msk [vmem:[#allocation2 + $0x1e0] sm:$0xff] %vm1244, %v1173
    %1306 = vst.msk [vmem:[#allocation2 + $0x1e8] sm:$0xff] %vm1244, %v1175
    %1307 = vst.msk [vmem:[#allocation2 + $0x1f0] sm:$0xff] %vm1244, %v1177
    %1308 = vst.msk [vmem:[#allocation2 + $0x1f8] sm:$0xff] %vm1244, %v1179
    %v1309 = vld [vmem:[%s923 + $0x1] sm:$0xff]
    %v1310 = vld [vmem:[%s923 + $0x9] sm:$0xff]
    %v1311 = vld [vmem:[%s923 + $0x19] sm:$0xff]
    %v1312 = vld [vmem:[%s923 + $0x21] sm:$0xff]
    %v1313 = vld [vmem:[%s923 + $0x31] sm:$0xff]
    %v1314 = vld [vmem:[%s923 + $0x39] sm:$0xff]
    %v1315 = vld [vmem:[%s923 + $0x49] sm:$0xff]
    %v1316 = vld [vmem:[%s923 + $0x51] sm:$0xff]
    %v1317 = vld [vmem:[%s923 + $0x61] sm:$0xff]
    %v1318 = vld [vmem:[%s923 + $0x69] sm:$0xff]
    %v1319 = vld [vmem:[%s923 + $0x79] sm:$0xff]
    %v1320 = vld [vmem:[%s923 + $0x81] sm:$0xff]
    %v1321 = vld [vmem:[%s923 + $0x91] sm:$0xff]
    %v1322 = vld [vmem:[%s923 + $0x99] sm:$0xff]
    %v1323 = vld [vmem:[%s923 + $0xa9] sm:$0xff]
    %v1324 = vld [vmem:[%s923 + $0xb1] sm:$0xff]
    %v1325 = vld [vmem:[%s923 + $0xc1] sm:$0xff]
    %v1326 = vld [vmem:[%s923 + $0xc9] sm:$0xff]
    %v1327 = vld [vmem:[%s923 + $0xd9] sm:$0xff]
    %v1328 = vld [vmem:[%s923 + $0xe1] sm:$0xff]
    %v1329 = vld [vmem:[%s923 + $0xf1] sm:$0xff]
    %v1330 = vld [vmem:[%s923 + $0xf9] sm:$0xff]
    %v1331 = vld [vmem:[%s923 + $0x109] sm:$0xff]
    %v1332 = vld [vmem:[%s923 + $0x111] sm:$0xff]
    %v1333 = vld [vmem:[%s923 + $0x121] sm:$0xff]
    %v1334 = vld [vmem:[%s923 + $0x129] sm:$0xff]
    %v1335 = vld [vmem:[%s923 + $0x139] sm:$0xff]
    %v1336 = vld [vmem:[%s923 + $0x141] sm:$0xff]
    %v1337 = vld [vmem:[%s923 + $0x151] sm:$0xff]
    %v1338 = vld [vmem:[%s923 + $0x159] sm:$0xff]
    %v1339 = vld [vmem:[%s923 + $0x169] sm:$0xff]
    %v1340 = vld [vmem:[%s923 + $0x171] sm:$0xff]
    %v1341 = vld [vmem:[%s923 + $0x1b1] sm:$0xff]
    %v1342 = vld [vmem:[%s923 + $0x1b9] sm:$0xff]
    %v1343 = vld [vmem:[%s923 + $0x1c9] sm:$0xff]
    %v1344 = vld [vmem:[%s923 + $0x1d1] sm:$0xff]
    %v1345 = vld [vmem:[%s923 + $0x1e1] sm:$0xff]
    %v1346 = vld [vmem:[%s923 + $0x1e9] sm:$0xff]
    %v1347 = vld [vmem:[%s923 + $0x1f9] sm:$0xff]
    %v1348 = vld [vmem:[%s923 + $0x201] sm:$0xff]
    %v1349 = vld [vmem:[%s923 + $0x211] sm:$0xff]
    %v1350 = vld [vmem:[%s923 + $0x219] sm:$0xff]
    %v1351 = vld [vmem:[%s923 + $0x229] sm:$0xff]
    %v1352 = vld [vmem:[%s923 + $0x231] sm:$0xff]
    %v1353 = vld [vmem:[%s923 + $0x241] sm:$0xff]
    %v1354 = vld [vmem:[%s923 + $0x249] sm:$0xff]
    %v1355 = vld [vmem:[%s923 + $0x259] sm:$0xff]
    %v1356 = vld [vmem:[%s923 + $0x261] sm:$0xff]
    %v1357 = vld [vmem:[%s923 + $0x271] sm:$0xff]
    %v1358 = vld [vmem:[%s923 + $0x279] sm:$0xff]
    %v1359 = vld [vmem:[%s923 + $0x289] sm:$0xff]
    %v1360 = vld [vmem:[%s923 + $0x291] sm:$0xff]
    %v1361 = vld [vmem:[%s923 + $0x2a1] sm:$0xff]
    %v1362 = vld [vmem:[%s923 + $0x2a9] sm:$0xff]
    %v1363 = vld [vmem:[%s923 + $0x2b9] sm:$0xff]
    %v1364 = vld [vmem:[%s923 + $0x2c1] sm:$0xff]
    %v1365 = vld [vmem:[%s923 + $0x2d1] sm:$0xff]
    %v1366 = vld [vmem:[%s923 + $0x2d9] sm:$0xff]
    %v1367 = vld [vmem:[%s923 + $0x2e9] sm:$0xff]
    %v1368 = vld [vmem:[%s923 + $0x2f1] sm:$0xff]
    %v1369 = vld [vmem:[%s923 + $0x301] sm:$0xff]
    %v1370 = vld [vmem:[%s923 + $0x309] sm:$0xff]
    %v1371 = vld [vmem:[%s923 + $0x319] sm:$0xff]
    %v1372 = vld [vmem:[%s923 + $0x321] sm:$0xff]
    %1437 = vrot.lane.b32.xlu0 %v1309, 16
    %v1438 = vpop.permute.xlu0 %1437
    %1439 = vrot.lane.b32.xlu0 %v1310, 16
    %v1440 = vpop.permute.xlu0 %1439
    %1441 = vrot.lane.b32.xlu0 %v1311, 16
    %v1442 = vpop.permute.xlu0 %1441
    %1443 = vrot.lane.b32.xlu0 %v1312, 16
    %v1444 = vpop.permute.xlu0 %1443
    %1445 = vrot.lane.b32.xlu0 %v1313, 16
    %v1446 = vpop.permute.xlu0 %1445
    %1447 = vrot.lane.b32.xlu0 %v1314, 16
    %v1448 = vpop.permute.xlu0 %1447
    %1449 = vrot.lane.b32.xlu0 %v1315, 16
    %v1450 = vpop.permute.xlu0 %1449
    %1451 = vrot.lane.b32.xlu0 %v1316, 16
    %v1452 = vpop.permute.xlu0 %1451
    %1453 = vrot.lane.b32.xlu0 %v1317, 16
    %v1454 = vpop.permute.xlu0 %1453
    %1455 = vrot.lane.b32.xlu0 %v1318, 16
    %v1456 = vpop.permute.xlu0 %1455
    %1457 = vrot.lane.b32.xlu0 %v1319, 16
    %v1458 = vpop.permute.xlu0 %1457
    %1459 = vrot.lane.b32.xlu0 %v1320, 16
    %v1460 = vpop.permute.xlu0 %1459
    %1461 = vrot.lane.b32.xlu0 %v1321, 16
    %v1462 = vpop.permute.xlu0 %1461
    %1463 = vrot.lane.b32.xlu0 %v1322, 16
    %v1464 = vpop.permute.xlu0 %1463
    %1465 = vrot.lane.b32.xlu0 %v1323, 16
    %v1466 = vpop.permute.xlu0 %1465
    %1467 = vrot.lane.b32.xlu0 %v1324, 16
    %v1468 = vpop.permute.xlu0 %1467
    %1469 = vrot.lane.b32.xlu0 %v1325, 16
    %v1470 = vpop.permute.xlu0 %1469
    %1471 = vrot.lane.b32.xlu0 %v1326, 16
    %v1472 = vpop.permute.xlu0 %1471
    %1473 = vrot.lane.b32.xlu0 %v1327, 16
    %v1474 = vpop.permute.xlu0 %1473
    %1475 = vrot.lane.b32.xlu0 %v1328, 16
    %v1476 = vpop.permute.xlu0 %1475
    %1477 = vrot.lane.b32.xlu0 %v1329, 16
    %v1478 = vpop.permute.xlu0 %1477
    %1479 = vrot.lane.b32.xlu0 %v1330, 16
    %v1480 = vpop.permute.xlu0 %1479
    %1481 = vrot.lane.b32.xlu0 %v1331, 16
    %v1482 = vpop.permute.xlu0 %1481
    %1483 = vrot.lane.b32.xlu0 %v1332, 16
    %v1484 = vpop.permute.xlu0 %1483
    %1485 = vrot.lane.b32.xlu0 %v1333, 16
    %v1486 = vpop.permute.xlu0 %1485
    %1487 = vrot.lane.b32.xlu0 %v1334, 16
    %v1488 = vpop.permute.xlu0 %1487
    %1489 = vrot.lane.b32.xlu0 %v1335, 16
    %v1490 = vpop.permute.xlu0 %1489
    %1491 = vrot.lane.b32.xlu0 %v1336, 16
    %v1492 = vpop.permute.xlu0 %1491
    %1493 = vrot.lane.b32.xlu0 %v1337, 16
    %v1494 = vpop.permute.xlu0 %1493
    %1495 = vrot.lane.b32.xlu0 %v1338, 16
    %v1496 = vpop.permute.xlu0 %1495
    %1497 = vrot.lane.b32.xlu0 %v1339, 16
    %v1498 = vpop.permute.xlu0 %1497
    %1499 = vrot.lane.b32.xlu0 %v1340, 16
    %v1500 = vpop.permute.xlu0 %1499
    %1501 = vrot.lane.b32.xlu0 %v1341, 16
    %v1502 = vpop.permute.xlu0 %1501
    %1503 = vrot.lane.b32.xlu0 %v1342, 16
    %v1504 = vpop.permute.xlu0 %1503
    %1505 = vrot.lane.b32.xlu0 %v1343, 16
    %v1506 = vpop.permute.xlu0 %1505
    %1507 = vrot.lane.b32.xlu0 %v1344, 16
    %v1508 = vpop.permute.xlu0 %1507
    %1509 = vrot.lane.b32.xlu0 %v1345, 16
    %v1510 = vpop.permute.xlu0 %1509
    %1511 = vrot.lane.b32.xlu0 %v1346, 16
    %v1512 = vpop.permute.xlu0 %1511
    %1513 = vrot.lane.b32.xlu0 %v1347, 16
    %v1514 = vpop.permute.xlu0 %1513
    %1515 = vrot.lane.b32.xlu0 %v1348, 16
    %v1516 = vpop.permute.xlu0 %1515
    %1517 = vrot.lane.b32.xlu0 %v1349, 16
    %v1518 = vpop.permute.xlu0 %1517
    %1519 = vrot.lane.b32.xlu0 %v1350, 16
    %v1520 = vpop.permute.xlu0 %1519
    %1521 = vrot.lane.b32.xlu0 %v1351, 16
    %v1522 = vpop.permute.xlu0 %1521
    %1523 = vrot.lane.b32.xlu0 %v1352, 16
    %v1524 = vpop.permute.xlu0 %1523
    %1525 = vrot.lane.b32.xlu0 %v1353, 16
    %v1526 = vpop.permute.xlu0 %1525
    %1527 = vrot.lane.b32.xlu0 %v1354, 16
    %v1528 = vpop.permute.xlu0 %1527
    %1529 = vrot.lane.b32.xlu0 %v1355, 16
    %v1530 = vpop.permute.xlu0 %1529
    %1531 = vrot.lane.b32.xlu0 %v1356, 16
    %v1532 = vpop.permute.xlu0 %1531
    %1533 = vrot.lane.b32.xlu0 %v1357, 16
    %v1534 = vpop.permute.xlu0 %1533
    %1535 = vrot.lane.b32.xlu0 %v1358, 16
    %v1536 = vpop.permute.xlu0 %1535
    %1537 = vrot.lane.b32.xlu0 %v1359, 16
    %v1538 = vpop.permute.xlu0 %1537
    %1539 = vrot.lane.b32.xlu0 %v1360, 16
    %v1540 = vpop.permute.xlu0 %1539
    %1541 = vrot.lane.b32.xlu0 %v1361, 16
    %v1542 = vpop.permute.xlu0 %1541
    %1543 = vrot.lane.b32.xlu0 %v1362, 16
    %v1544 = vpop.permute.xlu0 %1543
    %1545 = vrot.lane.b32.xlu0 %v1363, 16
    %v1546 = vpop.permute.xlu0 %1545
    %1547 = vrot.lane.b32.xlu0 %v1364, 16
    %v1548 = vpop.permute.xlu0 %1547
    %1549 = vrot.lane.b32.xlu0 %v1365, 16
    %v1550 = vpop.permute.xlu0 %1549
    %1551 = vrot.lane.b32.xlu0 %v1366, 16
    %v1552 = vpop.permute.xlu0 %1551
    %1553 = vrot.lane.b32.xlu0 %v1367, 16
    %v1554 = vpop.permute.xlu0 %1553
    %1555 = vrot.lane.b32.xlu0 %v1368, 16
    %v1556 = vpop.permute.xlu0 %1555
    %1557 = vrot.lane.b32.xlu0 %v1369, 16
    %v1558 = vpop.permute.xlu0 %1557
    %1559 = vrot.lane.b32.xlu0 %v1370, 16
    %v1560 = vpop.permute.xlu0 %1559
    %1561 = vrot.lane.b32.xlu0 %v1371, 16
    %v1562 = vpop.permute.xlu0 %1561
    %1563 = vrot.lane.b32.xlu0 %v1372, 16
    %v1564 = vpop.permute.xlu0 %1563
    %vm1629 = vcmask 162944
    %1630 = vst.msk [vmem:[#allocation2] sm:$0xff] %vm1629, %v1438
    %1631 = vst.msk [vmem:[#allocation2 + $0x8] sm:$0xff] %vm1629, %v1440
    %1632 = vst.msk [vmem:[#allocation2 + $0x10] sm:$0xff] %vm1629, %v1442
    %1633 = vst.msk [vmem:[#allocation2 + $0x18] sm:$0xff] %vm1629, %v1444
    %1634 = vst.msk [vmem:[#allocation2 + $0x20] sm:$0xff] %vm1629, %v1446
    %1635 = vst.msk [vmem:[#allocation2 + $0x28] sm:$0xff] %vm1629, %v1448
    %1636 = vst.msk [vmem:[#allocation2 + $0x30] sm:$0xff] %vm1629, %v1450
    %1637 = vst.msk [vmem:[#allocation2 + $0x38] sm:$0xff] %vm1629, %v1452
    %1638 = vst.msk [vmem:[#allocation2 + $0x40] sm:$0xff] %vm1629, %v1454
    %1639 = vst.msk [vmem:[#allocation2 + $0x48] sm:$0xff] %vm1629, %v1456
    %1640 = vst.msk [vmem:[#allocation2 + $0x50] sm:$0xff] %vm1629, %v1458
    %1641 = vst.msk [vmem:[#allocation2 + $0x58] sm:$0xff] %vm1629, %v1460
    %1642 = vst.msk [vmem:[#allocation2 + $0x60] sm:$0xff] %vm1629, %v1462
    %1643 = vst.msk [vmem:[#allocation2 + $0x68] sm:$0xff] %vm1629, %v1464
    %1644 = vst.msk [vmem:[#allocation2 + $0x70] sm:$0xff] %vm1629, %v1466
    %1645 = vst.msk [vmem:[#allocation2 + $0x78] sm:$0xff] %vm1629, %v1468
    %1646 = vst.msk [vmem:[#allocation2 + $0x80] sm:$0xff] %vm1629, %v1470
    %1647 = vst.msk [vmem:[#allocation2 + $0x88] sm:$0xff] %vm1629, %v1472
    %1648 = vst.msk [vmem:[#allocation2 + $0x90] sm:$0xff] %vm1629, %v1474
    %1649 = vst.msk [vmem:[#allocation2 + $0x98] sm:$0xff] %vm1629, %v1476
    %1650 = vst.msk [vmem:[#allocation2 + $0xa0] sm:$0xff] %vm1629, %v1478
    %1651 = vst.msk [vmem:[#allocation2 + $0xa8] sm:$0xff] %vm1629, %v1480
    %1652 = vst.msk [vmem:[#allocation2 + $0xb0] sm:$0xff] %vm1629, %v1482
    %1653 = vst.msk [vmem:[#allocation2 + $0xb8] sm:$0xff] %vm1629, %v1484
    %1654 = vst.msk [vmem:[#allocation2 + $0xc0] sm:$0xff] %vm1629, %v1486
    %1655 = vst.msk [vmem:[#allocation2 + $0xc8] sm:$0xff] %vm1629, %v1488
    %1656 = vst.msk [vmem:[#allocation2 + $0xd0] sm:$0xff] %vm1629, %v1490
    %1657 = vst.msk [vmem:[#allocation2 + $0xd8] sm:$0xff] %vm1629, %v1492
    %1658 = vst.msk [vmem:[#allocation2 + $0xe0] sm:$0xff] %vm1629, %v1494
    %1659 = vst.msk [vmem:[#allocation2 + $0xe8] sm:$0xff] %vm1629, %v1496
    %1660 = vst.msk [vmem:[#allocation2 + $0xf0] sm:$0xff] %vm1629, %v1498
    %1661 = vst.msk [vmem:[#allocation2 + $0xf8] sm:$0xff] %vm1629, %v1500
    %1662 = vst.msk [vmem:[#allocation2 + $0x100] sm:$0xff] %vm1629, %v1502
    %1663 = vst.msk [vmem:[#allocation2 + $0x108] sm:$0xff] %vm1629, %v1504
    %1664 = vst.msk [vmem:[#allocation2 + $0x110] sm:$0xff] %vm1629, %v1506
    %1665 = vst.msk [vmem:[#allocation2 + $0x118] sm:$0xff] %vm1629, %v1508
    %1666 = vst.msk [vmem:[#allocation2 + $0x120] sm:$0xff] %vm1629, %v1510
    %1667 = vst.msk [vmem:[#allocation2 + $0x128] sm:$0xff] %vm1629, %v1512
    %1668 = vst.msk [vmem:[#allocation2 + $0x130] sm:$0xff] %vm1629, %v1514
    %1669 = vst.msk [vmem:[#allocation2 + $0x138] sm:$0xff] %vm1629, %v1516
    %1670 = vst.msk [vmem:[#allocation2 + $0x140] sm:$0xff] %vm1629, %v1518
    %1671 = vst.msk [vmem:[#allocation2 + $0x148] sm:$0xff] %vm1629, %v1520
    %1672 = vst.msk [vmem:[#allocation2 + $0x150] sm:$0xff] %vm1629, %v1522
    %1673 = vst.msk [vmem:[#allocation2 + $0x158] sm:$0xff] %vm1629, %v1524
    %1674 = vst.msk [vmem:[#allocation2 + $0x160] sm:$0xff] %vm1629, %v1526
    %1675 = vst.msk [vmem:[#allocation2 + $0x168] sm:$0xff] %vm1629, %v1528
    %1676 = vst.msk [vmem:[#allocation2 + $0x170] sm:$0xff] %vm1629, %v1530
    %1677 = vst.msk [vmem:[#allocation2 + $0x178] sm:$0xff] %vm1629, %v1532
    %1678 = vst.msk [vmem:[#allocation2 + $0x180] sm:$0xff] %vm1629, %v1534
    %1679 = vst.msk [vmem:[#allocation2 + $0x188] sm:$0xff] %vm1629, %v1536
    %1680 = vst.msk [vmem:[#allocation2 + $0x190] sm:$0xff] %vm1629, %v1538
    %1681 = vst.msk [vmem:[#allocation2 + $0x198] sm:$0xff] %vm1629, %v1540
    %1682 = vst.msk [vmem:[#allocation2 + $0x1a0] sm:$0xff] %vm1629, %v1542
    %1683 = vst.msk [vmem:[#allocation2 + $0x1a8] sm:$0xff] %vm1629, %v1544
    %1684 = vst.msk [vmem:[#allocation2 + $0x1b0] sm:$0xff] %vm1629, %v1546
    %1685 = vst.msk [vmem:[#allocation2 + $0x1b8] sm:$0xff] %vm1629, %v1548
    %1686 = vst.msk [vmem:[#allocation2 + $0x1c0] sm:$0xff] %vm1629, %v1550
    %1687 = vst.msk [vmem:[#allocation2 + $0x1c8] sm:$0xff] %vm1629, %v1552
    %1688 = vst.msk [vmem:[#allocation2 + $0x1d0] sm:$0xff] %vm1629, %v1554
    %1689 = vst.msk [vmem:[#allocation2 + $0x1d8] sm:$0xff] %vm1629, %v1556
    %1690 = vst.msk [vmem:[#allocation2 + $0x1e0] sm:$0xff] %vm1629, %v1558
    %1691 = vst.msk [vmem:[#allocation2 + $0x1e8] sm:$0xff] %vm1629, %v1560
    %1692 = vst.msk [vmem:[#allocation2 + $0x1f0] sm:$0xff] %vm1629, %v1562
    %1693 = vst.msk [vmem:[#allocation2 + $0x1f8] sm:$0xff] %vm1629, %v1564
    %v1694 = vld [vmem:[%s923 + $0x2] sm:$0xff]
    %v1695 = vld [vmem:[%s923 + $0xa] sm:$0xff]
    %v1696 = vld [vmem:[%s923 + $0x1a] sm:$0xff]
    %v1697 = vld [vmem:[%s923 + $0x22] sm:$0xff]
    %v1698 = vld [vmem:[%s923 + $0x32] sm:$0xff]
    %v1699 = vld [vmem:[%s923 + $0x3a] sm:$0xff]
    %v1700 = vld [vmem:[%s923 + $0x4a] sm:$0xff]
    %v1701 = vld [vmem:[%s923 + $0x52] sm:$0xff]
    %v1702 = vld [vmem:[%s923 + $0x62] sm:$0xff]
    %v1703 = vld [vmem:[%s923 + $0x6a] sm:$0xff]
    %v1704 = vld [vmem:[%s923 + $0x7a] sm:$0xff]
    %v1705 = vld [vmem:[%s923 + $0x82] sm:$0xff]
    %v1706 = vld [vmem:[%s923 + $0x92] sm:$0xff]
    %v1707 = vld [vmem:[%s923 + $0x9a] sm:$0xff]
    %v1708 = vld [vmem:[%s923 + $0xaa] sm:$0xff]
    %v1709 = vld [vmem:[%s923 + $0xb2] sm:$0xff]
    %v1710 = vld [vmem:[%s923 + $0xc2] sm:$0xff]
    %v1711 = vld [vmem:[%s923 + $0xca] sm:$0xff]
    %v1712 = vld [vmem:[%s923 + $0xda] sm:$0xff]
    %v1713 = vld [vmem:[%s923 + $0xe2] sm:$0xff]
    %v1714 = vld [vmem:[%s923 + $0xf2] sm:$0xff]
    %v1715 = vld [vmem:[%s923 + $0xfa] sm:$0xff]
    %v1716 = vld [vmem:[%s923 + $0x10a] sm:$0xff]
    %v1717 = vld [vmem:[%s923 + $0x112] sm:$0xff]
    %v1718 = vld [vmem:[%s923 + $0x122] sm:$0xff]
    %v1719 = vld [vmem:[%s923 + $0x12a] sm:$0xff]
    %v1720 = vld [vmem:[%s923 + $0x13a] sm:$0xff]
    %v1721 = vld [vmem:[%s923 + $0x142] sm:$0xff]
    %v1722 = vld [vmem:[%s923 + $0x152] sm:$0xff]
    %v1723 = vld [vmem:[%s923 + $0x15a] sm:$0xff]
    %v1724 = vld [vmem:[%s923 + $0x16a] sm:$0xff]
    %v1725 = vld [vmem:[%s923 + $0x172] sm:$0xff]
    %v1726 = vld [vmem:[%s923 + $0x1b2] sm:$0xff]
    %v1727 = vld [vmem:[%s923 + $0x1ba] sm:$0xff]
    %v1728 = vld [vmem:[%s923 + $0x1ca] sm:$0xff]
    %v1729 = vld [vmem:[%s923 + $0x1d2] sm:$0xff]
    %v1730 = vld [vmem:[%s923 + $0x1e2] sm:$0xff]
    %v1731 = vld [vmem:[%s923 + $0x1ea] sm:$0xff]
    %v1732 = vld [vmem:[%s923 + $0x1fa] sm:$0xff]
    %v1733 = vld [vmem:[%s923 + $0x202] sm:$0xff]
    %v1734 = vld [vmem:[%s923 + $0x212] sm:$0xff]
    %v1735 = vld [vmem:[%s923 + $0x21a] sm:$0xff]
    %v1736 = vld [vmem:[%s923 + $0x22a] sm:$0xff]
    %v1737 = vld [vmem:[%s923 + $0x232] sm:$0xff]
    %v1738 = vld [vmem:[%s923 + $0x242] sm:$0xff]
    %v1739 = vld [vmem:[%s923 + $0x24a] sm:$0xff]
    %v1740 = vld [vmem:[%s923 + $0x25a] sm:$0xff]
    %v1741 = vld [vmem:[%s923 + $0x262] sm:$0xff]
    %v1742 = vld [vmem:[%s923 + $0x272] sm:$0xff]
    %v1743 = vld [vmem:[%s923 + $0x27a] sm:$0xff]
    %v1744 = vld [vmem:[%s923 + $0x28a] sm:$0xff]
    %v1745 = vld [vmem:[%s923 + $0x292] sm:$0xff]
    %v1746 = vld [vmem:[%s923 + $0x2a2] sm:$0xff]
    %v1747 = vld [vmem:[%s923 + $0x2aa] sm:$0xff]
    %v1748 = vld [vmem:[%s923 + $0x2ba] sm:$0xff]
    %v1749 = vld [vmem:[%s923 + $0x2c2] sm:$0xff]
    %v1750 = vld [vmem:[%s923 + $0x2d2] sm:$0xff]
    %v1751 = vld [vmem:[%s923 + $0x2da] sm:$0xff]
    %v1752 = vld [vmem:[%s923 + $0x2ea] sm:$0xff]
    %v1753 = vld [vmem:[%s923 + $0x2f2] sm:$0xff]
    %v1754 = vld [vmem:[%s923 + $0x302] sm:$0xff]
    %v1755 = vld [vmem:[%s923 + $0x30a] sm:$0xff]
    %v1756 = vld [vmem:[%s923 + $0x31a] sm:$0xff]
    %v1757 = vld [vmem:[%s923 + $0x322] sm:$0xff]
    %1822 = vrot.lane.b32.xlu0 %v1694, 20
    %v1823 = vpop.permute.xlu0 %1822
    %1824 = vrot.lane.b32.xlu0 %v1695, 20
    %v1825 = vpop.permute.xlu0 %1824
    %1826 = vrot.lane.b32.xlu0 %v1696, 20
    %v1827 = vpop.permute.xlu0 %1826
    %1828 = vrot.lane.b32.xlu0 %v1697, 20
    %v1829 = vpop.permute.xlu0 %1828
    %1830 = vrot.lane.b32.xlu0 %v1698, 20
    %v1831 = vpop.permute.xlu0 %1830
    %1832 = vrot.lane.b32.xlu0 %v1699, 20
    %v1833 = vpop.permute.xlu0 %1832
    %1834 = vrot.lane.b32.xlu0 %v1700, 20
    %v1835 = vpop.permute.xlu0 %1834
    %1836 = vrot.lane.b32.xlu0 %v1701, 20
    %v1837 = vpop.permute.xlu0 %1836
    %1838 = vrot.lane.b32.xlu0 %v1702, 20
    %v1839 = vpop.permute.xlu0 %1838
    %1840 = vrot.lane.b32.xlu0 %v1703, 20
    %v1841 = vpop.permute.xlu0 %1840
    %1842 = vrot.lane.b32.xlu0 %v1704, 20
    %v1843 = vpop.permute.xlu0 %1842
    %1844 = vrot.lane.b32.xlu0 %v1705, 20
    %v1845 = vpop.permute.xlu0 %1844
    %1846 = vrot.lane.b32.xlu0 %v1706, 20
    %v1847 = vpop.permute.xlu0 %1846
    %1848 = vrot.lane.b32.xlu0 %v1707, 20
    %v1849 = vpop.permute.xlu0 %1848
    %1850 = vrot.lane.b32.xlu0 %v1708, 20
    %v1851 = vpop.permute.xlu0 %1850
    %1852 = vrot.lane.b32.xlu0 %v1709, 20
    %v1853 = vpop.permute.xlu0 %1852
    %1854 = vrot.lane.b32.xlu0 %v1710, 20
    %v1855 = vpop.permute.xlu0 %1854
    %1856 = vrot.lane.b32.xlu0 %v1711, 20
    %v1857 = vpop.permute.xlu0 %1856
    %1858 = vrot.lane.b32.xlu0 %v1712, 20
    %v1859 = vpop.permute.xlu0 %1858
    %1860 = vrot.lane.b32.xlu0 %v1713, 20
    %v1861 = vpop.permute.xlu0 %1860
    %1862 = vrot.lane.b32.xlu0 %v1714, 20
    %v1863 = vpop.permute.xlu0 %1862
    %1864 = vrot.lane.b32.xlu0 %v1715, 20
    %v1865 = vpop.permute.xlu0 %1864
    %1866 = vrot.lane.b32.xlu0 %v1716, 20
    %v1867 = vpop.permute.xlu0 %1866
    %1868 = vrot.lane.b32.xlu0 %v1717, 20
    %v1869 = vpop.permute.xlu0 %1868
    %1870 = vrot.lane.b32.xlu0 %v1718, 20
    %v1871 = vpop.permute.xlu0 %1870
    %1872 = vrot.lane.b32.xlu0 %v1719, 20
    %v1873 = vpop.permute.xlu0 %1872
    %1874 = vrot.lane.b32.xlu0 %v1720, 20
    %v1875 = vpop.permute.xlu0 %1874
    %1876 = vrot.lane.b32.xlu0 %v1721, 20
    %v1877 = vpop.permute.xlu0 %1876
    %1878 = vrot.lane.b32.xlu0 %v1722, 20
    %v1879 = vpop.permute.xlu0 %1878
    %1880 = vrot.lane.b32.xlu0 %v1723, 20
    %v1881 = vpop.permute.xlu0 %1880
    %1882 = vrot.lane.b32.xlu0 %v1724, 20
    %v1883 = vpop.permute.xlu0 %1882
    %1884 = vrot.lane.b32.xlu0 %v1725, 20
    %v1885 = vpop.permute.xlu0 %1884
    %1886 = vrot.lane.b32.xlu0 %v1726, 20
    %v1887 = vpop.permute.xlu0 %1886
    %1888 = vrot.lane.b32.xlu0 %v1727, 20
    %v1889 = vpop.permute.xlu0 %1888
    %1890 = vrot.lane.b32.xlu0 %v1728, 20
    %v1891 = vpop.permute.xlu0 %1890
    %1892 = vrot.lane.b32.xlu0 %v1729, 20
    %v1893 = vpop.permute.xlu0 %1892
    %1894 = vrot.lane.b32.xlu0 %v1730, 20
    %v1895 = vpop.permute.xlu0 %1894
    %1896 = vrot.lane.b32.xlu0 %v1731, 20
    %v1897 = vpop.permute.xlu0 %1896
    %1898 = vrot.lane.b32.xlu0 %v1732, 20
    %v1899 = vpop.permute.xlu0 %1898
    %1900 = vrot.lane.b32.xlu0 %v1733, 20
    %v1901 = vpop.permute.xlu0 %1900
    %1902 = vrot.lane.b32.xlu0 %v1734, 20
    %v1903 = vpop.permute.xlu0 %1902
    %1904 = vrot.lane.b32.xlu0 %v1735, 20
    %v1905 = vpop.permute.xlu0 %1904
    %1906 = vrot.lane.b32.xlu0 %v1736, 20
    %v1907 = vpop.permute.xlu0 %1906
    %1908 = vrot.lane.b32.xlu0 %v1737, 20
    %v1909 = vpop.permute.xlu0 %1908
    %1910 = vrot.lane.b32.xlu0 %v1738, 20
    %v1911 = vpop.permute.xlu0 %1910
    %1912 = vrot.lane.b32.xlu0 %v1739, 20
    %v1913 = vpop.permute.xlu0 %1912
    %1914 = vrot.lane.b32.xlu0 %v1740, 20
    %v1915 = vpop.permute.xlu0 %1914
    %1916 = vrot.lane.b32.xlu0 %v1741, 20
    %v1917 = vpop.permute.xlu0 %1916
    %1918 = vrot.lane.b32.xlu0 %v1742, 20
    %v1919 = vpop.permute.xlu0 %1918
    %1920 = vrot.lane.b32.xlu0 %v1743, 20
    %v1921 = vpop.permute.xlu0 %1920
    %1922 = vrot.lane.b32.xlu0 %v1744, 20
    %v1923 = vpop.permute.xlu0 %1922
    %1924 = vrot.lane.b32.xlu0 %v1745, 20
    %v1925 = vpop.permute.xlu0 %1924
    %1926 = vrot.lane.b32.xlu0 %v1746, 20
    %v1927 = vpop.permute.xlu0 %1926
    %1928 = vrot.lane.b32.xlu0 %v1747, 20
    %v1929 = vpop.permute.xlu0 %1928
    %1930 = vrot.lane.b32.xlu0 %v1748, 20
    %v1931 = vpop.permute.xlu0 %1930
    %1932 = vrot.lane.b32.xlu0 %v1749, 20
    %v1933 = vpop.permute.xlu0 %1932
    %1934 = vrot.lane.b32.xlu0 %v1750, 20
    %v1935 = vpop.permute.xlu0 %1934
    %1936 = vrot.lane.b32.xlu0 %v1751, 20
    %v1937 = vpop.permute.xlu0 %1936
    %1938 = vrot.lane.b32.xlu0 %v1752, 20
    %v1939 = vpop.permute.xlu0 %1938
    %1940 = vrot.lane.b32.xlu0 %v1753, 20
    %v1941 = vpop.permute.xlu0 %1940
    %1942 = vrot.lane.b32.xlu0 %v1754, 20
    %v1943 = vpop.permute.xlu0 %1942
    %1944 = vrot.lane.b32.xlu0 %v1755, 20
    %v1945 = vpop.permute.xlu0 %1944
    %1946 = vrot.lane.b32.xlu0 %v1756, 20
    %v1947 = vpop.permute.xlu0 %1946
    %1948 = vrot.lane.b32.xlu0 %v1757, 20
    %v1949 = vpop.permute.xlu0 %1948
    %vm2014 = vcmask 195744
    %2015 = vst.msk [vmem:[#allocation2] sm:$0xff] %vm2014, %v1823
    %2016 = vst.msk [vmem:[#allocation2 + $0x8] sm:$0xff] %vm2014, %v1825
    %2017 = vst.msk [vmem:[#allocation2 + $0x10] sm:$0xff] %vm2014, %v1827
    %2018 = vst.msk [vmem:[#allocation2 + $0x18] sm:$0xff] %vm2014, %v1829
    %2019 = vst.msk [vmem:[#allocation2 + $0x20] sm:$0xff] %vm2014, %v1831
    %2020 = vst.msk [vmem:[#allocation2 + $0x28] sm:$0xff] %vm2014, %v1833
    %2021 = vst.msk [vmem:[#allocation2 + $0x30] sm:$0xff] %vm2014, %v1835
    %2022 = vst.msk [vmem:[#allocation2 + $0x38] sm:$0xff] %vm2014, %v1837
    %2023 = vst.msk [vmem:[#allocation2 + $0x40] sm:$0xff] %vm2014, %v1839
    %2024 = vst.msk [vmem:[#allocation2 + $0x48] sm:$0xff] %vm2014, %v1841
    %2025 = vst.msk [vmem:[#allocation2 + $0x50] sm:$0xff] %vm2014, %v1843
    %2026 = vst.msk [vmem:[#allocation2 + $0x58] sm:$0xff] %vm2014, %v1845
    %2027 = vst.msk [vmem:[#allocation2 + $0x60] sm:$0xff] %vm2014, %v1847
    %2028 = vst.msk [vmem:[#allocation2 + $0x68] sm:$0xff] %vm2014, %v1849
    %2029 = vst.msk [vmem:[#allocation2 + $0x70] sm:$0xff] %vm2014, %v1851
    %2030 = vst.msk [vmem:[#allocation2 + $0x78] sm:$0xff] %vm2014, %v1853
    %2031 = vst.msk [vmem:[#allocation2 + $0x80] sm:$0xff] %vm2014, %v1855
    %2032 = vst.msk [vmem:[#allocation2 + $0x88] sm:$0xff] %vm2014, %v1857
    %2033 = vst.msk [vmem:[#allocation2 + $0x90] sm:$0xff] %vm2014, %v1859
    %2034 = vst.msk [vmem:[#allocation2 + $0x98] sm:$0xff] %vm2014, %v1861
    %2035 = vst.msk [vmem:[#allocation2 + $0xa0] sm:$0xff] %vm2014, %v1863
    %2036 = vst.msk [vmem:[#allocation2 + $0xa8] sm:$0xff] %vm2014, %v1865
    %2037 = vst.msk [vmem:[#allocation2 + $0xb0] sm:$0xff] %vm2014, %v1867
    %2038 = vst.msk [vmem:[#allocation2 + $0xb8] sm:$0xff] %vm2014, %v1869
    %2039 = vst.msk [vmem:[#allocation2 + $0xc0] sm:$0xff] %vm2014, %v1871
    %2040 = vst.msk [vmem:[#allocation2 + $0xc8] sm:$0xff] %vm2014, %v1873
    %2041 = vst.msk [vmem:[#allocation2 + $0xd0] sm:$0xff] %vm2014, %v1875
    %2042 = vst.msk [vmem:[#allocation2 + $0xd8] sm:$0xff] %vm2014, %v1877
    %2043 = vst.msk [vmem:[#allocation2 + $0xe0] sm:$0xff] %vm2014, %v1879
    %2044 = vst.msk [vmem:[#allocation2 + $0xe8] sm:$0xff] %vm2014, %v1881
    %2045 = vst.msk [vmem:[#allocation2 + $0xf0] sm:$0xff] %vm2014, %v1883
    %2046 = vst.msk [vmem:[#allocation2 + $0xf8] sm:$0xff] %vm2014, %v1885
    %2047 = vst.msk [vmem:[#allocation2 + $0x100] sm:$0xff] %vm2014, %v1887
    %2048 = vst.msk [vmem:[#allocation2 + $0x108] sm:$0xff] %vm2014, %v1889
    %2049 = vst.msk [vmem:[#allocation2 + $0x110] sm:$0xff] %vm2014, %v1891
    %2050 = vst.msk [vmem:[#allocation2 + $0x118] sm:$0xff] %vm2014, %v1893
    %2051 = vst.msk [vmem:[#allocation2 + $0x120] sm:$0xff] %vm2014, %v1895
    %2052 = vst.msk [vmem:[#allocation2 + $0x128] sm:$0xff] %vm2014, %v1897
    %2053 = vst.msk [vmem:[#allocation2 + $0x130] sm:$0xff] %vm2014, %v1899
    %2054 = vst.msk [vmem:[#allocation2 + $0x138] sm:$0xff] %vm2014, %v1901
    %2055 = vst.msk [vmem:[#allocation2 + $0x140] sm:$0xff] %vm2014, %v1903
    %2056 = vst.msk [vmem:[#allocation2 + $0x148] sm:$0xff] %vm2014, %v1905
    %2057 = vst.msk [vmem:[#allocation2 + $0x150] sm:$0xff] %vm2014, %v1907
    %2058 = vst.msk [vmem:[#allocation2 + $0x158] sm:$0xff] %vm2014, %v1909
    %2059 = vst.msk [vmem:[#allocation2 + $0x160] sm:$0xff] %vm2014, %v1911
    %2060 = vst.msk [vmem:[#allocation2 + $0x168] sm:$0xff] %vm2014, %v1913
    %2061 = vst.msk [vmem:[#allocation2 + $0x170] sm:$0xff] %vm2014, %v1915
    %2062 = vst.msk [vmem:[#allocation2 + $0x178] sm:$0xff] %vm2014, %v1917
    %2063 = vst.msk [vmem:[#allocation2 + $0x180] sm:$0xff] %vm2014, %v1919
    %2064 = vst.msk [vmem:[#allocation2 + $0x188] sm:$0xff] %vm2014, %v1921
    %2065 = vst.msk [vmem:[#allocation2 + $0x190] sm:$0xff] %vm2014, %v1923
    %2066 = vst.msk [vmem:[#allocation2 + $0x198] sm:$0xff] %vm2014, %v1925
    %2067 = vst.msk [vmem:[#allocation2 + $0x1a0] sm:$0xff] %vm2014, %v1927
    %2068 = vst.msk [vmem:[#allocation2 + $0x1a8] sm:$0xff] %vm2014, %v1929
    %2069 = vst.msk [vmem:[#allocation2 + $0x1b0] sm:$0xff] %vm2014, %v1931
    %2070 = vst.msk [vmem:[#allocation2 + $0x1b8] sm:$0xff] %vm2014, %v1933
    %2071 = vst.msk [vmem:[#allocation2 + $0x1c0] sm:$0xff] %vm2014, %v1935
    %2072 = vst.msk [vmem:[#allocation2 + $0x1c8] sm:$0xff] %vm2014, %v1937
    %2073 = vst.msk [vmem:[#allocation2 + $0x1d0] sm:$0xff] %vm2014, %v1939
    %2074 = vst.msk [vmem:[#allocation2 + $0x1d8] sm:$0xff] %vm2014, %v1941
    %2075 = vst.msk [vmem:[#allocation2 + $0x1e0] sm:$0xff] %vm2014, %v1943
    %2076 = vst.msk [vmem:[#allocation2 + $0x1e8] sm:$0xff] %vm2014, %v1945
    %2077 = vst.msk [vmem:[#allocation2 + $0x1f0] sm:$0xff] %vm2014, %v1947
    %2078 = vst.msk [vmem:[#allocation2 + $0x1f8] sm:$0xff] %vm2014, %v1949
    %s2079 = scalar_lea.vmem %s0, 48
    %v2080 = vld [vmem:[%s2079] sm:$0xff]
    %v2081 = vld [vmem:[%s2079 + $0x8] sm:$0xff]
    %v2082 = vld [vmem:[%s2079 + $0x18] sm:$0xff]
    %v2083 = vld [vmem:[%s2079 + $0x20] sm:$0xff]
    %v2084 = vld [vmem:[%s2079 + $0x30] sm:$0xff]
    %v2085 = vld [vmem:[%s2079 + $0x38] sm:$0xff]
    %v2086 = vld [vmem:[%s2079 + $0x48] sm:$0xff]
    %v2087 = vld [vmem:[%s2079 + $0x50] sm:$0xff]
    %v2088 = vld [vmem:[%s2079 + $0x60] sm:$0xff]
    %v2089 = vld [vmem:[%s2079 + $0x68] sm:$0xff]
    %v2090 = vld [vmem:[%s2079 + $0x78] sm:$0xff]
    %v2091 = vld [vmem:[%s2079 + $0x80] sm:$0xff]
    %v2092 = vld [vmem:[%s2079 + $0x90] sm:$0xff]
    %v2093 = vld [vmem:[%s2079 + $0x98] sm:$0xff]
    %v2094 = vld [vmem:[%s2079 + $0xa8] sm:$0xff]
    %v2095 = vld [vmem:[%s2079 + $0xb0] sm:$0xff]
    %v2096 = vld [vmem:[%s2079 + $0xc0] sm:$0xff]
    %v2097 = vld [vmem:[%s2079 + $0xc8] sm:$0xff]
    %v2098 = vld [vmem:[%s2079 + $0xd8] sm:$0xff]
    %v2099 = vld [vmem:[%s2079 + $0xe0] sm:$0xff]
    %v2100 = vld [vmem:[%s2079 + $0xf0] sm:$0xff]
    %v2101 = vld [vmem:[%s2079 + $0xf8] sm:$0xff]
    %v2102 = vld [vmem:[%s2079 + $0x108] sm:$0xff]
    %v2103 = vld [vmem:[%s2079 + $0x110] sm:$0xff]
    %v2104 = vld [vmem:[%s2079 + $0x120] sm:$0xff]
    %v2105 = vld [vmem:[%s2079 + $0x128] sm:$0xff]
    %v2106 = vld [vmem:[%s2079 + $0x138] sm:$0xff]
    %v2107 = vld [vmem:[%s2079 + $0x140] sm:$0xff]
    %v2108 = vld [vmem:[%s2079 + $0x150] sm:$0xff]
    %v2109 = vld [vmem:[%s2079 + $0x158] sm:$0xff]
    %v2110 = vld [vmem:[%s2079 + $0x168] sm:$0xff]
    %v2111 = vld [vmem:[%s2079 + $0x170] sm:$0xff]
    %v2112 = vld [vmem:[%s2079 + $0x1b0] sm:$0xff]
    %v2113 = vld [vmem:[%s2079 + $0x1b8] sm:$0xff]
    %v2114 = vld [vmem:[%s2079 + $0x1c8] sm:$0xff]
    %v2115 = vld [vmem:[%s2079 + $0x1d0] sm:$0xff]
    %v2116 = vld [vmem:[%s2079 + $0x1e0] sm:$0xff]
    %v2117 = vld [vmem:[%s2079 + $0x1e8] sm:$0xff]
    %v2118 = vld [vmem:[%s2079 + $0x1f8] sm:$0xff]
    %v2119 = vld [vmem:[%s2079 + $0x200] sm:$0xff]
    %v2120 = vld [vmem:[%s2079 + $0x210] sm:$0xff]
    %v2121 = vld [vmem:[%s2079 + $0x218] sm:$0xff]
    %v2122 = vld [vmem:[%s2079 + $0x228] sm:$0xff]
    %v2123 = vld [vmem:[%s2079 + $0x230] sm:$0xff]
    %v2124 = vld [vmem:[%s2079 + $0x240] sm:$0xff]
    %v2125 = vld [vmem:[%s2079 + $0x248] sm:$0xff]
    %v2126 = vld [vmem:[%s2079 + $0x258] sm:$0xff]
    %v2127 = vld [vmem:[%s2079 + $0x260] sm:$0xff]
    %v2128 = vld [vmem:[%s2079 + $0x270] sm:$0xff]
    %v2129 = vld [vmem:[%s2079 + $0x278] sm:$0xff]
    %v2130 = vld [vmem:[%s2079 + $0x288] sm:$0xff]
    %v2131 = vld [vmem:[%s2079 + $0x290] sm:$0xff]
    %v2132 = vld [vmem:[%s2079 + $0x2a0] sm:$0xff]
    %v2133 = vld [vmem:[%s2079 + $0x2a8] sm:$0xff]
    %v2134 = vld [vmem:[%s2079 + $0x2b8] sm:$0xff]
    %v2135 = vld [vmem:[%s2079 + $0x2c0] sm:$0xff]
    %v2136 = vld [vmem:[%s2079 + $0x2d0] sm:$0xff]
    %v2137 = vld [vmem:[%s2079 + $0x2d8] sm:$0xff]
    %v2138 = vld [vmem:[%s2079 + $0x2e8] sm:$0xff]
    %v2139 = vld [vmem:[%s2079 + $0x2f0] sm:$0xff]
    %v2140 = vld [vmem:[%s2079 + $0x300] sm:$0xff]
    %v2141 = vld [vmem:[%s2079 + $0x308] sm:$0xff]
    %v2142 = vld [vmem:[%s2079 + $0x318] sm:$0xff]
    %v2143 = vld [vmem:[%s2079 + $0x320] sm:$0xff]
    %2208 = vrot.lane.b32.xlu0 %v2080, 24
    %v2209 = vpop.permute.xlu0 %2208
    %2210 = vrot.lane.b32.xlu0 %v2081, 24
    %v2211 = vpop.permute.xlu0 %2210
    %2212 = vrot.lane.b32.xlu0 %v2082, 24
    %v2213 = vpop.permute.xlu0 %2212
    %2214 = vrot.lane.b32.xlu0 %v2083, 24
    %v2215 = vpop.permute.xlu0 %2214
    %2216 = vrot.lane.b32.xlu0 %v2084, 24
    %v2217 = vpop.permute.xlu0 %2216
    %2218 = vrot.lane.b32.xlu0 %v2085, 24
    %v2219 = vpop.permute.xlu0 %2218
    %2220 = vrot.lane.b32.xlu0 %v2086, 24
    %v2221 = vpop.permute.xlu0 %2220
    %2222 = vrot.lane.b32.xlu0 %v2087, 24
    %v2223 = vpop.permute.xlu0 %2222
    %2224 = vrot.lane.b32.xlu0 %v2088, 24
    %v2225 = vpop.permute.xlu0 %2224
    %2226 = vrot.lane.b32.xlu0 %v2089, 24
    %v2227 = vpop.permute.xlu0 %2226
    %2228 = vrot.lane.b32.xlu0 %v2090, 24
    %v2229 = vpop.permute.xlu0 %2228
    %2230 = vrot.lane.b32.xlu0 %v2091, 24
    %v2231 = vpop.permute.xlu0 %2230
    %2232 = vrot.lane.b32.xlu0 %v2092, 24
    %v2233 = vpop.permute.xlu0 %2232
    %2234 = vrot.lane.b32.xlu0 %v2093, 24
    %v2235 = vpop.permute.xlu0 %2234
    %2236 = vrot.lane.b32.xlu0 %v2094, 24
    %v2237 = vpop.permute.xlu0 %2236
    %2238 = vrot.lane.b32.xlu0 %v2095, 24
    %v2239 = vpop.permute.xlu0 %2238
    %2240 = vrot.lane.b32.xlu0 %v2096, 24
    %v2241 = vpop.permute.xlu0 %2240
    %2242 = vrot.lane.b32.xlu0 %v2097, 24
    %v2243 = vpop.permute.xlu0 %2242
    %2244 = vrot.lane.b32.xlu0 %v2098, 24
    %v2245 = vpop.permute.xlu0 %2244
    %2246 = vrot.lane.b32.xlu0 %v2099, 24
    %v2247 = vpop.permute.xlu0 %2246
    %2248 = vrot.lane.b32.xlu0 %v2100, 24
    %v2249 = vpop.permute.xlu0 %2248
    %2250 = vrot.lane.b32.xlu0 %v2101, 24
    %v2251 = vpop.permute.xlu0 %2250
    %2252 = vrot.lane.b32.xlu0 %v2102, 24
    %v2253 = vpop.permute.xlu0 %2252
    %2254 = vrot.lane.b32.xlu0 %v2103, 24
    %v2255 = vpop.permute.xlu0 %2254
    %2256 = vrot.lane.b32.xlu0 %v2104, 24
    %v2257 = vpop.permute.xlu0 %2256
    %2258 = vrot.lane.b32.xlu0 %v2105, 24
    %v2259 = vpop.permute.xlu0 %2258
    %2260 = vrot.lane.b32.xlu0 %v2106, 24
    %v2261 = vpop.permute.xlu0 %2260
    %2262 = vrot.lane.b32.xlu0 %v2107, 24
    %v2263 = vpop.permute.xlu0 %2262
    %2264 = vrot.lane.b32.xlu0 %v2108, 24
    %v2265 = vpop.permute.xlu0 %2264
    %2266 = vrot.lane.b32.xlu0 %v2109, 24
    %v2267 = vpop.permute.xlu0 %2266
    %2268 = vrot.lane.b32.xlu0 %v2110, 24
    %v2269 = vpop.permute.xlu0 %2268
    %2270 = vrot.lane.b32.xlu0 %v2111, 24
    %v2271 = vpop.permute.xlu0 %2270
    %2272 = vrot.lane.b32.xlu0 %v2112, 24
    %v2273 = vpop.permute.xlu0 %2272
    %2274 = vrot.lane.b32.xlu0 %v2113, 24
    %v2275 = vpop.permute.xlu0 %2274
    %2276 = vrot.lane.b32.xlu0 %v2114, 24
    %v2277 = vpop.permute.xlu0 %2276
    %2278 = vrot.lane.b32.xlu0 %v2115, 24
    %v2279 = vpop.permute.xlu0 %2278
    %2280 = vrot.lane.b32.xlu0 %v2116, 24
    %v2281 = vpop.permute.xlu0 %2280
    %2282 = vrot.lane.b32.xlu0 %v2117, 24
    %v2283 = vpop.permute.xlu0 %2282
    %2284 = vrot.lane.b32.xlu0 %v2118, 24
    %v2285 = vpop.permute.xlu0 %2284
    %2286 = vrot.lane.b32.xlu0 %v2119, 24
    %v2287 = vpop.permute.xlu0 %2286
    %2288 = vrot.lane.b32.xlu0 %v2120, 24
    %v2289 = vpop.permute.xlu0 %2288
    %2290 = vrot.lane.b32.xlu0 %v2121, 24
    %v2291 = vpop.permute.xlu0 %2290
    %2292 = vrot.lane.b32.xlu0 %v2122, 24
    %v2293 = vpop.permute.xlu0 %2292
    %2294 = vrot.lane.b32.xlu0 %v2123, 24
    %v2295 = vpop.permute.xlu0 %2294
    %2296 = vrot.lane.b32.xlu0 %v2124, 24
    %v2297 = vpop.permute.xlu0 %2296
    %2298 = vrot.lane.b32.xlu0 %v2125, 24
    %v2299 = vpop.permute.xlu0 %2298
    %2300 = vrot.lane.b32.xlu0 %v2126, 24
    %v2301 = vpop.permute.xlu0 %2300
    %2302 = vrot.lane.b32.xlu0 %v2127, 24
    %v2303 = vpop.permute.xlu0 %2302
    %2304 = vrot.lane.b32.xlu0 %v2128, 24
    %v2305 = vpop.permute.xlu0 %2304
    %2306 = vrot.lane.b32.xlu0 %v2129, 24
    %v2307 = vpop.permute.xlu0 %2306
    %2308 = vrot.lane.b32.xlu0 %v2130, 24
    %v2309 = vpop.permute.xlu0 %2308
    %2310 = vrot.lane.b32.xlu0 %v2131, 24
    %v2311 = vpop.permute.xlu0 %2310
    %2312 = vrot.lane.b32.xlu0 %v2132, 24
    %v2313 = vpop.permute.xlu0 %2312
    %2314 = vrot.lane.b32.xlu0 %v2133, 24
    %v2315 = vpop.permute.xlu0 %2314
    %2316 = vrot.lane.b32.xlu0 %v2134, 24
    %v2317 = vpop.permute.xlu0 %2316
    %2318 = vrot.lane.b32.xlu0 %v2135, 24
    %v2319 = vpop.permute.xlu0 %2318
    %2320 = vrot.lane.b32.xlu0 %v2136, 24
    %v2321 = vpop.permute.xlu0 %2320
    %2322 = vrot.lane.b32.xlu0 %v2137, 24
    %v2323 = vpop.permute.xlu0 %2322
    %2324 = vrot.lane.b32.xlu0 %v2138, 24
    %v2325 = vpop.permute.xlu0 %2324
    %2326 = vrot.lane.b32.xlu0 %v2139, 24
    %v2327 = vpop.permute.xlu0 %2326
    %2328 = vrot.lane.b32.xlu0 %v2140, 24
    %v2329 = vpop.permute.xlu0 %2328
    %2330 = vrot.lane.b32.xlu0 %v2141, 24
    %v2331 = vpop.permute.xlu0 %2330
    %2332 = vrot.lane.b32.xlu0 %v2142, 24
    %v2333 = vpop.permute.xlu0 %2332
    %2334 = vrot.lane.b32.xlu0 %v2143, 24
    %v2335 = vpop.permute.xlu0 %2334
    %vm2400 = vcmask 228544
    %2401 = vst.msk [vmem:[#allocation2] sm:$0xff] %vm2400, %v2209
    %2402 = vst.msk [vmem:[#allocation2 + $0x8] sm:$0xff] %vm2400, %v2211
    %2403 = vst.msk [vmem:[#allocation2 + $0x10] sm:$0xff] %vm2400, %v2213
    %2404 = vst.msk [vmem:[#allocation2 + $0x18] sm:$0xff] %vm2400, %v2215
    %2405 = vst.msk [vmem:[#allocation2 + $0x20] sm:$0xff] %vm2400, %v2217
    %2406 = vst.msk [vmem:[#allocation2 + $0x28] sm:$0xff] %vm2400, %v2219
    %2407 = vst.msk [vmem:[#allocation2 + $0x30] sm:$0xff] %vm2400, %v2221
    %2408 = vst.msk [vmem:[#allocation2 + $0x38] sm:$0xff] %vm2400, %v2223
    %2409 = vst.msk [vmem:[#allocation2 + $0x40] sm:$0xff] %vm2400, %v2225
    %2410 = vst.msk [vmem:[#allocation2 + $0x48] sm:$0xff] %vm2400, %v2227
    %2411 = vst.msk [vmem:[#allocation2 + $0x50] sm:$0xff] %vm2400, %v2229
    %2412 = vst.msk [vmem:[#allocation2 + $0x58] sm:$0xff] %vm2400, %v2231
    %2413 = vst.msk [vmem:[#allocation2 + $0x60] sm:$0xff] %vm2400, %v2233
    %2414 = vst.msk [vmem:[#allocation2 + $0x68] sm:$0xff] %vm2400, %v2235
    %2415 = vst.msk [vmem:[#allocation2 + $0x70] sm:$0xff] %vm2400, %v2237
    %2416 = vst.msk [vmem:[#allocation2 + $0x78] sm:$0xff] %vm2400, %v2239
    %2417 = vst.msk [vmem:[#allocation2 + $0x80] sm:$0xff] %vm2400, %v2241
    %2418 = vst.msk [vmem:[#allocation2 + $0x88] sm:$0xff] %vm2400, %v2243
    %2419 = vst.msk [vmem:[#allocation2 + $0x90] sm:$0xff] %vm2400, %v2245
    %2420 = vst.msk [vmem:[#allocation2 + $0x98] sm:$0xff] %vm2400, %v2247
    %2421 = vst.msk [vmem:[#allocation2 + $0xa0] sm:$0xff] %vm2400, %v2249
    %2422 = vst.msk [vmem:[#allocation2 + $0xa8] sm:$0xff] %vm2400, %v2251
    %2423 = vst.msk [vmem:[#allocation2 + $0xb0] sm:$0xff] %vm2400, %v2253
    %2424 = vst.msk [vmem:[#allocation2 + $0xb8] sm:$0xff] %vm2400, %v2255
    %2425 = vst.msk [vmem:[#allocation2 + $0xc0] sm:$0xff] %vm2400, %v2257
    %2426 = vst.msk [vmem:[#allocation2 + $0xc8] sm:$0xff] %vm2400, %v2259
    %2427 = vst.msk [vmem:[#allocation2 + $0xd0] sm:$0xff] %vm2400, %v2261
    %2428 = vst.msk [vmem:[#allocation2 + $0xd8] sm:$0xff] %vm2400, %v2263
    %2429 = vst.msk [vmem:[#allocation2 + $0xe0] sm:$0xff] %vm2400, %v2265
    %2430 = vst.msk [vmem:[#allocation2 + $0xe8] sm:$0xff] %vm2400, %v2267
    %2431 = vst.msk [vmem:[#allocation2 + $0xf0] sm:$0xff] %vm2400, %v2269
    %2432 = vst.msk [vmem:[#allocation2 + $0xf8] sm:$0xff] %vm2400, %v2271
    %2433 = vst.msk [vmem:[#allocation2 + $0x100] sm:$0xff] %vm2400, %v2273
    %2434 = vst.msk [vmem:[#allocation2 + $0x108] sm:$0xff] %vm2400, %v2275
    %2435 = vst.msk [vmem:[#allocation2 + $0x110] sm:$0xff] %vm2400, %v2277
    %2436 = vst.msk [vmem:[#allocation2 + $0x118] sm:$0xff] %vm2400, %v2279
    %2437 = vst.msk [vmem:[#allocation2 + $0x120] sm:$0xff] %vm2400, %v2281
    %2438 = vst.msk [vmem:[#allocation2 + $0x128] sm:$0xff] %vm2400, %v2283
    %2439 = vst.msk [vmem:[#allocation2 + $0x130] sm:$0xff] %vm2400, %v2285
    %2440 = vst.msk [vmem:[#allocation2 + $0x138] sm:$0xff] %vm2400, %v2287
    %2441 = vst.msk [vmem:[#allocation2 + $0x140] sm:$0xff] %vm2400, %v2289
    %2442 = vst.msk [vmem:[#allocation2 + $0x148] sm:$0xff] %vm2400, %v2291
    %2443 = vst.msk [vmem:[#allocation2 + $0x150] sm:$0xff] %vm2400, %v2293
    %2444 = vst.msk [vmem:[#allocation2 + $0x158] sm:$0xff] %vm2400, %v2295
    %2445 = vst.msk [vmem:[#allocation2 + $0x160] sm:$0xff] %vm2400, %v2297
    %2446 = vst.msk [vmem:[#allocation2 + $0x168] sm:$0xff] %vm2400, %v2299
    %2447 = vst.msk [vmem:[#allocation2 + $0x170] sm:$0xff] %vm2400, %v2301
    %2448 = vst.msk [vmem:[#allocation2 + $0x178] sm:$0xff] %vm2400, %v2303
    %2449 = vst.msk [vmem:[#allocation2 + $0x180] sm:$0xff] %vm2400, %v2305
    %2450 = vst.msk [vmem:[#allocation2 + $0x188] sm:$0xff] %vm2400, %v2307
    %2451 = vst.msk [vmem:[#allocation2 + $0x190] sm:$0xff] %vm2400, %v2309
    %2452 = vst.msk [vmem:[#allocation2 + $0x198] sm:$0xff] %vm2400, %v2311
    %2453 = vst.msk [vmem:[#allocation2 + $0x1a0] sm:$0xff] %vm2400, %v2313
    %2454 = vst.msk [vmem:[#allocation2 + $0x1a8] sm:$0xff] %vm2400, %v2315
    %2455 = vst.msk [vmem:[#allocation2 + $0x1b0] sm:$0xff] %vm2400, %v2317
    %2456 = vst.msk [vmem:[#allocation2 + $0x1b8] sm:$0xff] %vm2400, %v2319
    %2457 = vst.msk [vmem:[#allocation2 + $0x1c0] sm:$0xff] %vm2400, %v2321
    %2458 = vst.msk [vmem:[#allocation2 + $0x1c8] sm:$0xff] %vm2400, %v2323
    %2459 = vst.msk [vmem:[#allocation2 + $0x1d0] sm:$0xff] %vm2400, %v2325
    %2460 = vst.msk [vmem:[#allocation2 + $0x1d8] sm:$0xff] %vm2400, %v2327
    %2461 = vst.msk [vmem:[#allocation2 + $0x1e0] sm:$0xff] %vm2400, %v2329
    %2462 = vst.msk [vmem:[#allocation2 + $0x1e8] sm:$0xff] %vm2400, %v2331
    %2463 = vst.msk [vmem:[#allocation2 + $0x1f0] sm:$0xff] %vm2400, %v2333
    %2464 = vst.msk [vmem:[#allocation2 + $0x1f8] sm:$0xff] %vm2400, %v2335
    %v2465 = vld [vmem:[%s2079 + $0x1] sm:$0xff]
    %v2466 = vld [vmem:[%s2079 + $0x9] sm:$0xff]
    %v2467 = vld [vmem:[%s2079 + $0x19] sm:$0xff]
    %v2468 = vld [vmem:[%s2079 + $0x21] sm:$0xff]
    %v2469 = vld [vmem:[%s2079 + $0x31] sm:$0xff]
    %v2470 = vld [vmem:[%s2079 + $0x39] sm:$0xff]
    %v2471 = vld [vmem:[%s2079 + $0x49] sm:$0xff]
    %v2472 = vld [vmem:[%s2079 + $0x51] sm:$0xff]
    %v2473 = vld [vmem:[%s2079 + $0x61] sm:$0xff]
    %v2474 = vld [vmem:[%s2079 + $0x69] sm:$0xff]
    %v2475 = vld [vmem:[%s2079 + $0x79] sm:$0xff]
    %v2476 = vld [vmem:[%s2079 + $0x81] sm:$0xff]
    %v2477 = vld [vmem:[%s2079 + $0x91] sm:$0xff]
    %v2478 = vld [vmem:[%s2079 + $0x99] sm:$0xff]
    %v2479 = vld [vmem:[%s2079 + $0xa9] sm:$0xff]
    %v2480 = vld [vmem:[%s2079 + $0xb1] sm:$0xff]
    %v2481 = vld [vmem:[%s2079 + $0xc1] sm:$0xff]
    %v2482 = vld [vmem:[%s2079 + $0xc9] sm:$0xff]
    %v2483 = vld [vmem:[%s2079 + $0xd9] sm:$0xff]
    %v2484 = vld [vmem:[%s2079 + $0xe1] sm:$0xff]
    %v2485 = vld [vmem:[%s2079 + $0xf1] sm:$0xff]
    %v2486 = vld [vmem:[%s2079 + $0xf9] sm:$0xff]
    %v2487 = vld [vmem:[%s2079 + $0x109] sm:$0xff]
    %v2488 = vld [vmem:[%s2079 + $0x111] sm:$0xff]
    %v2489 = vld [vmem:[%s2079 + $0x121] sm:$0xff]
    %v2490 = vld [vmem:[%s2079 + $0x129] sm:$0xff]
    %v2491 = vld [vmem:[%s2079 + $0x139] sm:$0xff]
    %v2492 = vld [vmem:[%s2079 + $0x141] sm:$0xff]
    %v2493 = vld [vmem:[%s2079 + $0x151] sm:$0xff]
    %v2494 = vld [vmem:[%s2079 + $0x159] sm:$0xff]
    %v2495 = vld [vmem:[%s2079 + $0x169] sm:$0xff]
    %v2496 = vld [vmem:[%s2079 + $0x171] sm:$0xff]
    %v2497 = vld [vmem:[%s2079 + $0x1b1] sm:$0xff]
    %v2498 = vld [vmem:[%s2079 + $0x1b9] sm:$0xff]
    %v2499 = vld [vmem:[%s2079 + $0x1c9] sm:$0xff]
    %v2500 = vld [vmem:[%s2079 + $0x1d1] sm:$0xff]
    %v2501 = vld [vmem:[%s2079 + $0x1e1] sm:$0xff]
    %v2502 = vld [vmem:[%s2079 + $0x1e9] sm:$0xff]
    %v2503 = vld [vmem:[%s2079 + $0x1f9] sm:$0xff]
    %v2504 = vld [vmem:[%s2079 + $0x201] sm:$0xff]
    %v2505 = vld [vmem:[%s2079 + $0x211] sm:$0xff]
    %v2506 = vld [vmem:[%s2079 + $0x219] sm:$0xff]
    %v2507 = vld [vmem:[%s2079 + $0x229] sm:$0xff]
    %v2508 = vld [vmem:[%s2079 + $0x231] sm:$0xff]
    %v2509 = vld [vmem:[%s2079 + $0x241] sm:$0xff]
    %v2510 = vld [vmem:[%s2079 + $0x249] sm:$0xff]
    %v2511 = vld [vmem:[%s2079 + $0x259] sm:$0xff]
    %v2512 = vld [vmem:[%s2079 + $0x261] sm:$0xff]
    %v2513 = vld [vmem:[%s2079 + $0x271] sm:$0xff]
    %v2514 = vld [vmem:[%s2079 + $0x279] sm:$0xff]
    %v2515 = vld [vmem:[%s2079 + $0x289] sm:$0xff]
    %v2516 = vld [vmem:[%s2079 + $0x291] sm:$0xff]
    %v2517 = vld [vmem:[%s2079 + $0x2a1] sm:$0xff]
    %v2518 = vld [vmem:[%s2079 + $0x2a9] sm:$0xff]
    %v2519 = vld [vmem:[%s2079 + $0x2b9] sm:$0xff]
    %v2520 = vld [vmem:[%s2079 + $0x2c1] sm:$0xff]
    %v2521 = vld [vmem:[%s2079 + $0x2d1] sm:$0xff]
    %v2522 = vld [vmem:[%s2079 + $0x2d9] sm:$0xff]
    %v2523 = vld [vmem:[%s2079 + $0x2e9] sm:$0xff]
    %v2524 = vld [vmem:[%s2079 + $0x2f1] sm:$0xff]
    %v2525 = vld [vmem:[%s2079 + $0x301] sm:$0xff]
    %v2526 = vld [vmem:[%s2079 + $0x309] sm:$0xff]
    %v2527 = vld [vmem:[%s2079 + $0x319] sm:$0xff]
    %v2528 = vld [vmem:[%s2079 + $0x321] sm:$0xff]
    %2593 = vrot.lane.b32.xlu0 %v2465, 28
    %v2594 = vpop.permute.xlu0 %2593
    %2595 = vrot.lane.b32.xlu0 %v2466, 28
    %v2596 = vpop.permute.xlu0 %2595
    %2597 = vrot.lane.b32.xlu0 %v2467, 28
    %v2598 = vpop.permute.xlu0 %2597
    %2599 = vrot.lane.b32.xlu0 %v2468, 28
    %v2600 = vpop.permute.xlu0 %2599
    %2601 = vrot.lane.b32.xlu0 %v2469, 28
    %v2602 = vpop.permute.xlu0 %2601
    %2603 = vrot.lane.b32.xlu0 %v2470, 28
    %v2604 = vpop.permute.xlu0 %2603
    %2605 = vrot.lane.b32.xlu0 %v2471, 28
    %v2606 = vpop.permute.xlu0 %2605
    %2607 = vrot.lane.b32.xlu0 %v2472, 28
    %v2608 = vpop.permute.xlu0 %2607
    %2609 = vrot.lane.b32.xlu0 %v2473, 28
    %v2610 = vpop.permute.xlu0 %2609
    %2611 = vrot.lane.b32.xlu0 %v2474, 28
    %v2612 = vpop.permute.xlu0 %2611
    %2613 = vrot.lane.b32.xlu0 %v2475, 28
    %v2614 = vpop.permute.xlu0 %2613
    %2615 = vrot.lane.b32.xlu0 %v2476, 28
    %v2616 = vpop.permute.xlu0 %2615
    %2617 = vrot.lane.b32.xlu0 %v2477, 28
    %v2618 = vpop.permute.xlu0 %2617
    %2619 = vrot.lane.b32.xlu0 %v2478, 28
    %v2620 = vpop.permute.xlu0 %2619
    %2621 = vrot.lane.b32.xlu0 %v2479, 28
    %v2622 = vpop.permute.xlu0 %2621
    %2623 = vrot.lane.b32.xlu0 %v2480, 28
    %v2624 = vpop.permute.xlu0 %2623
    %2625 = vrot.lane.b32.xlu0 %v2481, 28
    %v2626 = vpop.permute.xlu0 %2625
    %2627 = vrot.lane.b32.xlu0 %v2482, 28
    %v2628 = vpop.permute.xlu0 %2627
    %2629 = vrot.lane.b32.xlu0 %v2483, 28
    %v2630 = vpop.permute.xlu0 %2629
    %2631 = vrot.lane.b32.xlu0 %v2484, 28
    %v2632 = vpop.permute.xlu0 %2631
    %2633 = vrot.lane.b32.xlu0 %v2485, 28
    %v2634 = vpop.permute.xlu0 %2633
    %2635 = vrot.lane.b32.xlu0 %v2486, 28
    %v2636 = vpop.permute.xlu0 %2635
    %2637 = vrot.lane.b32.xlu0 %v2487, 28
    %v2638 = vpop.permute.xlu0 %2637
    %2639 = vrot.lane.b32.xlu0 %v2488, 28
    %v2640 = vpop.permute.xlu0 %2639
    %2641 = vrot.lane.b32.xlu0 %v2489, 28
    %v2642 = vpop.permute.xlu0 %2641
    %2643 = vrot.lane.b32.xlu0 %v2490, 28
    %v2644 = vpop.permute.xlu0 %2643
    %2645 = vrot.lane.b32.xlu0 %v2491, 28
    %v2646 = vpop.permute.xlu0 %2645
    %2647 = vrot.lane.b32.xlu0 %v2492, 28
    %v2648 = vpop.permute.xlu0 %2647
    %2649 = vrot.lane.b32.xlu0 %v2493, 28
    %v2650 = vpop.permute.xlu0 %2649
    %2651 = vrot.lane.b32.xlu0 %v2494, 28
    %v2652 = vpop.permute.xlu0 %2651
    %2653 = vrot.lane.b32.xlu0 %v2495, 28
    %v2654 = vpop.permute.xlu0 %2653
    %2655 = vrot.lane.b32.xlu0 %v2496, 28
    %v2656 = vpop.permute.xlu0 %2655
    %2657 = vrot.lane.b32.xlu0 %v2497, 28
    %v2658 = vpop.permute.xlu0 %2657
    %2659 = vrot.lane.b32.xlu0 %v2498, 28
    %v2660 = vpop.permute.xlu0 %2659
    %2661 = vrot.lane.b32.xlu0 %v2499, 28
    %v2662 = vpop.permute.xlu0 %2661
    %2663 = vrot.lane.b32.xlu0 %v2500, 28
    %v2664 = vpop.permute.xlu0 %2663
    %2665 = vrot.lane.b32.xlu0 %v2501, 28
    %v2666 = vpop.permute.xlu0 %2665
    %2667 = vrot.lane.b32.xlu0 %v2502, 28
    %v2668 = vpop.permute.xlu0 %2667
    %2669 = vrot.lane.b32.xlu0 %v2503, 28
    %v2670 = vpop.permute.xlu0 %2669
    %2671 = vrot.lane.b32.xlu0 %v2504, 28
    %v2672 = vpop.permute.xlu0 %2671
    %2673 = vrot.lane.b32.xlu0 %v2505, 28
    %v2674 = vpop.permute.xlu0 %2673
    %2675 = vrot.lane.b32.xlu0 %v2506, 28
    %v2676 = vpop.permute.xlu0 %2675
    %2677 = vrot.lane.b32.xlu0 %v2507, 28
    %v2678 = vpop.permute.xlu0 %2677
    %2679 = vrot.lane.b32.xlu0 %v2508, 28
    %v2680 = vpop.permute.xlu0 %2679
    %2681 = vrot.lane.b32.xlu0 %v2509, 28
    %v2682 = vpop.permute.xlu0 %2681
    %2683 = vrot.lane.b32.xlu0 %v2510, 28
    %v2684 = vpop.permute.xlu0 %2683
    %2685 = vrot.lane.b32.xlu0 %v2511, 28
    %v2686 = vpop.permute.xlu0 %2685
    %2687 = vrot.lane.b32.xlu0 %v2512, 28
    %v2688 = vpop.permute.xlu0 %2687
    %2689 = vrot.lane.b32.xlu0 %v2513, 28
    %v2690 = vpop.permute.xlu0 %2689
    %2691 = vrot.lane.b32.xlu0 %v2514, 28
    %v2692 = vpop.permute.xlu0 %2691
    %2693 = vrot.lane.b32.xlu0 %v2515, 28
    %v2694 = vpop.permute.xlu0 %2693
    %2695 = vrot.lane.b32.xlu0 %v2516, 28
    %v2696 = vpop.permute.xlu0 %2695
    %2697 = vrot.lane.b32.xlu0 %v2517, 28
    %v2698 = vpop.permute.xlu0 %2697
    %2699 = vrot.lane.b32.xlu0 %v2518, 28
    %v2700 = vpop.permute.xlu0 %2699
    %2701 = vrot.lane.b32.xlu0 %v2519, 28
    %v2702 = vpop.permute.xlu0 %2701
    %2703 = vrot.lane.b32.xlu0 %v2520, 28
    %v2704 = vpop.permute.xlu0 %2703
    %2705 = vrot.lane.b32.xlu0 %v2521, 28
    %v2706 = vpop.permute.xlu0 %2705
    %2707 = vrot.lane.b32.xlu0 %v2522, 28
    %v2708 = vpop.permute.xlu0 %2707
    %2709 = vrot.lane.b32.xlu0 %v2523, 28
    %v2710 = vpop.permute.xlu0 %2709
    %2711 = vrot.lane.b32.xlu0 %v2524, 28
    %v2712 = vpop.permute.xlu0 %2711
    %2713 = vrot.lane.b32.xlu0 %v2525, 28
    %v2714 = vpop.permute.xlu0 %2713
    %2715 = vrot.lane.b32.xlu0 %v2526, 28
    %v2716 = vpop.permute.xlu0 %2715
    %2717 = vrot.lane.b32.xlu0 %v2527, 28
    %v2718 = vpop.permute.xlu0 %2717
    %2719 = vrot.lane.b32.xlu0 %v2528, 28
    %v2720 = vpop.permute.xlu0 %2719
    %vm2785 = vcmask 261344
    %2786 = vst.msk [vmem:[#allocation2] sm:$0xff] %vm2785, %v2594
    %2787 = vst.msk [vmem:[#allocation2 + $0x8] sm:$0xff] %vm2785, %v2596
    %2788 = vst.msk [vmem:[#allocation2 + $0x10] sm:$0xff] %vm2785, %v2598
    %2789 = vst.msk [vmem:[#allocation2 + $0x18] sm:$0xff] %vm2785, %v2600
    %2790 = vst.msk [vmem:[#allocation2 + $0x20] sm:$0xff] %vm2785, %v2602
    %2791 = vst.msk [vmem:[#allocation2 + $0x28] sm:$0xff] %vm2785, %v2604
    %2792 = vst.msk [vmem:[#allocation2 + $0x30] sm:$0xff] %vm2785, %v2606
    %2793 = vst.msk [vmem:[#allocation2 + $0x38] sm:$0xff] %vm2785, %v2608
    %2794 = vst.msk [vmem:[#allocation2 + $0x40] sm:$0xff] %vm2785, %v2610
    %2795 = vst.msk [vmem:[#allocation2 + $0x48] sm:$0xff] %vm2785, %v2612
    %2796 = vst.msk [vmem:[#allocation2 + $0x50] sm:$0xff] %vm2785, %v2614
    %2797 = vst.msk [vmem:[#allocation2 + $0x58] sm:$0xff] %vm2785, %v2616
    %2798 = vst.msk [vmem:[#allocation2 + $0x60] sm:$0xff] %vm2785, %v2618
    %2799 = vst.msk [vmem:[#allocation2 + $0x68] sm:$0xff] %vm2785, %v2620
    %2800 = vst.msk [vmem:[#allocation2 + $0x70] sm:$0xff] %vm2785, %v2622
    %2801 = vst.msk [vmem:[#allocation2 + $0x78] sm:$0xff] %vm2785, %v2624
    %2802 = vst.msk [vmem:[#allocation2 + $0x80] sm:$0xff] %vm2785, %v2626
    %2803 = vst.msk [vmem:[#allocation2 + $0x88] sm:$0xff] %vm2785, %v2628
    %2804 = vst.msk [vmem:[#allocation2 + $0x90] sm:$0xff] %vm2785, %v2630
    %2805 = vst.msk [vmem:[#allocation2 + $0x98] sm:$0xff] %vm2785, %v2632
    %2806 = vst.msk [vmem:[#allocation2 + $0xa0] sm:$0xff] %vm2785, %v2634
    %2807 = vst.msk [vmem:[#allocation2 + $0xa8] sm:$0xff] %vm2785, %v2636
    %2808 = vst.msk [vmem:[#allocation2 + $0xb0] sm:$0xff] %vm2785, %v2638
    %2809 = vst.msk [vmem:[#allocation2 + $0xb8] sm:$0xff] %vm2785, %v2640
    %2810 = vst.msk [vmem:[#allocation2 + $0xc0] sm:$0xff] %vm2785, %v2642
    %2811 = vst.msk [vmem:[#allocation2 + $0xc8] sm:$0xff] %vm2785, %v2644
    %2812 = vst.msk [vmem:[#allocation2 + $0xd0] sm:$0xff] %vm2785, %v2646
    %2813 = vst.msk [vmem:[#allocation2 + $0xd8] sm:$0xff] %vm2785, %v2648
    %2814 = vst.msk [vmem:[#allocation2 + $0xe0] sm:$0xff] %vm2785, %v2650
    %2815 = vst.msk [vmem:[#allocation2 + $0xe8] sm:$0xff] %vm2785, %v2652
    %2816 = vst.msk [vmem:[#allocation2 + $0xf0] sm:$0xff] %vm2785, %v2654
    %2817 = vst.msk [vmem:[#allocation2 + $0xf8] sm:$0xff] %vm2785, %v2656
    %2818 = vst.msk [vmem:[#allocation2 + $0x100] sm:$0xff] %vm2785, %v2658
    %2819 = vst.msk [vmem:[#allocation2 + $0x108] sm:$0xff] %vm2785, %v2660
    %2820 = vst.msk [vmem:[#allocation2 + $0x110] sm:$0xff] %vm2785, %v2662
    %2821 = vst.msk [vmem:[#allocation2 + $0x118] sm:$0xff] %vm2785, %v2664
    %2822 = vst.msk [vmem:[#allocation2 + $0x120] sm:$0xff] %vm2785, %v2666
    %2823 = vst.msk [vmem:[#allocation2 + $0x128] sm:$0xff] %vm2785, %v2668
    %2824 = vst.msk [vmem:[#allocation2 + $0x130] sm:$0xff] %vm2785, %v2670
    %2825 = vst.msk [vmem:[#allocation2 + $0x138] sm:$0xff] %vm2785, %v2672
    %2826 = vst.msk [vmem:[#allocation2 + $0x140] sm:$0xff] %vm2785, %v2674
    %2827 = vst.msk [vmem:[#allocation2 + $0x148] sm:$0xff] %vm2785, %v2676
    %2828 = vst.msk [vmem:[#allocation2 + $0x150] sm:$0xff] %vm2785, %v2678
    %2829 = vst.msk [vmem:[#allocation2 + $0x158] sm:$0xff] %vm2785, %v2680
    %2830 = vst.msk [vmem:[#allocation2 + $0x160] sm:$0xff] %vm2785, %v2682
    %2831 = vst.msk [vmem:[#allocation2 + $0x168] sm:$0xff] %vm2785, %v2684
    %2832 = vst.msk [vmem:[#allocation2 + $0x170] sm:$0xff] %vm2785, %v2686
    %2833 = vst.msk [vmem:[#allocation2 + $0x178] sm:$0xff] %vm2785, %v2688
    %2834 = vst.msk [vmem:[#allocation2 + $0x180] sm:$0xff] %vm2785, %v2690
    %2835 = vst.msk [vmem:[#allocation2 + $0x188] sm:$0xff] %vm2785, %v2692
    %2836 = vst.msk [vmem:[#allocation2 + $0x190] sm:$0xff] %vm2785, %v2694
    %2837 = vst.msk [vmem:[#allocation2 + $0x198] sm:$0xff] %vm2785, %v2696
    %2838 = vst.msk [vmem:[#allocation2 + $0x1a0] sm:$0xff] %vm2785, %v2698
    %2839 = vst.msk [vmem:[#allocation2 + $0x1a8] sm:$0xff] %vm2785, %v2700
    %2840 = vst.msk [vmem:[#allocation2 + $0x1b0] sm:$0xff] %vm2785, %v2702
    %2841 = vst.msk [vmem:[#allocation2 + $0x1b8] sm:$0xff] %vm2785, %v2704
    %2842 = vst.msk [vmem:[#allocation2 + $0x1c0] sm:$0xff] %vm2785, %v2706
    %2843 = vst.msk [vmem:[#allocation2 + $0x1c8] sm:$0xff] %vm2785, %v2708
    %2844 = vst.msk [vmem:[#allocation2 + $0x1d0] sm:$0xff] %vm2785, %v2710
    %2845 = vst.msk [vmem:[#allocation2 + $0x1d8] sm:$0xff] %vm2785, %v2712
    %2846 = vst.msk [vmem:[#allocation2 + $0x1e0] sm:$0xff] %vm2785, %v2714
    %2847 = vst.msk [vmem:[#allocation2 + $0x1e8] sm:$0xff] %vm2785, %v2716
    %2848 = vst.msk [vmem:[#allocation2 + $0x1f0] sm:$0xff] %vm2785, %v2718
    %2849 = vst.msk [vmem:[#allocation2 + $0x1f8] sm:$0xff] %vm2785, %v2720
    %v2850 = vld [vmem:[%s2079 + $0x2] sm:$0xff]
    %v2851 = vld [vmem:[%s2079 + $0xa] sm:$0xff]
    %v2852 = vld [vmem:[%s2079 + $0x1a] sm:$0xff]
    %v2853 = vld [vmem:[%s2079 + $0x22] sm:$0xff]
    %v2854 = vld [vmem:[%s2079 + $0x32] sm:$0xff]
    %v2855 = vld [vmem:[%s2079 + $0x3a] sm:$0xff]
    %v2856 = vld [vmem:[%s2079 + $0x4a] sm:$0xff]
    %v2857 = vld [vmem:[%s2079 + $0x52] sm:$0xff]
    %v2858 = vld [vmem:[%s2079 + $0x62] sm:$0xff]
    %v2859 = vld [vmem:[%s2079 + $0x6a] sm:$0xff]
    %v2860 = vld [vmem:[%s2079 + $0x7a] sm:$0xff]
    %v2861 = vld [vmem:[%s2079 + $0x82] sm:$0xff]
    %v2862 = vld [vmem:[%s2079 + $0x92] sm:$0xff]
    %v2863 = vld [vmem:[%s2079 + $0x9a] sm:$0xff]
    %v2864 = vld [vmem:[%s2079 + $0xaa] sm:$0xff]
    %v2865 = vld [vmem:[%s2079 + $0xb2] sm:$0xff]
    %v2866 = vld [vmem:[%s2079 + $0xc2] sm:$0xff]
    %v2867 = vld [vmem:[%s2079 + $0xca] sm:$0xff]
    %v2868 = vld [vmem:[%s2079 + $0xda] sm:$0xff]
    %v2869 = vld [vmem:[%s2079 + $0xe2] sm:$0xff]
    %v2870 = vld [vmem:[%s2079 + $0xf2] sm:$0xff]
    %v2871 = vld [vmem:[%s2079 + $0xfa] sm:$0xff]
    %v2872 = vld [vmem:[%s2079 + $0x10a] sm:$0xff]
    %v2873 = vld [vmem:[%s2079 + $0x112] sm:$0xff]
    %v2874 = vld [vmem:[%s2079 + $0x122] sm:$0xff]
    %v2875 = vld [vmem:[%s2079 + $0x12a] sm:$0xff]
    %v2876 = vld [vmem:[%s2079 + $0x13a] sm:$0xff]
    %v2877 = vld [vmem:[%s2079 + $0x142] sm:$0xff]
    %v2878 = vld [vmem:[%s2079 + $0x152] sm:$0xff]
    %v2879 = vld [vmem:[%s2079 + $0x15a] sm:$0xff]
    %v2880 = vld [vmem:[%s2079 + $0x16a] sm:$0xff]
    %v2881 = vld [vmem:[%s2079 + $0x172] sm:$0xff]
    %v2882 = vld [vmem:[%s2079 + $0x1b2] sm:$0xff]
    %v2883 = vld [vmem:[%s2079 + $0x1ba] sm:$0xff]
    %v2884 = vld [vmem:[%s2079 + $0x1ca] sm:$0xff]
    %v2885 = vld [vmem:[%s2079 + $0x1d2] sm:$0xff]
    %v2886 = vld [vmem:[%s2079 + $0x1e2] sm:$0xff]
    %v2887 = vld [vmem:[%s2079 + $0x1ea] sm:$0xff]
    %v2888 = vld [vmem:[%s2079 + $0x1fa] sm:$0xff]
    %v2889 = vld [vmem:[%s2079 + $0x202] sm:$0xff]
    %v2890 = vld [vmem:[%s2079 + $0x212] sm:$0xff]
    %v2891 = vld [vmem:[%s2079 + $0x21a] sm:$0xff]
    %v2892 = vld [vmem:[%s2079 + $0x22a] sm:$0xff]
    %v2893 = vld [vmem:[%s2079 + $0x232] sm:$0xff]
    %v2894 = vld [vmem:[%s2079 + $0x242] sm:$0xff]
    %v2895 = vld [vmem:[%s2079 + $0x24a] sm:$0xff]
    %v2896 = vld [vmem:[%s2079 + $0x25a] sm:$0xff]
    %v2897 = vld [vmem:[%s2079 + $0x262] sm:$0xff]
    %v2898 = vld [vmem:[%s2079 + $0x272] sm:$0xff]
    %v2899 = vld [vmem:[%s2079 + $0x27a] sm:$0xff]
    %v2900 = vld [vmem:[%s2079 + $0x28a] sm:$0xff]
    %v2901 = vld [vmem:[%s2079 + $0x292] sm:$0xff]
    %v2902 = vld [vmem:[%s2079 + $0x2a2] sm:$0xff]
    %v2903 = vld [vmem:[%s2079 + $0x2aa] sm:$0xff]
    %v2904 = vld [vmem:[%s2079 + $0x2ba] sm:$0xff]
    %v2905 = vld [vmem:[%s2079 + $0x2c2] sm:$0xff]
    %v2906 = vld [vmem:[%s2079 + $0x2d2] sm:$0xff]
    %v2907 = vld [vmem:[%s2079 + $0x2da] sm:$0xff]
    %v2908 = vld [vmem:[%s2079 + $0x2ea] sm:$0xff]
    %v2909 = vld [vmem:[%s2079 + $0x2f2] sm:$0xff]
    %v2910 = vld [vmem:[%s2079 + $0x302] sm:$0xff]
    %v2911 = vld [vmem:[%s2079 + $0x30a] sm:$0xff]
    %v2912 = vld [vmem:[%s2079 + $0x31a] sm:$0xff]
    %v2913 = vld [vmem:[%s2079 + $0x322] sm:$0xff]
    %2978 = vrot.lane.b32.xlu0 %v2850, 32
    %v2979 = vpop.permute.xlu0 %2978
    %2980 = vrot.lane.b32.xlu0 %v2851, 32
    %v2981 = vpop.permute.xlu0 %2980
    %2982 = vrot.lane.b32.xlu0 %v2852, 32
    %v2983 = vpop.permute.xlu0 %2982
    %2984 = vrot.lane.b32.xlu0 %v2853, 32
    %v2985 = vpop.permute.xlu0 %2984
    %2986 = vrot.lane.b32.xlu0 %v2854, 32
    %v2987 = vpop.permute.xlu0 %2986
    %2988 = vrot.lane.b32.xlu0 %v2855, 32
    %v2989 = vpop.permute.xlu0 %2988
    %2990 = vrot.lane.b32.xlu0 %v2856, 32
    %v2991 = vpop.permute.xlu0 %2990
    %2992 = vrot.lane.b32.xlu0 %v2857, 32
    %v2993 = vpop.permute.xlu0 %2992
    %2994 = vrot.lane.b32.xlu0 %v2858, 32
    %v2995 = vpop.permute.xlu0 %2994
    %2996 = vrot.lane.b32.xlu0 %v2859, 32
    %v2997 = vpop.permute.xlu0 %2996
    %2998 = vrot.lane.b32.xlu0 %v2860, 32
    %v2999 = vpop.permute.xlu0 %2998
    %3000 = vrot.lane.b32.xlu0 %v2861, 32
    %v3001 = vpop.permute.xlu0 %3000
    %3002 = vrot.lane.b32.xlu0 %v2862, 32
    %v3003 = vpop.permute.xlu0 %3002
    %3004 = vrot.lane.b32.xlu0 %v2863, 32
    %v3005 = vpop.permute.xlu0 %3004
    %3006 = vrot.lane.b32.xlu0 %v2864, 32
    %v3007 = vpop.permute.xlu0 %3006
    %3008 = vrot.lane.b32.xlu0 %v2865, 32
    %v3009 = vpop.permute.xlu0 %3008
    %3010 = vrot.lane.b32.xlu0 %v2866, 32
    %v3011 = vpop.permute.xlu0 %3010
    %3012 = vrot.lane.b32.xlu0 %v2867, 32
    %v3013 = vpop.permute.xlu0 %3012
    %3014 = vrot.lane.b32.xlu0 %v2868, 32
    %v3015 = vpop.permute.xlu0 %3014
    %3016 = vrot.lane.b32.xlu0 %v2869, 32
    %v3017 = vpop.permute.xlu0 %3016
    %3018 = vrot.lane.b32.xlu0 %v2870, 32
    %v3019 = vpop.permute.xlu0 %3018
    %3020 = vrot.lane.b32.xlu0 %v2871, 32
    %v3021 = vpop.permute.xlu0 %3020
    %3022 = vrot.lane.b32.xlu0 %v2872, 32
    %v3023 = vpop.permute.xlu0 %3022
    %3024 = vrot.lane.b32.xlu0 %v2873, 32
    %v3025 = vpop.permute.xlu0 %3024
    %3026 = vrot.lane.b32.xlu0 %v2874, 32
    %v3027 = vpop.permute.xlu0 %3026
    %3028 = vrot.lane.b32.xlu0 %v2875, 32
    %v3029 = vpop.permute.xlu0 %3028
    %3030 = vrot.lane.b32.xlu0 %v2876, 32
    %v3031 = vpop.permute.xlu0 %3030
    %3032 = vrot.lane.b32.xlu0 %v2877, 32
    %v3033 = vpop.permute.xlu0 %3032
    %3034 = vrot.lane.b32.xlu0 %v2878, 32
    %v3035 = vpop.permute.xlu0 %3034
    %3036 = vrot.lane.b32.xlu0 %v2879, 32
    %v3037 = vpop.permute.xlu0 %3036
    %3038 = vrot.lane.b32.xlu0 %v2880, 32
    %v3039 = vpop.permute.xlu0 %3038
    %3040 = vrot.lane.b32.xlu0 %v2881, 32
    %v3041 = vpop.permute.xlu0 %3040
    %3042 = vrot.lane.b32.xlu0 %v2882, 32
    %v3043 = vpop.permute.xlu0 %3042
    %3044 = vrot.lane.b32.xlu0 %v2883, 32
    %v3045 = vpop.permute.xlu0 %3044
    %3046 = vrot.lane.b32.xlu0 %v2884, 32
    %v3047 = vpop.permute.xlu0 %3046
    %3048 = vrot.lane.b32.xlu0 %v2885, 32
    %v3049 = vpop.permute.xlu0 %3048
    %3050 = vrot.lane.b32.xlu0 %v2886, 32
    %v3051 = vpop.permute.xlu0 %3050
    %3052 = vrot.lane.b32.xlu0 %v2887, 32
    %v3053 = vpop.permute.xlu0 %3052
    %3054 = vrot.lane.b32.xlu0 %v2888, 32
    %v3055 = vpop.permute.xlu0 %3054
    %3056 = vrot.lane.b32.xlu0 %v2889, 32
    %v3057 = vpop.permute.xlu0 %3056
    %3058 = vrot.lane.b32.xlu0 %v2890, 32
    %v3059 = vpop.permute.xlu0 %3058
    %3060 = vrot.lane.b32.xlu0 %v2891, 32
    %v3061 = vpop.permute.xlu0 %3060
    %3062 = vrot.lane.b32.xlu0 %v2892, 32
    %v3063 = vpop.permute.xlu0 %3062
    %3064 = vrot.lane.b32.xlu0 %v2893, 32
    %v3065 = vpop.permute.xlu0 %3064
    %3066 = vrot.lane.b32.xlu0 %v2894, 32
    %v3067 = vpop.permute.xlu0 %3066
    %3068 = vrot.lane.b32.xlu0 %v2895, 32
    %v3069 = vpop.permute.xlu0 %3068
    %3070 = vrot.lane.b32.xlu0 %v2896, 32
    %v3071 = vpop.permute.xlu0 %3070
    %3072 = vrot.lane.b32.xlu0 %v2897, 32
    %v3073 = vpop.permute.xlu0 %3072
    %3074 = vrot.lane.b32.xlu0 %v2898, 32
    %v3075 = vpop.permute.xlu0 %3074
    %3076 = vrot.lane.b32.xlu0 %v2899, 32
    %v3077 = vpop.permute.xlu0 %3076
    %3078 = vrot.lane.b32.xlu0 %v2900, 32
    %v3079 = vpop.permute.xlu0 %3078
    %3080 = vrot.lane.b32.xlu0 %v2901, 32
    %v3081 = vpop.permute.xlu0 %3080
    %3082 = vrot.lane.b32.xlu0 %v2902, 32
    %v3083 = vpop.permute.xlu0 %3082
    %3084 = vrot.lane.b32.xlu0 %v2903, 32
    %v3085 = vpop.permute.xlu0 %3084
    %3086 = vrot.lane.b32.xlu0 %v2904, 32
    %v3087 = vpop.permute.xlu0 %3086
    %3088 = vrot.lane.b32.xlu0 %v2905, 32
    %v3089 = vpop.permute.xlu0 %3088
    %3090 = vrot.lane.b32.xlu0 %v2906, 32
    %v3091 = vpop.permute.xlu0 %3090
    %3092 = vrot.lane.b32.xlu0 %v2907, 32
    %v3093 = vpop.permute.xlu0 %3092
    %3094 = vrot.lane.b32.xlu0 %v2908, 32
    %v3095 = vpop.permute.xlu0 %3094
    %3096 = vrot.lane.b32.xlu0 %v2909, 32
    %v3097 = vpop.permute.xlu0 %3096
    %3098 = vrot.lane.b32.xlu0 %v2910, 32
    %v3099 = vpop.permute.xlu0 %3098
    %3100 = vrot.lane.b32.xlu0 %v2911, 32
    %v3101 = vpop.permute.xlu0 %3100
    %3102 = vrot.lane.b32.xlu0 %v2912, 32
    %v3103 = vpop.permute.xlu0 %3102
    %3104 = vrot.lane.b32.xlu0 %v2913, 32
    %v3105 = vpop.permute.xlu0 %3104
    %vm3170 = vcmask 294144
    %3171 = vst.msk [vmem:[#allocation2] sm:$0xff] %vm3170, %v2979
    %3172 = vst.msk [vmem:[#allocation2 + $0x8] sm:$0xff] %vm3170, %v2981
    %3173 = vst.msk [vmem:[#allocation2 + $0x10] sm:$0xff] %vm3170, %v2983
    %3174 = vst.msk [vmem:[#allocation2 + $0x18] sm:$0xff] %vm3170, %v2985
    %3175 = vst.msk [vmem:[#allocation2 + $0x20] sm:$0xff] %vm3170, %v2987
    %3176 = vst.msk [vmem:[#allocation2 + $0x28] sm:$0xff] %vm3170, %v2989
    %3177 = vst.msk [vmem:[#allocation2 + $0x30] sm:$0xff] %vm3170, %v2991
    %3178 = vst.msk [vmem:[#allocation2 + $0x38] sm:$0xff] %vm3170, %v2993
    %3179 = vst.msk [vmem:[#allocation2 + $0x40] sm:$0xff] %vm3170, %v2995
    %3180 = vst.msk [vmem:[#allocation2 + $0x48] sm:$0xff] %vm3170, %v2997
    %3181 = vst.msk [vmem:[#allocation2 + $0x50] sm:$0xff] %vm3170, %v2999
    %3182 = vst.msk [vmem:[#allocation2 + $0x58] sm:$0xff] %vm3170, %v3001
    %3183 = vst.msk [vmem:[#allocation2 + $0x60] sm:$0xff] %vm3170, %v3003
    %3184 = vst.msk [vmem:[#allocation2 + $0x68] sm:$0xff] %vm3170, %v3005
    %3185 = vst.msk [vmem:[#allocation2 + $0x70] sm:$0xff] %vm3170, %v3007
    %3186 = vst.msk [vmem:[#allocation2 + $0x78] sm:$0xff] %vm3170, %v3009
    %3187 = vst.msk [vmem:[#allocation2 + $0x80] sm:$0xff] %vm3170, %v3011
    %3188 = vst.msk [vmem:[#allocation2 + $0x88] sm:$0xff] %vm3170, %v3013
    %3189 = vst.msk [vmem:[#allocation2 + $0x90] sm:$0xff] %vm3170, %v3015
    %3190 = vst.msk [vmem:[#allocation2 + $0x98] sm:$0xff] %vm3170, %v3017
    %3191 = vst.msk [vmem:[#allocation2 + $0xa0] sm:$0xff] %vm3170, %v3019
    %3192 = vst.msk [vmem:[#allocation2 + $0xa8] sm:$0xff] %vm3170, %v3021
    %3193 = vst.msk [vmem:[#allocation2 + $0xb0] sm:$0xff] %vm3170, %v3023
    %3194 = vst.msk [vmem:[#allocation2 + $0xb8] sm:$0xff] %vm3170, %v3025
    %3195 = vst.msk [vmem:[#allocation2 + $0xc0] sm:$0xff] %vm3170, %v3027
    %3196 = vst.msk [vmem:[#allocation2 + $0xc8] sm:$0xff] %vm3170, %v3029
    %3197 = vst.msk [vmem:[#allocation2 + $0xd0] sm:$0xff] %vm3170, %v3031
    %3198 = vst.msk [vmem:[#allocation2 + $0xd8] sm:$0xff] %vm3170, %v3033
    %3199 = vst.msk [vmem:[#allocation2 + $0xe0] sm:$0xff] %vm3170, %v3035
    %3200 = vst.msk [vmem:[#allocation2 + $0xe8] sm:$0xff] %vm3170, %v3037
    %3201 = vst.msk [vmem:[#allocation2 + $0xf0] sm:$0xff] %vm3170, %v3039
    %3202 = vst.msk [vmem:[#allocation2 + $0xf8] sm:$0xff] %vm3170, %v3041
    %3203 = vst.msk [vmem:[#allocation2 + $0x100] sm:$0xff] %vm3170, %v3043
    %3204 = vst.msk [vmem:[#allocation2 + $0x108] sm:$0xff] %vm3170, %v3045
    %3205 = vst.msk [vmem:[#allocation2 + $0x110] sm:$0xff] %vm3170, %v3047
    %3206 = vst.msk [vmem:[#allocation2 + $0x118] sm:$0xff] %vm3170, %v3049
    %3207 = vst.msk [vmem:[#allocation2 + $0x120] sm:$0xff] %vm3170, %v3051
    %3208 = vst.msk [vmem:[#allocation2 + $0x128] sm:$0xff] %vm3170, %v3053
    %3209 = vst.msk [vmem:[#allocation2 + $0x130] sm:$0xff] %vm3170, %v3055
    %3210 = vst.msk [vmem:[#allocation2 + $0x138] sm:$0xff] %vm3170, %v3057
    %3211 = vst.msk [vmem:[#allocation2 + $0x140] sm:$0xff] %vm3170, %v3059
    %3212 = vst.msk [vmem:[#allocation2 + $0x148] sm:$0xff] %vm3170, %v3061
    %3213 = vst.msk [vmem:[#allocation2 + $0x150] sm:$0xff] %vm3170, %v3063
    %3214 = vst.msk [vmem:[#allocation2 + $0x158] sm:$0xff] %vm3170, %v3065
    %3215 = vst.msk [vmem:[#allocation2 + $0x160] sm:$0xff] %vm3170, %v3067
    %3216 = vst.msk [vmem:[#allocation2 + $0x168] sm:$0xff] %vm3170, %v3069
    %3217 = vst.msk [vmem:[#allocation2 + $0x170] sm:$0xff] %vm3170, %v3071
    %3218 = vst.msk [vmem:[#allocation2 + $0x178] sm:$0xff] %vm3170, %v3073
    %3219 = vst.msk [vmem:[#allocation2 + $0x180] sm:$0xff] %vm3170, %v3075
    %3220 = vst.msk [vmem:[#allocation2 + $0x188] sm:$0xff] %vm3170, %v3077
    %3221 = vst.msk [vmem:[#allocation2 + $0x190] sm:$0xff] %vm3170, %v3079
    %3222 = vst.msk [vmem:[#allocation2 + $0x198] sm:$0xff] %vm3170, %v3081
    %3223 = vst.msk [vmem:[#allocation2 + $0x1a0] sm:$0xff] %vm3170, %v3083
    %3224 = vst.msk [vmem:[#allocation2 + $0x1a8] sm:$0xff] %vm3170, %v3085
    %3225 = vst.msk [vmem:[#allocation2 + $0x1b0] sm:$0xff] %vm3170, %v3087
    %3226 = vst.msk [vmem:[#allocation2 + $0x1b8] sm:$0xff] %vm3170, %v3089
    %3227 = vst.msk [vmem:[#allocation2 + $0x1c0] sm:$0xff] %vm3170, %v3091
    %3228 = vst.msk [vmem:[#allocation2 + $0x1c8] sm:$0xff] %vm3170, %v3093
    %3229 = vst.msk [vmem:[#allocation2 + $0x1d0] sm:$0xff] %vm3170, %v3095
    %3230 = vst.msk [vmem:[#allocation2 + $0x1d8] sm:$0xff] %vm3170, %v3097
    %3231 = vst.msk [vmem:[#allocation2 + $0x1e0] sm:$0xff] %vm3170, %v3099
    %3232 = vst.msk [vmem:[#allocation2 + $0x1e8] sm:$0xff] %vm3170, %v3101
    %3233 = vst.msk [vmem:[#allocation2 + $0x1f0] sm:$0xff] %vm3170, %v3103
    %3234 = vst.msk [vmem:[#allocation2 + $0x1f8] sm:$0xff] %vm3170, %v3105
    %v3235 = vld [vmem:[%s1] sm:$0xff]
    %v3236 = vld [vmem:[#allocation2] sm:$0xff]
    %v3237 = vld [vmem:[#allocation2 + $0x8] sm:$0xff]
    %v3238 = vld [vmem:[#allocation2 + $0x10] sm:$0xff]
    %v3239 = vld [vmem:[#allocation2 + $0x18] sm:$0xff]
    %v3240 = vld [vmem:[#allocation2 + $0x20] sm:$0xff]
    %v3241 = vld [vmem:[#allocation2 + $0x28] sm:$0xff]
    %v3242 = vld [vmem:[#allocation2 + $0x30] sm:$0xff]
    %v3243 = vld [vmem:[#allocation2 + $0x38] sm:$0xff]
    %v3244 = vld [vmem:[#allocation2 + $0x40] sm:$0xff]
    %v3245 = vld [vmem:[#allocation2 + $0x48] sm:$0xff]
    %v3246 = vld [vmem:[#allocation2 + $0x50] sm:$0xff]
    %v3247 = vld [vmem:[#allocation2 + $0x58] sm:$0xff]
    %v3248 = vld [vmem:[#allocation2 + $0x60] sm:$0xff]
    %v3249 = vld [vmem:[#allocation2 + $0x68] sm:$0xff]
    %v3250 = vld [vmem:[#allocation2 + $0x70] sm:$0xff]
    %v3251 = vld [vmem:[#allocation2 + $0x78] sm:$0xff]
    %v3252 = vld [vmem:[#allocation2 + $0x80] sm:$0xff]
    %v3253 = vld [vmem:[#allocation2 + $0x88] sm:$0xff]
    %v3254 = vld [vmem:[#allocation2 + $0x90] sm:$0xff]
    %v3255 = vld [vmem:[#allocation2 + $0x98] sm:$0xff]
    %v3256 = vld [vmem:[#allocation2 + $0xa0] sm:$0xff]
    %v3257 = vld [vmem:[#allocation2 + $0xa8] sm:$0xff]
    %v3258 = vld [vmem:[#allocation2 + $0xb0] sm:$0xff]
    %v3259 = vld [vmem:[#allocation2 + $0xb8] sm:$0xff]
    %v3260 = vld [vmem:[#allocation2 + $0xc0] sm:$0xff]
    %v3261 = vld [vmem:[#allocation2 + $0xc8] sm:$0xff]
    %v3262 = vld [vmem:[#allocation2 + $0xd0] sm:$0xff]
    %v3263 = vld [vmem:[#allocation2 + $0xd8] sm:$0xff]
    %v3264 = vld [vmem:[#allocation2 + $0xe0] sm:$0xff]
    %v3265 = vld [vmem:[#allocation2 + $0xe8] sm:$0xff]
    %v3266 = vld [vmem:[#allocation2 + $0xf0] sm:$0xff]
    %v3267 = vld [vmem:[#allocation2 + $0xf8] sm:$0xff]
    %v3268 = vld [vmem:[#allocation2 + $0x100] sm:$0xff]
    %v3269 = vld [vmem:[#allocation2 + $0x108] sm:$0xff]
    %v3270 = vld [vmem:[#allocation2 + $0x110] sm:$0xff]
    %v3271 = vld [vmem:[#allocation2 + $0x118] sm:$0xff]
    %v3272 = vld [vmem:[#allocation2 + $0x120] sm:$0xff]
    %v3273 = vld [vmem:[#allocation2 + $0x128] sm:$0xff]
    %v3274 = vld [vmem:[#allocation2 + $0x130] sm:$0xff]
    %v3275 = vld [vmem:[#allocation2 + $0x138] sm:$0xff]
    %v3276 = vld [vmem:[#allocation2 + $0x140] sm:$0xff]
    %v3277 = vld [vmem:[#allocation2 + $0x148] sm:$0xff]
    %v3278 = vld [vmem:[#allocation2 + $0x150] sm:$0xff]
    %v3279 = vld [vmem:[#allocation2 + $0x158] sm:$0xff]
    %v3280 = vld [vmem:[#allocation2 + $0x160] sm:$0xff]
    %v3281 = vld [vmem:[#allocation2 + $0x168] sm:$0xff]
    %v3282 = vld [vmem:[#allocation2 + $0x170] sm:$0xff]
    %v3283 = vld [vmem:[#allocation2 + $0x178] sm:$0xff]
    %v3284 = vld [vmem:[#allocation2 + $0x180] sm:$0xff]
    %v3285 = vld [vmem:[#allocation2 + $0x188] sm:$0xff]
    %v3286 = vld [vmem:[#allocation2 + $0x190] sm:$0xff]
    %v3287 = vld [vmem:[#allocation2 + $0x198] sm:$0xff]
    %v3288 = vld [vmem:[#allocation2 + $0x1a0] sm:$0xff]
    %v3289 = vld [vmem:[#allocation2 + $0x1a8] sm:$0xff]
    %v3290 = vld [vmem:[#allocation2 + $0x1b0] sm:$0xff]
    %v3291 = vld [vmem:[#allocation2 + $0x1b8] sm:$0xff]
    %v3292 = vld [vmem:[#allocation2 + $0x1c0] sm:$0xff]
    %v3293 = vld [vmem:[#allocation2 + $0x1c8] sm:$0xff]
    %v3294 = vld [vmem:[#allocation2 + $0x1d0] sm:$0xff]
    %v3295 = vld [vmem:[#allocation2 + $0x1d8] sm:$0xff]
    %v3296 = vld [vmem:[#allocation2 + $0x1e0] sm:$0xff]
    %v3297 = vld [vmem:[#allocation2 + $0x1e8] sm:$0xff]
    %v3298 = vld [vmem:[#allocation2 + $0x1f0] sm:$0xff]
    %v3299 = vld [vmem:[#allocation2 + $0x1f8] sm:$0xff]
    %v3300 = vld [vmem:[%s2] sm:$0xff]
    %3302 = vset.pattern.permute.xlu0 0
    %3303 = vperm.xlu0 %3302, %v3300
    %v3304 = vpop.permute.xlu0 %3303
    %vm3306 = vcmask 293888
    %v3308 = vsel %vm3306, %v3235, 0
    %v3311 = vsel %vm3306, %v3236, 0
    %v3314 = vsel %vm3306, %v3237, 0
    %v3317 = vsel %vm3306, %v3238, 0
    %v3320 = vsel %vm3306, %v3239, 0
    %v3323 = vsel %vm3306, %v3240, 0
    %v3326 = vsel %vm3306, %v3241, 0
    %v3329 = vsel %vm3306, %v3242, 0
    %v3332 = vsel %vm3306, %v3243, 0
    %v3335 = vsel %vm3306, %v3244, 0
    %v3338 = vsel %vm3306, %v3245, 0
    %v3341 = vsel %vm3306, %v3246, 0
    %v3344 = vsel %vm3306, %v3247, 0
    %v3347 = vsel %vm3306, %v3248, 0
    %v3350 = vsel %vm3306, %v3249, 0
    %v3353 = vsel %vm3306, %v3250, 0
    %v3356 = vsel %vm3306, %v3251, 0
    %v3359 = vsel %vm3306, %v3252, 0
    %v3362 = vsel %vm3306, %v3253, 0
    %v3365 = vsel %vm3306, %v3254, 0
    %v3368 = vsel %vm3306, %v3255, 0
    %v3371 = vsel %vm3306, %v3256, 0
    %v3374 = vsel %vm3306, %v3257, 0
    %v3377 = vsel %vm3306, %v3258, 0
    %v3380 = vsel %vm3306, %v3259, 0
    %v3383 = vsel %vm3306, %v3260, 0
    %v3386 = vsel %vm3306, %v3261, 0
    %v3389 = vsel %vm3306, %v3262, 0
    %v3392 = vsel %vm3306, %v3263, 0
    %v3395 = vsel %vm3306, %v3264, 0
    %v3398 = vsel %vm3306, %v3265, 0
    %v3401 = vsel %vm3306, %v3266, 0
    %v3404 = vsel %vm3306, %v3267, 0
    %v3407 = vsel %vm3306, %v3268, 0
    %v3410 = vsel %vm3306, %v3269, 0
    %v3413 = vsel %vm3306, %v3270, 0
    %v3416 = vsel %vm3306, %v3271, 0
    %v3419 = vsel %vm3306, %v3272, 0
    %v3422 = vsel %vm3306, %v3273, 0
    %v3425 = vsel %vm3306, %v3274, 0
    %v3428 = vsel %vm3306, %v3275, 0
    %v3431 = vsel %vm3306, %v3276, 0
    %v3434 = vsel %vm3306, %v3277, 0
    %v3437 = vsel %vm3306, %v3278, 0
    %v3440 = vsel %vm3306, %v3279, 0
    %v3443 = vsel %vm3306, %v3280, 0
    %v3446 = vsel %vm3306, %v3281, 0
    %v3449 = vsel %vm3306, %v3282, 0
    %v3452 = vsel %vm3306, %v3283, 0
    %v3455 = vsel %vm3306, %v3284, 0
    %v3458 = vsel %vm3306, %v3285, 0
    %v3461 = vsel %vm3306, %v3286, 0
    %v3464 = vsel %vm3306, %v3287, 0
    %v3467 = vsel %vm3306, %v3288, 0
    %v3470 = vsel %vm3306, %v3289, 0
    %v3473 = vsel %vm3306, %v3290, 0
    %v3476 = vsel %vm3306, %v3291, 0
    %v3479 = vsel %vm3306, %v3292, 0
    %v3482 = vsel %vm3306, %v3293, 0
    %v3485 = vsel %vm3306, %v3294, 0
    %v3488 = vsel %vm3306, %v3295, 0
    %v3491 = vsel %vm3306, %v3296, 0
    %v3494 = vsel %vm3306, %v3297, 0
    %v3497 = vsel %vm3306, %v3298, 0
    %v3500 = vsel %vm3306, %v3299, 0
    %3502 = vmatprep.subr.mxu0 0.0
    %v3503 = vand.u32 %v3356, 4294901760
    %3504 = vmatpush1.xpose.msra.mxu0 %v3503
    %3505 = vmatprep.subr.mxu0 0.0
    %v3506 = vand.u32 %v3353, 4294901760
    %3507 = vmatpush1.xpose.msra.mxu0 %v3506
    %3508 = vmatprep.subr.mxu0 0.0
    %v3509 = vand.u32 %v3350, 4294901760
    %3510 = vmatpush1.xpose.msra.mxu0 %v3509
    %3511 = vmatprep.subr.mxu0 0.0
    %v3512 = vand.u32 %v3347, 4294901760
    %3513 = vmatpush1.xpose.msra.mxu0 %v3512
    %3514 = vmatprep.subr.mxu0 0.0
    %v3515 = vand.u32 %v3344, 4294901760
    %3516 = vmatpush1.xpose.msra.mxu0 %v3515
    %3517 = vmatprep.subr.mxu0 0.0
    %v3518 = vand.u32 %v3341, 4294901760
    %3519 = vmatpush1.xpose.msra.mxu0 %v3518
    %3520 = vmatprep.subr.mxu0 0.0
    %v3521 = vand.u32 %v3338, 4294901760
    %3522 = vmatpush1.xpose.msra.mxu0 %v3521
    %3523 = vmatprep.subr.mxu0 0.0
    %v3524 = vand.u32 %v3335, 4294901760
    %3525 = vmatpush1.xpose.msra.mxu0 %v3524
    %3526 = vmatprep.subr.mxu0 0.0
    %v3527 = vand.u32 %v3332, 4294901760
    %3528 = vmatpush1.xpose.msra.mxu0 %v3527
    %3529 = vmatprep.subr.mxu0 0.0
    %v3530 = vand.u32 %v3329, 4294901760
    %3531 = vmatpush1.xpose.msra.mxu0 %v3530
    %3532 = vmatprep.subr.mxu0 0.0
    %v3533 = vand.u32 %v3326, 4294901760
    %3534 = vmatpush1.xpose.msra.mxu0 %v3533
    %3535 = vmatprep.subr.mxu0 0.0
    %v3536 = vand.u32 %v3323, 4294901760
    %3537 = vmatpush1.xpose.msra.mxu0 %v3536
    %3538 = vmatprep.subr.mxu0 0.0
    %v3539 = vand.u32 %v3320, 4294901760
    %3540 = vmatpush1.xpose.msra.mxu0 %v3539
    %3541 = vmatprep.subr.mxu0 0.0
    %v3542 = vand.u32 %v3317, 4294901760
    %3543 = vmatpush1.xpose.msra.mxu0 %v3542
    %3544 = vmatprep.subr.mxu0 0.0
    %v3545 = vand.u32 %v3314, 4294901760
    %3546 = vmatpush1.xpose.msra.mxu0 %v3545
    %3547 = vmatprep.subr.mxu0 0.0
    %v3548 = vand.u32 %v3311, 4294901760
    %3549 = vmatpush1.xpose.msra.mxu0 %v3548
    %3550 = vmatprep.subr.mxu0 0.0
    %v3551 = vand.u32 %v3404, 4294901760
    %3552 = vmatpush2.xpose.msra.mxu0 %v3551
    %3553 = vmatprep.subr.mxu0 0.0
    %v3554 = vand.u32 %v3401, 4294901760
    %3555 = vmatpush2.xpose.msra.mxu0 %v3554
    %3556 = vmatprep.subr.mxu0 0.0
    %v3557 = vand.u32 %v3398, 4294901760
    %3558 = vmatpush2.xpose.msra.mxu0 %v3557
    %3559 = vmatprep.subr.mxu0 0.0
    %v3560 = vand.u32 %v3395, 4294901760
    %3561 = vmatpush2.xpose.msra.mxu0 %v3560
    %3562 = vmatprep.subr.mxu0 0.0
    %v3563 = vand.u32 %v3392, 4294901760
    %3564 = vmatpush2.xpose.msra.mxu0 %v3563
    %3565 = vmatprep.subr.mxu0 0.0
    %v3566 = vand.u32 %v3389, 4294901760
    %3567 = vmatpush2.xpose.msra.mxu0 %v3566
    %3568 = vmatprep.subr.mxu0 0.0
    %v3569 = vand.u32 %v3386, 4294901760
    %3570 = vmatpush2.xpose.msra.mxu0 %v3569
    %3571 = vmatprep.subr.mxu0 0.0
    %v3572 = vand.u32 %v3383, 4294901760
    %3573 = vmatpush2.xpose.msra.mxu0 %v3572
    %3574 = vmatprep.subr.mxu0 0.0
    %v3575 = vand.u32 %v3380, 4294901760
    %3576 = vmatpush2.xpose.msra.mxu0 %v3575
    %3577 = vmatprep.subr.mxu0 0.0
    %v3578 = vand.u32 %v3377, 4294901760
    %3579 = vmatpush2.xpose.msra.mxu0 %v3578
    %3580 = vmatprep.subr.mxu0 0.0
    %v3581 = vand.u32 %v3374, 4294901760
    %3582 = vmatpush2.xpose.msra.mxu0 %v3581
    %3583 = vmatprep.subr.mxu0 0.0
    %v3584 = vand.u32 %v3371, 4294901760
    %3585 = vmatpush2.xpose.msra.mxu0 %v3584
    %3586 = vmatprep.subr.mxu0 0.0
    %v3587 = vand.u32 %v3368, 4294901760
    %3588 = vmatpush2.xpose.msra.mxu0 %v3587
    %3589 = vmatprep.subr.mxu0 0.0
    %v3590 = vand.u32 %v3365, 4294901760
    %3591 = vmatpush2.xpose.msra.mxu0 %v3590
    %3592 = vmatprep.subr.mxu0 0.0
    %v3593 = vand.u32 %v3362, 4294901760
    %3594 = vmatpush2.xpose.msra.mxu0 %v3593
    %3595 = vmatprep.subr.mxu0 0.0
    %v3596 = vand.u32 %v3359, 4294901760
    %3597 = vmatpush2.xpose.msra.mxu0 %v3596
    %3598 = vmatprep.mubr.f32.mxu0 0.0
    %v3599 = vand.u32 %v3308, 4294901760
    %v3600 = vsub.f32 %v3308, %v3599
    %v3601 = vand.u32 %v3600, 4294901760
    %v3602 = vsub.f32 %v3600, %v3601
    %v3603 = vand.u32 %v3602, 4294901760
    %3604 = vmatmul.mubr.f32.gmra.mxu0 %v3603
    %v3605 = vpop.f32.mrf.mxu0
    %v3606 = vadd.f32 %v3304, %v3605
    %v3607 = vpop.f32.mrf.mxu0
    %v3608 = vadd.f32 %v3304, %v3607
    %3609 = vdwg.mxu0
    %3610 = vmatprep.subr.mxu0 0.0
    %v3611 = vand.u32 %v3356, 4294901760
    %v3612 = vsub.f32 %v3356, %v3611
    %v3613 = vand.u32 %v3612, 4294901760
    %v3614 = vsub.f32 %v3612, %v3613
    %v3615 = vand.u32 %v3614, 4294901760
    %3616 = vmatpush1.xpose.msra.mxu0 %v3615
    %3617 = vmatprep.subr.mxu0 0.0
    %v3618 = vand.u32 %v3353, 4294901760
    %v3619 = vsub.f32 %v3353, %v3618
    %v3620 = vand.u32 %v3619, 4294901760
    %v3621 = vsub.f32 %v3619, %v3620
    %v3622 = vand.u32 %v3621, 4294901760
    %3623 = vmatpush1.xpose.msra.mxu0 %v3622
    %3624 = vmatprep.subr.mxu0 0.0
    %v3625 = vand.u32 %v3350, 4294901760
    %v3626 = vsub.f32 %v3350, %v3625
    %v3627 = vand.u32 %v3626, 4294901760
    %v3628 = vsub.f32 %v3626, %v3627
    %v3629 = vand.u32 %v3628, 4294901760
    %3630 = vmatpush1.xpose.msra.mxu0 %v3629
    %3631 = vmatprep.subr.mxu0 0.0
    %v3632 = vand.u32 %v3347, 4294901760
    %v3633 = vsub.f32 %v3347, %v3632
    %v3634 = vand.u32 %v3633, 4294901760
    %v3635 = vsub.f32 %v3633, %v3634
    %v3636 = vand.u32 %v3635, 4294901760
    %3637 = vmatpush1.xpose.msra.mxu0 %v3636
    %3638 = vmatprep.subr.mxu0 0.0
    %v3639 = vand.u32 %v3344, 4294901760
    %v3640 = vsub.f32 %v3344, %v3639
    %v3641 = vand.u32 %v3640, 4294901760
    %v3642 = vsub.f32 %v3640, %v3641
    %v3643 = vand.u32 %v3642, 4294901760
    %3644 = vmatpush1.xpose.msra.mxu0 %v3643
    %3645 = vmatprep.subr.mxu0 0.0
    %v3646 = vand.u32 %v3341, 4294901760
    %v3647 = vsub.f32 %v3341, %v3646
    %v3648 = vand.u32 %v3647, 4294901760
    %v3649 = vsub.f32 %v3647, %v3648
    %v3650 = vand.u32 %v3649, 4294901760
    %3651 = vmatpush1.xpose.msra.mxu0 %v3650
    %3652 = vmatprep.subr.mxu0 0.0
    %v3653 = vand.u32 %v3338, 4294901760
    %v3654 = vsub.f32 %v3338, %v3653
    %v3655 = vand.u32 %v3654, 4294901760
    %v3656 = vsub.f32 %v3654, %v3655
    %v3657 = vand.u32 %v3656, 4294901760
    %3658 = vmatpush1.xpose.msra.mxu0 %v3657
    %3659 = vmatprep.subr.mxu0 0.0
    %v3660 = vand.u32 %v3335, 4294901760
    %v3661 = vsub.f32 %v3335, %v3660
    %v3662 = vand.u32 %v3661, 4294901760
    %v3663 = vsub.f32 %v3661, %v3662
    %v3664 = vand.u32 %v3663, 4294901760
    %3665 = vmatpush1.xpose.msra.mxu0 %v3664
    %3666 = vmatprep.subr.mxu0 0.0
    %v3667 = vand.u32 %v3332, 4294901760
    %v3668 = vsub.f32 %v3332, %v3667
    %v3669 = vand.u32 %v3668, 4294901760
    %v3670 = vsub.f32 %v3668, %v3669
    %v3671 = vand.u32 %v3670, 4294901760
    %3672 = vmatpush1.xpose.msra.mxu0 %v3671
    %3673 = vmatprep.subr.mxu0 0.0
    %v3674 = vand.u32 %v3329, 4294901760
    %v3675 = vsub.f32 %v3329, %v3674
    %v3676 = vand.u32 %v3675, 4294901760
    %v3677 = vsub.f32 %v3675, %v3676
    %v3678 = vand.u32 %v3677, 4294901760
    %3679 = vmatpush1.xpose.msra.mxu0 %v3678
    %3680 = vmatprep.subr.mxu0 0.0
    %v3681 = vand.u32 %v3326, 4294901760
    %v3682 = vsub.f32 %v3326, %v3681
    %v3683 = vand.u32 %v3682, 4294901760
    %v3684 = vsub.f32 %v3682, %v3683
    %v3685 = vand.u32 %v3684, 4294901760
    %3686 = vmatpush1.xpose.msra.mxu0 %v3685
    %3687 = vmatprep.subr.mxu0 0.0
    %v3688 = vand.u32 %v3323, 4294901760
    %v3689 = vsub.f32 %v3323, %v3688
    %v3690 = vand.u32 %v3689, 4294901760
    %v3691 = vsub.f32 %v3689, %v3690
    %v3692 = vand.u32 %v3691, 4294901760
    %3693 = vmatpush1.xpose.msra.mxu0 %v3692
    %3694 = vmatprep.subr.mxu0 0.0
    %v3695 = vand.u32 %v3320, 4294901760
    %v3696 = vsub.f32 %v3320, %v3695
    %v3697 = vand.u32 %v3696, 4294901760
    %v3698 = vsub.f32 %v3696, %v3697
    %v3699 = vand.u32 %v3698, 4294901760
    %3700 = vmatpush1.xpose.msra.mxu0 %v3699
    %3701 = vmatprep.subr.mxu0 0.0
    %v3702 = vand.u32 %v3317, 4294901760
    %v3703 = vsub.f32 %v3317, %v3702
    %v3704 = vand.u32 %v3703, 4294901760
    %v3705 = vsub.f32 %v3703, %v3704
    %v3706 = vand.u32 %v3705, 4294901760
    %3707 = vmatpush1.xpose.msra.mxu0 %v3706
    %3708 = vmatprep.subr.mxu0 0.0
    %v3709 = vand.u32 %v3314, 4294901760
    %v3710 = vsub.f32 %v3314, %v3709
    %v3711 = vand.u32 %v3710, 4294901760
    %v3712 = vsub.f32 %v3710, %v3711
    %v3713 = vand.u32 %v3712, 4294901760
    %3714 = vmatpush1.xpose.msra.mxu0 %v3713
    %3715 = vmatprep.subr.mxu0 0.0
    %v3716 = vand.u32 %v3311, 4294901760
    %v3717 = vsub.f32 %v3311, %v3716
    %v3718 = vand.u32 %v3717, 4294901760
    %v3719 = vsub.f32 %v3717, %v3718
    %v3720 = vand.u32 %v3719, 4294901760
    %3721 = vmatpush1.xpose.msra.mxu0 %v3720
    %3722 = vmatprep.subr.mxu0 0.0
    %v3723 = vand.u32 %v3404, 4294901760
    %v3724 = vsub.f32 %v3404, %v3723
    %v3725 = vand.u32 %v3724, 4294901760
    %v3726 = vsub.f32 %v3724, %v3725
    %v3727 = vand.u32 %v3726, 4294901760
    %3728 = vmatpush2.xpose.msra.mxu0 %v3727
    %3729 = vmatprep.subr.mxu0 0.0
    %v3730 = vand.u32 %v3401, 4294901760
    %v3731 = vsub.f32 %v3401, %v3730
    %v3732 = vand.u32 %v3731, 4294901760
    %v3733 = vsub.f32 %v3731, %v3732
    %v3734 = vand.u32 %v3733, 4294901760
    %3735 = vmatpush2.xpose.msra.mxu0 %v3734
    %3736 = vmatprep.subr.mxu0 0.0
    %v3737 = vand.u32 %v3398, 4294901760
    %v3738 = vsub.f32 %v3398, %v3737
    %v3739 = vand.u32 %v3738, 4294901760
    %v3740 = vsub.f32 %v3738, %v3739
    %v3741 = vand.u32 %v3740, 4294901760
    %3742 = vmatpush2.xpose.msra.mxu0 %v3741
    %3743 = vmatprep.subr.mxu0 0.0
    %v3744 = vand.u32 %v3395, 4294901760
    %v3745 = vsub.f32 %v3395, %v3744
    %v3746 = vand.u32 %v3745, 4294901760
    %v3747 = vsub.f32 %v3745, %v3746
    %v3748 = vand.u32 %v3747, 4294901760
    %3749 = vmatpush2.xpose.msra.mxu0 %v3748
    %3750 = vmatprep.subr.mxu0 0.0
    %v3751 = vand.u32 %v3392, 4294901760
    %v3752 = vsub.f32 %v3392, %v3751
    %v3753 = vand.u32 %v3752, 4294901760
    %v3754 = vsub.f32 %v3752, %v3753
    %v3755 = vand.u32 %v3754, 4294901760
    %3756 = vmatpush2.xpose.msra.mxu0 %v3755
    %3757 = vmatprep.subr.mxu0 0.0
    %v3758 = vand.u32 %v3389, 4294901760
    %v3759 = vsub.f32 %v3389, %v3758
    %v3760 = vand.u32 %v3759, 4294901760
    %v3761 = vsub.f32 %v3759, %v3760
    %v3762 = vand.u32 %v3761, 4294901760
    %3763 = vmatpush2.xpose.msra.mxu0 %v3762
    %3764 = vmatprep.subr.mxu0 0.0
    %v3765 = vand.u32 %v3386, 4294901760
    %v3766 = vsub.f32 %v3386, %v3765
    %v3767 = vand.u32 %v3766, 4294901760
    %v3768 = vsub.f32 %v3766, %v3767
    %v3769 = vand.u32 %v3768, 4294901760
    %3770 = vmatpush2.xpose.msra.mxu0 %v3769
    %3771 = vmatprep.subr.mxu0 0.0
    %v3772 = vand.u32 %v3383, 4294901760
    %v3773 = vsub.f32 %v3383, %v3772
    %v3774 = vand.u32 %v3773, 4294901760
    %v3775 = vsub.f32 %v3773, %v3774
    %v3776 = vand.u32 %v3775, 4294901760
    %3777 = vmatpush2.xpose.msra.mxu0 %v3776
    %3778 = vmatprep.subr.mxu0 0.0
    %v3779 = vand.u32 %v3380, 4294901760
    %v3780 = vsub.f32 %v3380, %v3779
    %v3781 = vand.u32 %v3780, 4294901760
    %v3782 = vsub.f32 %v3780, %v3781
    %v3783 = vand.u32 %v3782, 4294901760
    %3784 = vmatpush2.xpose.msra.mxu0 %v3783
    %3785 = vmatprep.subr.mxu0 0.0
    %v3786 = vand.u32 %v3377, 4294901760
    %v3787 = vsub.f32 %v3377, %v3786
    %v3788 = vand.u32 %v3787, 4294901760
    %v3789 = vsub.f32 %v3787, %v3788
    %v3790 = vand.u32 %v3789, 4294901760
    %3791 = vmatpush2.xpose.msra.mxu0 %v3790
    %3792 = vmatprep.subr.mxu0 0.0
    %v3793 = vand.u32 %v3374, 4294901760
    %v3794 = vsub.f32 %v3374, %v3793
    %v3795 = vand.u32 %v3794, 4294901760
    %v3796 = vsub.f32 %v3794, %v3795
    %v3797 = vand.u32 %v3796, 4294901760
    %3798 = vmatpush2.xpose.msra.mxu0 %v3797
    %3799 = vmatprep.subr.mxu0 0.0
    %v3800 = vand.u32 %v3371, 4294901760
    %v3801 = vsub.f32 %v3371, %v3800
    %v3802 = vand.u32 %v3801, 4294901760
    %v3803 = vsub.f32 %v3801, %v3802
    %v3804 = vand.u32 %v3803, 4294901760
    %3805 = vmatpush2.xpose.msra.mxu0 %v3804
    %3806 = vmatprep.subr.mxu0 0.0
    %v3807 = vand.u32 %v3368, 4294901760
    %v3808 = vsub.f32 %v3368, %v3807
    %v3809 = vand.u32 %v3808, 4294901760
    %v3810 = vsub.f32 %v3808, %v3809
    %v3811 = vand.u32 %v3810, 4294901760
    %3812 = vmatpush2.xpose.msra.mxu0 %v3811
    %3813 = vmatprep.subr.mxu0 0.0
    %v3814 = vand.u32 %v3365, 4294901760
    %v3815 = vsub.f32 %v3365, %v3814
    %v3816 = vand.u32 %v3815, 4294901760
    %v3817 = vsub.f32 %v3815, %v3816
    %v3818 = vand.u32 %v3817, 4294901760
    %3819 = vmatpush2.xpose.msra.mxu0 %v3818
    %3820 = vmatprep.subr.mxu0 0.0
    %v3821 = vand.u32 %v3362, 4294901760
    %v3822 = vsub.f32 %v3362, %v3821
    %v3823 = vand.u32 %v3822, 4294901760
    %v3824 = vsub.f32 %v3822, %v3823
    %v3825 = vand.u32 %v3824, 4294901760
    %3826 = vmatpush2.xpose.msra.mxu0 %v3825
    %3827 = vmatprep.subr.mxu0 0.0
    %v3828 = vand.u32 %v3359, 4294901760
    %v3829 = vsub.f32 %v3359, %v3828
    %v3830 = vand.u32 %v3829, 4294901760
    %v3831 = vsub.f32 %v3829, %v3830
    %v3832 = vand.u32 %v3831, 4294901760
    %3833 = vmatpush2.xpose.msra.mxu0 %v3832
    %3834 = vmatprep.mubr.f32.mxu0 0.0
    %v3835 = vand.u32 %v3308, 4294901760
    %3836 = vmatmul.mubr.f32.gmra.mxu0 %v3835
    %v3837 = vpop.f32.mrf.mxu0
    %v3838 = vadd.f32 %v3606, %v3837
    %v3839 = vpop.f32.mrf.mxu0
    %v3840 = vadd.f32 %v3608, %v3839
    %3841 = vdwg.mxu0
    %3842 = vmatprep.subr.mxu0 0.0
    %v3843 = vand.u32 %v3356, 4294901760
    %v3844 = vsub.f32 %v3356, %v3843
    %3845 = vmatpush1.xpose.msra.mxu0 %v3844
    %3846 = vmatprep.subr.mxu0 0.0
    %v3847 = vand.u32 %v3353, 4294901760
    %v3848 = vsub.f32 %v3353, %v3847
    %3849 = vmatpush1.xpose.msra.mxu0 %v3848
    %3850 = vmatprep.subr.mxu0 0.0
    %v3851 = vand.u32 %v3350, 4294901760
    %v3852 = vsub.f32 %v3350, %v3851
    %3853 = vmatpush1.xpose.msra.mxu0 %v3852
    %3854 = vmatprep.subr.mxu0 0.0
    %v3855 = vand.u32 %v3347, 4294901760
    %v3856 = vsub.f32 %v3347, %v3855
    %3857 = vmatpush1.xpose.msra.mxu0 %v3856
    %3858 = vmatprep.subr.mxu0 0.0
    %v3859 = vand.u32 %v3344, 4294901760
    %v3860 = vsub.f32 %v3344, %v3859
    %3861 = vmatpush1.xpose.msra.mxu0 %v3860
    %3862 = vmatprep.subr.mxu0 0.0
    %v3863 = vand.u32 %v3341, 4294901760
    %v3864 = vsub.f32 %v3341, %v3863
    %3865 = vmatpush1.xpose.msra.mxu0 %v3864
    %3866 = vmatprep.subr.mxu0 0.0
    %v3867 = vand.u32 %v3338, 4294901760
    %v3868 = vsub.f32 %v3338, %v3867
    %3869 = vmatpush1.xpose.msra.mxu0 %v3868
    %3870 = vmatprep.subr.mxu0 0.0
    %v3871 = vand.u32 %v3335, 4294901760
    %v3872 = vsub.f32 %v3335, %v3871
    %3873 = vmatpush1.xpose.msra.mxu0 %v3872
    %3874 = vmatprep.subr.mxu0 0.0
    %v3875 = vand.u32 %v3332, 4294901760
    %v3876 = vsub.f32 %v3332, %v3875
    %3877 = vmatpush1.xpose.msra.mxu0 %v3876
    %3878 = vmatprep.subr.mxu0 0.0
    %v3879 = vand.u32 %v3329, 4294901760
    %v3880 = vsub.f32 %v3329, %v3879
    %3881 = vmatpush1.xpose.msra.mxu0 %v3880
    %3882 = vmatprep.subr.mxu0 0.0
    %v3883 = vand.u32 %v3326, 4294901760
    %v3884 = vsub.f32 %v3326, %v3883
    %3885 = vmatpush1.xpose.msra.mxu0 %v3884
    %3886 = vmatprep.subr.mxu0 0.0
    %v3887 = vand.u32 %v3323, 4294901760
    %v3888 = vsub.f32 %v3323, %v3887
    %3889 = vmatpush1.xpose.msra.mxu0 %v3888
    %3890 = vmatprep.subr.mxu0 0.0
    %v3891 = vand.u32 %v3320, 4294901760
    %v3892 = vsub.f32 %v3320, %v3891
    %3893 = vmatpush1.xpose.msra.mxu0 %v3892
    %3894 = vmatprep.subr.mxu0 0.0
    %v3895 = vand.u32 %v3317, 4294901760
    %v3896 = vsub.f32 %v3317, %v3895
    %3897 = vmatpush1.xpose.msra.mxu0 %v3896
    %3898 = vmatprep.subr.mxu0 0.0
    %v3899 = vand.u32 %v3314, 4294901760
    %v3900 = vsub.f32 %v3314, %v3899
    %3901 = vmatpush1.xpose.msra.mxu0 %v3900
    %3902 = vmatprep.subr.mxu0 0.0
    %v3903 = vand.u32 %v3311, 4294901760
    %v3904 = vsub.f32 %v3311, %v3903
    %3905 = vmatpush1.xpose.msra.mxu0 %v3904
    %3906 = vmatprep.subr.mxu0 0.0
    %v3907 = vand.u32 %v3404, 4294901760
    %v3908 = vsub.f32 %v3404, %v3907
    %3909 = vmatpush2.xpose.msra.mxu0 %v3908
    %3910 = vmatprep.subr.mxu0 0.0
    %v3911 = vand.u32 %v3401, 4294901760
    %v3912 = vsub.f32 %v3401, %v3911
    %3913 = vmatpush2.xpose.msra.mxu0 %v3912
    %3914 = vmatprep.subr.mxu0 0.0
    %v3915 = vand.u32 %v3398, 4294901760
    %v3916 = vsub.f32 %v3398, %v3915
    %3917 = vmatpush2.xpose.msra.mxu0 %v3916
    %3918 = vmatprep.subr.mxu0 0.0
    %v3919 = vand.u32 %v3395, 4294901760
    %v3920 = vsub.f32 %v3395, %v3919
    %3921 = vmatpush2.xpose.msra.mxu0 %v3920
    %3922 = vmatprep.subr.mxu0 0.0
    %v3923 = vand.u32 %v3392, 4294901760
    %v3924 = vsub.f32 %v3392, %v3923
    %3925 = vmatpush2.xpose.msra.mxu0 %v3924
    %3926 = vmatprep.subr.mxu0 0.0
    %v3927 = vand.u32 %v3389, 4294901760
    %v3928 = vsub.f32 %v3389, %v3927
    %3929 = vmatpush2.xpose.msra.mxu0 %v3928
    %3930 = vmatprep.subr.mxu0 0.0
    %v3931 = vand.u32 %v3386, 4294901760
    %v3932 = vsub.f32 %v3386, %v3931
    %3933 = vmatpush2.xpose.msra.mxu0 %v3932
    %3934 = vmatprep.subr.mxu0 0.0
    %v3935 = vand.u32 %v3383, 4294901760
    %v3936 = vsub.f32 %v3383, %v3935
    %3937 = vmatpush2.xpose.msra.mxu0 %v3936
    %3938 = vmatprep.subr.mxu0 0.0
    %v3939 = vand.u32 %v3380, 4294901760
    %v3940 = vsub.f32 %v3380, %v3939
    %3941 = vmatpush2.xpose.msra.mxu0 %v3940
    %3942 = vmatprep.subr.mxu0 0.0
    %v3943 = vand.u32 %v3377, 4294901760
    %v3944 = vsub.f32 %v3377, %v3943
    %3945 = vmatpush2.xpose.msra.mxu0 %v3944
    %3946 = vmatprep.subr.mxu0 0.0
    %v3947 = vand.u32 %v3374, 4294901760
    %v3948 = vsub.f32 %v3374, %v3947
    %3949 = vmatpush2.xpose.msra.mxu0 %v3948
    %3950 = vmatprep.subr.mxu0 0.0
    %v3951 = vand.u32 %v3371, 4294901760
    %v3952 = vsub.f32 %v3371, %v3951
    %3953 = vmatpush2.xpose.msra.mxu0 %v3952
    %3954 = vmatprep.subr.mxu0 0.0
    %v3955 = vand.u32 %v3368, 4294901760
    %v3956 = vsub.f32 %v3368, %v3955
    %3957 = vmatpush2.xpose.msra.mxu0 %v3956
    %3958 = vmatprep.subr.mxu0 0.0
    %v3959 = vand.u32 %v3365, 4294901760
    %v3960 = vsub.f32 %v3365, %v3959
    %3961 = vmatpush2.xpose.msra.mxu0 %v3960
    %3962 = vmatprep.subr.mxu0 0.0
    %v3963 = vand.u32 %v3362, 4294901760
    %v3964 = vsub.f32 %v3362, %v3963
    %3965 = vmatpush2.xpose.msra.mxu0 %v3964
    %3966 = vmatprep.subr.mxu0 0.0
    %v3967 = vand.u32 %v3359, 4294901760
    %v3968 = vsub.f32 %v3359, %v3967
    %3969 = vmatpush2.xpose.msra.mxu0 %v3968
    %3970 = vmatprep.mubr.f32.mxu0 0.0
    %v3971 = vand.u32 %v3308, 4294901760
    %v3972 = vsub.f32 %v3308, %v3971
    %3973 = vmatmul.mubr.f32.gmra.mxu0 %v3972
    %v3974 = vpop.f32.mrf.mxu0
    %v3975 = vadd.f32 %v3838, %v3974
    %v3976 = vpop.f32.mrf.mxu0
    %v3977 = vadd.f32 %v3840, %v3976
    %3978 = vdwg.mxu0
    %3979 = vmatprep.subr.mxu0 0.0
    %v3980 = vand.u32 %v3356, 4294901760
    %3981 = vmatpush1.xpose.msra.mxu0 %v3980
    %3982 = vmatprep.subr.mxu0 0.0
    %v3983 = vand.u32 %v3353, 4294901760
    %3984 = vmatpush1.xpose.msra.mxu0 %v3983
    %3985 = vmatprep.subr.mxu0 0.0
    %v3986 = vand.u32 %v3350, 4294901760
    %3987 = vmatpush1.xpose.msra.mxu0 %v3986
    %3988 = vmatprep.subr.mxu0 0.0
    %v3989 = vand.u32 %v3347, 4294901760
    %3990 = vmatpush1.xpose.msra.mxu0 %v3989
    %3991 = vmatprep.subr.mxu0 0.0
    %v3992 = vand.u32 %v3344, 4294901760
    %3993 = vmatpush1.xpose.msra.mxu0 %v3992
    %3994 = vmatprep.subr.mxu0 0.0
    %v3995 = vand.u32 %v3341, 4294901760
    %3996 = vmatpush1.xpose.msra.mxu0 %v3995
    %3997 = vmatprep.subr.mxu0 0.0
    %v3998 = vand.u32 %v3338, 4294901760
    %3999 = vmatpush1.xpose.msra.mxu0 %v3998
    %4000 = vmatprep.subr.mxu0 0.0
    %v4001 = vand.u32 %v3335, 4294901760
    %4002 = vmatpush1.xpose.msra.mxu0 %v4001
    %4003 = vmatprep.subr.mxu0 0.0
    %v4004 = vand.u32 %v3332, 4294901760
    %4005 = vmatpush1.xpose.msra.mxu0 %v4004
    %4006 = vmatprep.subr.mxu0 0.0
    %v4007 = vand.u32 %v3329, 4294901760
    %4008 = vmatpush1.xpose.msra.mxu0 %v4007
    %4009 = vmatprep.subr.mxu0 0.0
    %v4010 = vand.u32 %v3326, 4294901760
    %4011 = vmatpush1.xpose.msra.mxu0 %v4010
    %4012 = vmatprep.subr.mxu0 0.0
    %v4013 = vand.u32 %v3323, 4294901760
    %4014 = vmatpush1.xpose.msra.mxu0 %v4013
    %4015 = vmatprep.subr.mxu0 0.0
    %v4016 = vand.u32 %v3320, 4294901760
    %4017 = vmatpush1.xpose.msra.mxu0 %v4016
    %4018 = vmatprep.subr.mxu0 0.0
    %v4019 = vand.u32 %v3317, 4294901760
    %4020 = vmatpush1.xpose.msra.mxu0 %v4019
    %4021 = vmatprep.subr.mxu0 0.0
    %v4022 = vand.u32 %v3314, 4294901760
    %4023 = vmatpush1.xpose.msra.mxu0 %v4022
    %4024 = vmatprep.subr.mxu0 0.0
    %v4025 = vand.u32 %v3311, 4294901760
    %4026 = vmatpush1.xpose.msra.mxu0 %v4025
    %4027 = vmatprep.subr.mxu0 0.0
    %v4028 = vand.u32 %v3404, 4294901760
    %4029 = vmatpush2.xpose.msra.mxu0 %v4028
    %4030 = vmatprep.subr.mxu0 0.0
    %v4031 = vand.u32 %v3401, 4294901760
    %4032 = vmatpush2.xpose.msra.mxu0 %v4031
    %4033 = vmatprep.subr.mxu0 0.0
    %v4034 = vand.u32 %v3398, 4294901760
    %4035 = vmatpush2.xpose.msra.mxu0 %v4034
    %4036 = vmatprep.subr.mxu0 0.0
    %v4037 = vand.u32 %v3395, 4294901760
    %4038 = vmatpush2.xpose.msra.mxu0 %v4037
    %4039 = vmatprep.subr.mxu0 0.0
    %v4040 = vand.u32 %v3392, 4294901760
    %4041 = vmatpush2.xpose.msra.mxu0 %v4040
    %4042 = vmatprep.subr.mxu0 0.0
    %v4043 = vand.u32 %v3389, 4294901760
    %4044 = vmatpush2.xpose.msra.mxu0 %v4043
    %4045 = vmatprep.subr.mxu0 0.0
    %v4046 = vand.u32 %v3386, 4294901760
    %4047 = vmatpush2.xpose.msra.mxu0 %v4046
    %4048 = vmatprep.subr.mxu0 0.0
    %v4049 = vand.u32 %v3383, 4294901760
    %4050 = vmatpush2.xpose.msra.mxu0 %v4049
    %4051 = vmatprep.subr.mxu0 0.0
    %v4052 = vand.u32 %v3380, 4294901760
    %4053 = vmatpush2.xpose.msra.mxu0 %v4052
    %4054 = vmatprep.subr.mxu0 0.0
    %v4055 = vand.u32 %v3377, 4294901760
    %4056 = vmatpush2.xpose.msra.mxu0 %v4055
    %4057 = vmatprep.subr.mxu0 0.0
    %v4058 = vand.u32 %v3374, 4294901760
    %4059 = vmatpush2.xpose.msra.mxu0 %v4058
    %4060 = vmatprep.subr.mxu0 0.0
    %v4061 = vand.u32 %v3371, 4294901760
    %4062 = vmatpush2.xpose.msra.mxu0 %v4061
    %4063 = vmatprep.subr.mxu0 0.0
    %v4064 = vand.u32 %v3368, 4294901760
    %4065 = vmatpush2.xpose.msra.mxu0 %v4064
    %4066 = vmatprep.subr.mxu0 0.0
    %v4067 = vand.u32 %v3365, 4294901760
    %4068 = vmatpush2.xpose.msra.mxu0 %v4067
    %4069 = vmatprep.subr.mxu0 0.0
    %v4070 = vand.u32 %v3362, 4294901760
    %4071 = vmatpush2.xpose.msra.mxu0 %v4070
    %4072 = vmatprep.subr.mxu0 0.0
    %v4073 = vand.u32 %v3359, 4294901760
    %4074 = vmatpush2.xpose.msra.mxu0 %v4073
    %4075 = vmatprep.mubr.f32.mxu0 0.0
    %v4076 = vand.u32 %v3308, 4294901760
    %v4077 = vsub.f32 %v3308, %v4076
    %v4078 = vand.u32 %v4077, 4294901760
    %4079 = vmatmul.mubr.f32.gmra.mxu0 %v4078
    %v4080 = vpop.f32.mrf.mxu0
    %v4081 = vadd.f32 %v3975, %v4080
    %v4082 = vpop.f32.mrf.mxu0
    %v4083 = vadd.f32 %v3977, %v4082
    %4084 = vdwg.mxu0
    %4085 = vmatprep.subr.mxu0 0.0
    %v4086 = vand.u32 %v3356, 4294901760
    %v4087 = vsub.f32 %v3356, %v4086
    %v4088 = vand.u32 %v4087, 4294901760
    %4089 = vmatpush1.xpose.msra.mxu0 %v4088
    %4090 = vmatprep.subr.mxu0 0.0
    %v4091 = vand.u32 %v3353, 4294901760
    %v4092 = vsub.f32 %v3353, %v4091
    %v4093 = vand.u32 %v4092, 4294901760
    %4094 = vmatpush1.xpose.msra.mxu0 %v4093
    %4095 = vmatprep.subr.mxu0 0.0
    %v4096 = vand.u32 %v3350, 4294901760
    %v4097 = vsub.f32 %v3350, %v4096
    %v4098 = vand.u32 %v4097, 4294901760
    %4099 = vmatpush1.xpose.msra.mxu0 %v4098
    %4100 = vmatprep.subr.mxu0 0.0
    %v4101 = vand.u32 %v3347, 4294901760
    %v4102 = vsub.f32 %v3347, %v4101
    %v4103 = vand.u32 %v4102, 4294901760
    %4104 = vmatpush1.xpose.msra.mxu0 %v4103
    %4105 = vmatprep.subr.mxu0 0.0
    %v4106 = vand.u32 %v3344, 4294901760
    %v4107 = vsub.f32 %v3344, %v4106
    %v4108 = vand.u32 %v4107, 4294901760
    %4109 = vmatpush1.xpose.msra.mxu0 %v4108
    %4110 = vmatprep.subr.mxu0 0.0
    %v4111 = vand.u32 %v3341, 4294901760
    %v4112 = vsub.f32 %v3341, %v4111
    %v4113 = vand.u32 %v4112, 4294901760
    %4114 = vmatpush1.xpose.msra.mxu0 %v4113
    %4115 = vmatprep.subr.mxu0 0.0
    %v4116 = vand.u32 %v3338, 4294901760
    %v4117 = vsub.f32 %v3338, %v4116
    %v4118 = vand.u32 %v4117, 4294901760
    %4119 = vmatpush1.xpose.msra.mxu0 %v4118
    %4120 = vmatprep.subr.mxu0 0.0
    %v4121 = vand.u32 %v3335, 4294901760
    %v4122 = vsub.f32 %v3335, %v4121
    %v4123 = vand.u32 %v4122, 4294901760
    %4124 = vmatpush1.xpose.msra.mxu0 %v4123
    %4125 = vmatprep.subr.mxu0 0.0
    %v4126 = vand.u32 %v3332, 4294901760
    %v4127 = vsub.f32 %v3332, %v4126
    %v4128 = vand.u32 %v4127, 4294901760
    %4129 = vmatpush1.xpose.msra.mxu0 %v4128
    %4130 = vmatprep.subr.mxu0 0.0
    %v4131 = vand.u32 %v3329, 4294901760
    %v4132 = vsub.f32 %v3329, %v4131
    %v4133 = vand.u32 %v4132, 4294901760
    %4134 = vmatpush1.xpose.msra.mxu0 %v4133
    %4135 = vmatprep.subr.mxu0 0.0
    %v4136 = vand.u32 %v3326, 4294901760
    %v4137 = vsub.f32 %v3326, %v4136
    %v4138 = vand.u32 %v4137, 4294901760
    %4139 = vmatpush1.xpose.msra.mxu0 %v4138
    %4140 = vmatprep.subr.mxu0 0.0
    %v4141 = vand.u32 %v3323, 4294901760
    %v4142 = vsub.f32 %v3323, %v4141
    %v4143 = vand.u32 %v4142, 4294901760
    %4144 = vmatpush1.xpose.msra.mxu0 %v4143
    %4145 = vmatprep.subr.mxu0 0.0
    %v4146 = vand.u32 %v3320, 4294901760
    %v4147 = vsub.f32 %v3320, %v4146
    %v4148 = vand.u32 %v4147, 4294901760
    %4149 = vmatpush1.xpose.msra.mxu0 %v4148
    %4150 = vmatprep.subr.mxu0 0.0
    %v4151 = vand.u32 %v3317, 4294901760
    %v4152 = vsub.f32 %v3317, %v4151
    %v4153 = vand.u32 %v4152, 4294901760
    %4154 = vmatpush1.xpose.msra.mxu0 %v4153
    %4155 = vmatprep.subr.mxu0 0.0
    %v4156 = vand.u32 %v3314, 4294901760
    %v4157 = vsub.f32 %v3314, %v4156
    %v4158 = vand.u32 %v4157, 4294901760
    %4159 = vmatpush1.xpose.msra.mxu0 %v4158
    %4160 = vmatprep.subr.mxu0 0.0
    %v4161 = vand.u32 %v3311, 4294901760
    %v4162 = vsub.f32 %v3311, %v4161
    %v4163 = vand.u32 %v4162, 4294901760
    %4164 = vmatpush1.xpose.msra.mxu0 %v4163
    %4165 = vmatprep.subr.mxu0 0.0
    %v4166 = vand.u32 %v3404, 4294901760
    %v4167 = vsub.f32 %v3404, %v4166
    %v4168 = vand.u32 %v4167, 4294901760
    %4169 = vmatpush2.xpose.msra.mxu0 %v4168
    %4170 = vmatprep.subr.mxu0 0.0
    %v4171 = vand.u32 %v3401, 4294901760
    %v4172 = vsub.f32 %v3401, %v4171
    %v4173 = vand.u32 %v4172, 4294901760
    %4174 = vmatpush2.xpose.msra.mxu0 %v4173
    %4175 = vmatprep.subr.mxu0 0.0
    %v4176 = vand.u32 %v3398, 4294901760
    %v4177 = vsub.f32 %v3398, %v4176
    %v4178 = vand.u32 %v4177, 4294901760
    %4179 = vmatpush2.xpose.msra.mxu0 %v4178
    %4180 = vmatprep.subr.mxu0 0.0
    %v4181 = vand.u32 %v3395, 4294901760
    %v4182 = vsub.f32 %v3395, %v4181
    %v4183 = vand.u32 %v4182, 4294901760
    %4184 = vmatpush2.xpose.msra.mxu0 %v4183
    %4185 = vmatprep.subr.mxu0 0.0
    %v4186 = vand.u32 %v3392, 4294901760
    %v4187 = vsub.f32 %v3392, %v4186
    %v4188 = vand.u32 %v4187, 4294901760
    %4189 = vmatpush2.xpose.msra.mxu0 %v4188
    %4190 = vmatprep.subr.mxu0 0.0
    %v4191 = vand.u32 %v3389, 4294901760
    %v4192 = vsub.f32 %v3389, %v4191
    %v4193 = vand.u32 %v4192, 4294901760
    %4194 = vmatpush2.xpose.msra.mxu0 %v4193
    %4195 = vmatprep.subr.mxu0 0.0
    %v4196 = vand.u32 %v3386, 4294901760
    %v4197 = vsub.f32 %v3386, %v4196
    %v4198 = vand.u32 %v4197, 4294901760
    %4199 = vmatpush2.xpose.msra.mxu0 %v4198
    %4200 = vmatprep.subr.mxu0 0.0
    %v4201 = vand.u32 %v3383, 4294901760
    %v4202 = vsub.f32 %v3383, %v4201
    %v4203 = vand.u32 %v4202, 4294901760
    %4204 = vmatpush2.xpose.msra.mxu0 %v4203
    %4205 = vmatprep.subr.mxu0 0.0
    %v4206 = vand.u32 %v3380, 4294901760
    %v4207 = vsub.f32 %v3380, %v4206
    %v4208 = vand.u32 %v4207, 4294901760
    %4209 = vmatpush2.xpose.msra.mxu0 %v4208
    %4210 = vmatprep.subr.mxu0 0.0
    %v4211 = vand.u32 %v3377, 4294901760
    %v4212 = vsub.f32 %v3377, %v4211
    %v4213 = vand.u32 %v4212, 4294901760
    %4214 = vmatpush2.xpose.msra.mxu0 %v4213
    %4215 = vmatprep.subr.mxu0 0.0
    %v4216 = vand.u32 %v3374, 4294901760
    %v4217 = vsub.f32 %v3374, %v4216
    %v4218 = vand.u32 %v4217, 4294901760
    %4219 = vmatpush2.xpose.msra.mxu0 %v4218
    %4220 = vmatprep.subr.mxu0 0.0
    %v4221 = vand.u32 %v3371, 4294901760
    %v4222 = vsub.f32 %v3371, %v4221
    %v4223 = vand.u32 %v4222, 4294901760
    %4224 = vmatpush2.xpose.msra.mxu0 %v4223
    %4225 = vmatprep.subr.mxu0 0.0
    %v4226 = vand.u32 %v3368, 4294901760
    %v4227 = vsub.f32 %v3368, %v4226
    %v4228 = vand.u32 %v4227, 4294901760
    %4229 = vmatpush2.xpose.msra.mxu0 %v4228
    %4230 = vmatprep.subr.mxu0 0.0
    %v4231 = vand.u32 %v3365, 4294901760
    %v4232 = vsub.f32 %v3365, %v4231
    %v4233 = vand.u32 %v4232, 4294901760
    %4234 = vmatpush2.xpose.msra.mxu0 %v4233
    %4235 = vmatprep.subr.mxu0 0.0
    %v4236 = vand.u32 %v3362, 4294901760
    %v4237 = vsub.f32 %v3362, %v4236
    %v4238 = vand.u32 %v4237, 4294901760
    %4239 = vmatpush2.xpose.msra.mxu0 %v4238
    %4240 = vmatprep.subr.mxu0 0.0
    %v4241 = vand.u32 %v3359, 4294901760
    %v4242 = vsub.f32 %v3359, %v4241
    %v4243 = vand.u32 %v4242, 4294901760
    %4244 = vmatpush2.xpose.msra.mxu0 %v4243
    %4245 = vmatprep.mubr.f32.mxu0 0.0
    %v4246 = vand.u32 %v3308, 4294901760
    %4247 = vmatmul.mubr.f32.gmra.mxu0 %v4246
    %v4248 = vpop.f32.mrf.mxu0
    %v4249 = vadd.f32 %v4081, %v4248
    %v4250 = vpop.f32.mrf.mxu0
    %v4251 = vadd.f32 %v4083, %v4250
    %4252 = vdwg.mxu0
    %4253 = vmatprep.subr.mxu0 0.0
    %v4254 = vand.u32 %v3356, 4294901760
    %4255 = vmatpush1.xpose.msra.mxu0 %v4254
    %4256 = vmatprep.subr.mxu0 0.0
    %v4257 = vand.u32 %v3353, 4294901760
    %4258 = vmatpush1.xpose.msra.mxu0 %v4257
    %4259 = vmatprep.subr.mxu0 0.0
    %v4260 = vand.u32 %v3350, 4294901760
    %4261 = vmatpush1.xpose.msra.mxu0 %v4260
    %4262 = vmatprep.subr.mxu0 0.0
    %v4263 = vand.u32 %v3347, 4294901760
    %4264 = vmatpush1.xpose.msra.mxu0 %v4263
    %4265 = vmatprep.subr.mxu0 0.0
    %v4266 = vand.u32 %v3344, 4294901760
    %4267 = vmatpush1.xpose.msra.mxu0 %v4266
    %4268 = vmatprep.subr.mxu0 0.0
    %v4269 = vand.u32 %v3341, 4294901760
    %4270 = vmatpush1.xpose.msra.mxu0 %v4269
    %4271 = vmatprep.subr.mxu0 0.0
    %v4272 = vand.u32 %v3338, 4294901760
    %4273 = vmatpush1.xpose.msra.mxu0 %v4272
    %4274 = vmatprep.subr.mxu0 0.0
    %v4275 = vand.u32 %v3335, 4294901760
    %4276 = vmatpush1.xpose.msra.mxu0 %v4275
    %4277 = vmatprep.subr.mxu0 0.0
    %v4278 = vand.u32 %v3332, 4294901760
    %4279 = vmatpush1.xpose.msra.mxu0 %v4278
    %4280 = vmatprep.subr.mxu0 0.0
    %v4281 = vand.u32 %v3329, 4294901760
    %4282 = vmatpush1.xpose.msra.mxu0 %v4281
    %4283 = vmatprep.subr.mxu0 0.0
    %v4284 = vand.u32 %v3326, 4294901760
    %4285 = vmatpush1.xpose.msra.mxu0 %v4284
    %4286 = vmatprep.subr.mxu0 0.0
    %v4287 = vand.u32 %v3323, 4294901760
    %4288 = vmatpush1.xpose.msra.mxu0 %v4287
    %4289 = vmatprep.subr.mxu0 0.0
    %v4290 = vand.u32 %v3320, 4294901760
    %4291 = vmatpush1.xpose.msra.mxu0 %v4290
    %4292 = vmatprep.subr.mxu0 0.0
    %v4293 = vand.u32 %v3317, 4294901760
    %4294 = vmatpush1.xpose.msra.mxu0 %v4293
    %4295 = vmatprep.subr.mxu0 0.0
    %v4296 = vand.u32 %v3314, 4294901760
    %4297 = vmatpush1.xpose.msra.mxu0 %v4296
    %4298 = vmatprep.subr.mxu0 0.0
    %v4299 = vand.u32 %v3311, 4294901760
    %4300 = vmatpush1.xpose.msra.mxu0 %v4299
    %4301 = vmatprep.subr.mxu0 0.0
    %v4302 = vand.u32 %v3404, 4294901760
    %4303 = vmatpush2.xpose.msra.mxu0 %v4302
    %4304 = vmatprep.subr.mxu0 0.0
    %v4305 = vand.u32 %v3401, 4294901760
    %4306 = vmatpush2.xpose.msra.mxu0 %v4305
    %4307 = vmatprep.subr.mxu0 0.0
    %v4308 = vand.u32 %v3398, 4294901760
    %4309 = vmatpush2.xpose.msra.mxu0 %v4308
    %4310 = vmatprep.subr.mxu0 0.0
    %v4311 = vand.u32 %v3395, 4294901760
    %4312 = vmatpush2.xpose.msra.mxu0 %v4311
    %4313 = vmatprep.subr.mxu0 0.0
    %v4314 = vand.u32 %v3392, 4294901760
    %4315 = vmatpush2.xpose.msra.mxu0 %v4314
    %4316 = vmatprep.subr.mxu0 0.0
    %v4317 = vand.u32 %v3389, 4294901760
    %4318 = vmatpush2.xpose.msra.mxu0 %v4317
    %4319 = vmatprep.subr.mxu0 0.0
    %v4320 = vand.u32 %v3386, 4294901760
    %4321 = vmatpush2.xpose.msra.mxu0 %v4320
    %4322 = vmatprep.subr.mxu0 0.0
    %v4323 = vand.u32 %v3383, 4294901760
    %4324 = vmatpush2.xpose.msra.mxu0 %v4323
    %4325 = vmatprep.subr.mxu0 0.0
    %v4326 = vand.u32 %v3380, 4294901760
    %4327 = vmatpush2.xpose.msra.mxu0 %v4326
    %4328 = vmatprep.subr.mxu0 0.0
    %v4329 = vand.u32 %v3377, 4294901760
    %4330 = vmatpush2.xpose.msra.mxu0 %v4329
    %4331 = vmatprep.subr.mxu0 0.0
    %v4332 = vand.u32 %v3374, 4294901760
    %4333 = vmatpush2.xpose.msra.mxu0 %v4332
    %4334 = vmatprep.subr.mxu0 0.0
    %v4335 = vand.u32 %v3371, 4294901760
    %4336 = vmatpush2.xpose.msra.mxu0 %v4335
    %4337 = vmatprep.subr.mxu0 0.0
    %v4338 = vand.u32 %v3368, 4294901760
    %4339 = vmatpush2.xpose.msra.mxu0 %v4338
    %4340 = vmatprep.subr.mxu0 0.0
    %v4341 = vand.u32 %v3365, 4294901760
    %4342 = vmatpush2.xpose.msra.mxu0 %v4341
    %4343 = vmatprep.subr.mxu0 0.0
    %v4344 = vand.u32 %v3362, 4294901760
    %4345 = vmatpush2.xpose.msra.mxu0 %v4344
    %4346 = vmatprep.subr.mxu0 0.0
    %v4347 = vand.u32 %v3359, 4294901760
    %4348 = vmatpush2.xpose.msra.mxu0 %v4347
    %4349 = vmatprep.mubr.f32.mxu0 0.0
    %v4350 = vand.u32 %v3308, 4294901760
    %4351 = vmatmul.mubr.f32.gmra.mxu0 %v4350
    %v4352 = vpop.f32.mrf.mxu0
    %v4353 = vadd.f32 %v4249, %v4352
    %v4354 = vpop.f32.mrf.mxu0
    %v4355 = vadd.f32 %v4251, %v4354
    %4356 = vdwg.mxu0
    %4357 = vmatprep.subr.mxu0 0.0
    %v4358 = vand.u32 %v3452, 4294901760
    %4359 = vmatpush1.xpose.msra.mxu0 %v4358
    %4360 = vmatprep.subr.mxu0 0.0
    %v4361 = vand.u32 %v3449, 4294901760
    %4362 = vmatpush1.xpose.msra.mxu0 %v4361
    %4363 = vmatprep.subr.mxu0 0.0
    %v4364 = vand.u32 %v3446, 4294901760
    %4365 = vmatpush1.xpose.msra.mxu0 %v4364
    %4366 = vmatprep.subr.mxu0 0.0
    %v4367 = vand.u32 %v3443, 4294901760
    %4368 = vmatpush1.xpose.msra.mxu0 %v4367
    %4369 = vmatprep.subr.mxu0 0.0
    %v4370 = vand.u32 %v3440, 4294901760
    %4371 = vmatpush1.xpose.msra.mxu0 %v4370
    %4372 = vmatprep.subr.mxu0 0.0
    %v4373 = vand.u32 %v3437, 4294901760
    %4374 = vmatpush1.xpose.msra.mxu0 %v4373
    %4375 = vmatprep.subr.mxu0 0.0
    %v4376 = vand.u32 %v3434, 4294901760
    %4377 = vmatpush1.xpose.msra.mxu0 %v4376
    %4378 = vmatprep.subr.mxu0 0.0
    %v4379 = vand.u32 %v3431, 4294901760
    %4380 = vmatpush1.xpose.msra.mxu0 %v4379
    %4381 = vmatprep.subr.mxu0 0.0
    %v4382 = vand.u32 %v3428, 4294901760
    %4383 = vmatpush1.xpose.msra.mxu0 %v4382
    %4384 = vmatprep.subr.mxu0 0.0
    %v4385 = vand.u32 %v3425, 4294901760
    %4386 = vmatpush1.xpose.msra.mxu0 %v4385
    %4387 = vmatprep.subr.mxu0 0.0
    %v4388 = vand.u32 %v3422, 4294901760
    %4389 = vmatpush1.xpose.msra.mxu0 %v4388
    %4390 = vmatprep.subr.mxu0 0.0
    %v4391 = vand.u32 %v3419, 4294901760
    %4392 = vmatpush1.xpose.msra.mxu0 %v4391
    %4393 = vmatprep.subr.mxu0 0.0
    %v4394 = vand.u32 %v3416, 4294901760
    %4395 = vmatpush1.xpose.msra.mxu0 %v4394
    %4396 = vmatprep.subr.mxu0 0.0
    %v4397 = vand.u32 %v3413, 4294901760
    %4398 = vmatpush1.xpose.msra.mxu0 %v4397
    %4399 = vmatprep.subr.mxu0 0.0
    %v4400 = vand.u32 %v3410, 4294901760
    %4401 = vmatpush1.xpose.msra.mxu0 %v4400
    %4402 = vmatprep.subr.mxu0 0.0
    %v4403 = vand.u32 %v3407, 4294901760
    %4404 = vmatpush1.xpose.msra.mxu0 %v4403
    %4405 = vmatprep.subr.mxu0 0.0
    %v4406 = vand.u32 %v3500, 4294901760
    %4407 = vmatpush2.xpose.msra.mxu0 %v4406
    %4408 = vmatprep.subr.mxu0 0.0
    %v4409 = vand.u32 %v3497, 4294901760
    %4410 = vmatpush2.xpose.msra.mxu0 %v4409
    %4411 = vmatprep.subr.mxu0 0.0
    %v4412 = vand.u32 %v3494, 4294901760
    %4413 = vmatpush2.xpose.msra.mxu0 %v4412
    %4414 = vmatprep.subr.mxu0 0.0
    %v4415 = vand.u32 %v3491, 4294901760
    %4416 = vmatpush2.xpose.msra.mxu0 %v4415
    %4417 = vmatprep.subr.mxu0 0.0
    %v4418 = vand.u32 %v3488, 4294901760
    %4419 = vmatpush2.xpose.msra.mxu0 %v4418
    %4420 = vmatprep.subr.mxu0 0.0
    %v4421 = vand.u32 %v3485, 4294901760
    %4422 = vmatpush2.xpose.msra.mxu0 %v4421
    %4423 = vmatprep.subr.mxu0 0.0
    %v4424 = vand.u32 %v3482, 4294901760
    %4425 = vmatpush2.xpose.msra.mxu0 %v4424
    %4426 = vmatprep.subr.mxu0 0.0
    %v4427 = vand.u32 %v3479, 4294901760
    %4428 = vmatpush2.xpose.msra.mxu0 %v4427
    %4429 = vmatprep.subr.mxu0 0.0
    %v4430 = vand.u32 %v3476, 4294901760
    %4431 = vmatpush2.xpose.msra.mxu0 %v4430
    %4432 = vmatprep.subr.mxu0 0.0
    %v4433 = vand.u32 %v3473, 4294901760
    %4434 = vmatpush2.xpose.msra.mxu0 %v4433
    %4435 = vmatprep.subr.mxu0 0.0
    %v4436 = vand.u32 %v3470, 4294901760
    %4437 = vmatpush2.xpose.msra.mxu0 %v4436
    %4438 = vmatprep.subr.mxu0 0.0
    %v4439 = vand.u32 %v3467, 4294901760
    %4440 = vmatpush2.xpose.msra.mxu0 %v4439
    %4441 = vmatprep.subr.mxu0 0.0
    %v4442 = vand.u32 %v3464, 4294901760
    %4443 = vmatpush2.xpose.msra.mxu0 %v4442
    %4444 = vmatprep.subr.mxu0 0.0
    %v4445 = vand.u32 %v3461, 4294901760
    %4446 = vmatpush2.xpose.msra.mxu0 %v4445
    %4447 = vmatprep.subr.mxu0 0.0
    %v4448 = vand.u32 %v3458, 4294901760
    %4449 = vmatpush2.xpose.msra.mxu0 %v4448
    %4450 = vmatprep.subr.mxu0 0.0
    %v4451 = vand.u32 %v3455, 4294901760
    %4452 = vmatpush2.xpose.msra.mxu0 %v4451
    %4453 = vmatprep.mubr.f32.mxu0 0.0
    %v4454 = vand.u32 %v3308, 4294901760
    %v4455 = vsub.f32 %v3308, %v4454
    %v4456 = vand.u32 %v4455, 4294901760
    %v4457 = vsub.f32 %v4455, %v4456
    %v4458 = vand.u32 %v4457, 4294901760
    %4459 = vmatmul.mubr.f32.gmra.mxu0 %v4458
    %v4460 = vpop.f32.mrf.mxu0
    %v4461 = vadd.f32 %v3304, %v4460
    %v4462 = vpop.f32.mrf.mxu0
    %v4463 = vadd.f32 %v3304, %v4462
    %4464 = vdwg.mxu0
    %4465 = vmatprep.subr.mxu0 0.0
    %v4466 = vand.u32 %v3452, 4294901760
    %v4467 = vsub.f32 %v3452, %v4466
    %v4468 = vand.u32 %v4467, 4294901760
    %v4469 = vsub.f32 %v4467, %v4468
    %v4470 = vand.u32 %v4469, 4294901760
    %4471 = vmatpush1.xpose.msra.mxu0 %v4470
    %4472 = vmatprep.subr.mxu0 0.0
    %v4473 = vand.u32 %v3449, 4294901760
    %v4474 = vsub.f32 %v3449, %v4473
    %v4475 = vand.u32 %v4474, 4294901760
    %v4476 = vsub.f32 %v4474, %v4475
    %v4477 = vand.u32 %v4476, 4294901760
    %4478 = vmatpush1.xpose.msra.mxu0 %v4477
    %4479 = vmatprep.subr.mxu0 0.0
    %v4480 = vand.u32 %v3446, 4294901760
    %v4481 = vsub.f32 %v3446, %v4480
    %v4482 = vand.u32 %v4481, 4294901760
    %v4483 = vsub.f32 %v4481, %v4482
    %v4484 = vand.u32 %v4483, 4294901760
    %4485 = vmatpush1.xpose.msra.mxu0 %v4484
    %4486 = vmatprep.subr.mxu0 0.0
    %v4487 = vand.u32 %v3443, 4294901760
    %v4488 = vsub.f32 %v3443, %v4487
    %v4489 = vand.u32 %v4488, 4294901760
    %v4490 = vsub.f32 %v4488, %v4489
    %v4491 = vand.u32 %v4490, 4294901760
    %4492 = vmatpush1.xpose.msra.mxu0 %v4491
    %4493 = vmatprep.subr.mxu0 0.0
    %v4494 = vand.u32 %v3440, 4294901760
    %v4495 = vsub.f32 %v3440, %v4494
    %v4496 = vand.u32 %v4495, 4294901760
    %v4497 = vsub.f32 %v4495, %v4496
    %v4498 = vand.u32 %v4497, 4294901760
    %4499 = vmatpush1.xpose.msra.mxu0 %v4498
    %4500 = vmatprep.subr.mxu0 0.0
    %v4501 = vand.u32 %v3437, 4294901760
    %v4502 = vsub.f32 %v3437, %v4501
    %v4503 = vand.u32 %v4502, 4294901760
    %v4504 = vsub.f32 %v4502, %v4503
    %v4505 = vand.u32 %v4504, 4294901760
    %4506 = vmatpush1.xpose.msra.mxu0 %v4505
    %4507 = vmatprep.subr.mxu0 0.0
    %v4508 = vand.u32 %v3434, 4294901760
    %v4509 = vsub.f32 %v3434, %v4508
    %v4510 = vand.u32 %v4509, 4294901760
    %v4511 = vsub.f32 %v4509, %v4510
    %v4512 = vand.u32 %v4511, 4294901760
    %4513 = vmatpush1.xpose.msra.mxu0 %v4512
    %4514 = vmatprep.subr.mxu0 0.0
    %v4515 = vand.u32 %v3431, 4294901760
    %v4516 = vsub.f32 %v3431, %v4515
    %v4517 = vand.u32 %v4516, 4294901760
    %v4518 = vsub.f32 %v4516, %v4517
    %v4519 = vand.u32 %v4518, 4294901760
    %4520 = vmatpush1.xpose.msra.mxu0 %v4519
    %4521 = vmatprep.subr.mxu0 0.0
    %v4522 = vand.u32 %v3428, 4294901760
    %v4523 = vsub.f32 %v3428, %v4522
    %v4524 = vand.u32 %v4523, 4294901760
    %v4525 = vsub.f32 %v4523, %v4524
    %v4526 = vand.u32 %v4525, 4294901760
    %4527 = vmatpush1.xpose.msra.mxu0 %v4526
    %4528 = vmatprep.subr.mxu0 0.0
    %v4529 = vand.u32 %v3425, 4294901760
    %v4530 = vsub.f32 %v3425, %v4529
    %v4531 = vand.u32 %v4530, 4294901760
    %v4532 = vsub.f32 %v4530, %v4531
    %v4533 = vand.u32 %v4532, 4294901760
    %4534 = vmatpush1.xpose.msra.mxu0 %v4533
    %4535 = vmatprep.subr.mxu0 0.0
    %v4536 = vand.u32 %v3422, 4294901760
    %v4537 = vsub.f32 %v3422, %v4536
    %v4538 = vand.u32 %v4537, 4294901760
    %v4539 = vsub.f32 %v4537, %v4538
    %v4540 = vand.u32 %v4539, 4294901760
    %4541 = vmatpush1.xpose.msra.mxu0 %v4540
    %4542 = vmatprep.subr.mxu0 0.0
    %v4543 = vand.u32 %v3419, 4294901760
    %v4544 = vsub.f32 %v3419, %v4543
    %v4545 = vand.u32 %v4544, 4294901760
    %v4546 = vsub.f32 %v4544, %v4545
    %v4547 = vand.u32 %v4546, 4294901760
    %4548 = vmatpush1.xpose.msra.mxu0 %v4547
    %4549 = vmatprep.subr.mxu0 0.0
    %v4550 = vand.u32 %v3416, 4294901760
    %v4551 = vsub.f32 %v3416, %v4550
    %v4552 = vand.u32 %v4551, 4294901760
    %v4553 = vsub.f32 %v4551, %v4552
    %v4554 = vand.u32 %v4553, 4294901760
    %4555 = vmatpush1.xpose.msra.mxu0 %v4554
    %4556 = vmatprep.subr.mxu0 0.0
    %v4557 = vand.u32 %v3413, 4294901760
    %v4558 = vsub.f32 %v3413, %v4557
    %v4559 = vand.u32 %v4558, 4294901760
    %v4560 = vsub.f32 %v4558, %v4559
    %v4561 = vand.u32 %v4560, 4294901760
    %4562 = vmatpush1.xpose.msra.mxu0 %v4561
    %4563 = vmatprep.subr.mxu0 0.0
    %v4564 = vand.u32 %v3410, 4294901760
    %v4565 = vsub.f32 %v3410, %v4564
    %v4566 = vand.u32 %v4565, 4294901760
    %v4567 = vsub.f32 %v4565, %v4566
    %v4568 = vand.u32 %v4567, 4294901760
    %4569 = vmatpush1.xpose.msra.mxu0 %v4568
    %4570 = vmatprep.subr.mxu0 0.0
    %v4571 = vand.u32 %v3407, 4294901760
    %v4572 = vsub.f32 %v3407, %v4571
    %v4573 = vand.u32 %v4572, 4294901760
    %v4574 = vsub.f32 %v4572, %v4573
    %v4575 = vand.u32 %v4574, 4294901760
    %4576 = vmatpush1.xpose.msra.mxu0 %v4575
    %4577 = vmatprep.subr.mxu0 0.0
    %v4578 = vand.u32 %v3500, 4294901760
    %v4579 = vsub.f32 %v3500, %v4578
    %v4580 = vand.u32 %v4579, 4294901760
    %v4581 = vsub.f32 %v4579, %v4580
    %v4582 = vand.u32 %v4581, 4294901760
    %4583 = vmatpush2.xpose.msra.mxu0 %v4582
    %4584 = vmatprep.subr.mxu0 0.0
    %v4585 = vand.u32 %v3497, 4294901760
    %v4586 = vsub.f32 %v3497, %v4585
    %v4587 = vand.u32 %v4586, 4294901760
    %v4588 = vsub.f32 %v4586, %v4587
    %v4589 = vand.u32 %v4588, 4294901760
    %4590 = vmatpush2.xpose.msra.mxu0 %v4589
    %4591 = vmatprep.subr.mxu0 0.0
    %v4592 = vand.u32 %v3494, 4294901760
    %v4593 = vsub.f32 %v3494, %v4592
    %v4594 = vand.u32 %v4593, 4294901760
    %v4595 = vsub.f32 %v4593, %v4594
    %v4596 = vand.u32 %v4595, 4294901760
    %4597 = vmatpush2.xpose.msra.mxu0 %v4596
    %4598 = vmatprep.subr.mxu0 0.0
    %v4599 = vand.u32 %v3491, 4294901760
    %v4600 = vsub.f32 %v3491, %v4599
    %v4601 = vand.u32 %v4600, 4294901760
    %v4602 = vsub.f32 %v4600, %v4601
    %v4603 = vand.u32 %v4602, 4294901760
    %4604 = vmatpush2.xpose.msra.mxu0 %v4603
    %4605 = vmatprep.subr.mxu0 0.0
    %v4606 = vand.u32 %v3488, 4294901760
    %v4607 = vsub.f32 %v3488, %v4606
    %v4608 = vand.u32 %v4607, 4294901760
    %v4609 = vsub.f32 %v4607, %v4608
    %v4610 = vand.u32 %v4609, 4294901760
    %4611 = vmatpush2.xpose.msra.mxu0 %v4610
    %4612 = vmatprep.subr.mxu0 0.0
    %v4613 = vand.u32 %v3485, 4294901760
    %v4614 = vsub.f32 %v3485, %v4613
    %v4615 = vand.u32 %v4614, 4294901760
    %v4616 = vsub.f32 %v4614, %v4615
    %v4617 = vand.u32 %v4616, 4294901760
    %4618 = vmatpush2.xpose.msra.mxu0 %v4617
    %4619 = vmatprep.subr.mxu0 0.0
    %v4620 = vand.u32 %v3482, 4294901760
    %v4621 = vsub.f32 %v3482, %v4620
    %v4622 = vand.u32 %v4621, 4294901760
    %v4623 = vsub.f32 %v4621, %v4622
    %v4624 = vand.u32 %v4623, 4294901760
    %4625 = vmatpush2.xpose.msra.mxu0 %v4624
    %4626 = vmatprep.subr.mxu0 0.0
    %v4627 = vand.u32 %v3479, 4294901760
    %v4628 = vsub.f32 %v3479, %v4627
    %v4629 = vand.u32 %v4628, 4294901760
    %v4630 = vsub.f32 %v4628, %v4629
    %v4631 = vand.u32 %v4630, 4294901760
    %4632 = vmatpush2.xpose.msra.mxu0 %v4631
    %4633 = vmatprep.subr.mxu0 0.0
    %v4634 = vand.u32 %v3476, 4294901760
    %v4635 = vsub.f32 %v3476, %v4634
    %v4636 = vand.u32 %v4635, 4294901760
    %v4637 = vsub.f32 %v4635, %v4636
    %v4638 = vand.u32 %v4637, 4294901760
    %4639 = vmatpush2.xpose.msra.mxu0 %v4638
    %4640 = vmatprep.subr.mxu0 0.0
    %v4641 = vand.u32 %v3473, 4294901760
    %v4642 = vsub.f32 %v3473, %v4641
    %v4643 = vand.u32 %v4642, 4294901760
    %v4644 = vsub.f32 %v4642, %v4643
    %v4645 = vand.u32 %v4644, 4294901760
    %4646 = vmatpush2.xpose.msra.mxu0 %v4645
    %4647 = vmatprep.subr.mxu0 0.0
    %v4648 = vand.u32 %v3470, 4294901760
    %v4649 = vsub.f32 %v3470, %v4648
    %v4650 = vand.u32 %v4649, 4294901760
    %v4651 = vsub.f32 %v4649, %v4650
    %v4652 = vand.u32 %v4651, 4294901760
    %4653 = vmatpush2.xpose.msra.mxu0 %v4652
    %4654 = vmatprep.subr.mxu0 0.0
    %v4655 = vand.u32 %v3467, 4294901760
    %v4656 = vsub.f32 %v3467, %v4655
    %v4657 = vand.u32 %v4656, 4294901760
    %v4658 = vsub.f32 %v4656, %v4657
    %v4659 = vand.u32 %v4658, 4294901760
    %4660 = vmatpush2.xpose.msra.mxu0 %v4659
    %4661 = vmatprep.subr.mxu0 0.0
    %v4662 = vand.u32 %v3464, 4294901760
    %v4663 = vsub.f32 %v3464, %v4662
    %v4664 = vand.u32 %v4663, 4294901760
    %v4665 = vsub.f32 %v4663, %v4664
    %v4666 = vand.u32 %v4665, 4294901760
    %4667 = vmatpush2.xpose.msra.mxu0 %v4666
    %4668 = vmatprep.subr.mxu0 0.0
    %v4669 = vand.u32 %v3461, 4294901760
    %v4670 = vsub.f32 %v3461, %v4669
    %v4671 = vand.u32 %v4670, 4294901760
    %v4672 = vsub.f32 %v4670, %v4671
    %v4673 = vand.u32 %v4672, 4294901760
    %4674 = vmatpush2.xpose.msra.mxu0 %v4673
    %4675 = vmatprep.subr.mxu0 0.0
    %v4676 = vand.u32 %v3458, 4294901760
    %v4677 = vsub.f32 %v3458, %v4676
    %v4678 = vand.u32 %v4677, 4294901760
    %v4679 = vsub.f32 %v4677, %v4678
    %v4680 = vand.u32 %v4679, 4294901760
    %4681 = vmatpush2.xpose.msra.mxu0 %v4680
    %4682 = vmatprep.subr.mxu0 0.0
    %v4683 = vand.u32 %v3455, 4294901760
    %v4684 = vsub.f32 %v3455, %v4683
    %v4685 = vand.u32 %v4684, 4294901760
    %v4686 = vsub.f32 %v4684, %v4685
    %v4687 = vand.u32 %v4686, 4294901760
    %4688 = vmatpush2.xpose.msra.mxu0 %v4687
    %4689 = vmatprep.mubr.f32.mxu0 0.0
    %v4690 = vand.u32 %v3308, 4294901760
    %4691 = vmatmul.mubr.f32.gmra.mxu0 %v4690
    %v4692 = vpop.f32.mrf.mxu0
    %v4693 = vadd.f32 %v4461, %v4692
    %v4694 = vpop.f32.mrf.mxu0
    %v4695 = vadd.f32 %v4463, %v4694
    %4696 = vdwg.mxu0
    %4697 = vmatprep.subr.mxu0 0.0
    %v4698 = vand.u32 %v3452, 4294901760
    %v4699 = vsub.f32 %v3452, %v4698
    %4700 = vmatpush1.xpose.msra.mxu0 %v4699
    %4701 = vmatprep.subr.mxu0 0.0
    %v4702 = vand.u32 %v3449, 4294901760
    %v4703 = vsub.f32 %v3449, %v4702
    %4704 = vmatpush1.xpose.msra.mxu0 %v4703
    %4705 = vmatprep.subr.mxu0 0.0
    %v4706 = vand.u32 %v3446, 4294901760
    %v4707 = vsub.f32 %v3446, %v4706
    %4708 = vmatpush1.xpose.msra.mxu0 %v4707
    %4709 = vmatprep.subr.mxu0 0.0
    %v4710 = vand.u32 %v3443, 4294901760
    %v4711 = vsub.f32 %v3443, %v4710
    %4712 = vmatpush1.xpose.msra.mxu0 %v4711
    %4713 = vmatprep.subr.mxu0 0.0
    %v4714 = vand.u32 %v3440, 4294901760
    %v4715 = vsub.f32 %v3440, %v4714
    %4716 = vmatpush1.xpose.msra.mxu0 %v4715
    %4717 = vmatprep.subr.mxu0 0.0
    %v4718 = vand.u32 %v3437, 4294901760
    %v4719 = vsub.f32 %v3437, %v4718
    %4720 = vmatpush1.xpose.msra.mxu0 %v4719
    %4721 = vmatprep.subr.mxu0 0.0
    %v4722 = vand.u32 %v3434, 4294901760
    %v4723 = vsub.f32 %v3434, %v4722
    %4724 = vmatpush1.xpose.msra.mxu0 %v4723
    %4725 = vmatprep.subr.mxu0 0.0
    %v4726 = vand.u32 %v3431, 4294901760
    %v4727 = vsub.f32 %v3431, %v4726
    %4728 = vmatpush1.xpose.msra.mxu0 %v4727
    %4729 = vmatprep.subr.mxu0 0.0
    %v4730 = vand.u32 %v3428, 4294901760
    %v4731 = vsub.f32 %v3428, %v4730
    %4732 = vmatpush1.xpose.msra.mxu0 %v4731
    %4733 = vmatprep.subr.mxu0 0.0
    %v4734 = vand.u32 %v3425, 4294901760
    %v4735 = vsub.f32 %v3425, %v4734
    %4736 = vmatpush1.xpose.msra.mxu0 %v4735
    %4737 = vmatprep.subr.mxu0 0.0
    %v4738 = vand.u32 %v3422, 4294901760
    %v4739 = vsub.f32 %v3422, %v4738
    %4740 = vmatpush1.xpose.msra.mxu0 %v4739
    %4741 = vmatprep.subr.mxu0 0.0
    %v4742 = vand.u32 %v3419, 4294901760
    %v4743 = vsub.f32 %v3419, %v4742
    %4744 = vmatpush1.xpose.msra.mxu0 %v4743
    %4745 = vmatprep.subr.mxu0 0.0
    %v4746 = vand.u32 %v3416, 4294901760
    %v4747 = vsub.f32 %v3416, %v4746
    %4748 = vmatpush1.xpose.msra.mxu0 %v4747
    %4749 = vmatprep.subr.mxu0 0.0
    %v4750 = vand.u32 %v3413, 4294901760
    %v4751 = vsub.f32 %v3413, %v4750
    %4752 = vmatpush1.xpose.msra.mxu0 %v4751
    %4753 = vmatprep.subr.mxu0 0.0
    %v4754 = vand.u32 %v3410, 4294901760
    %v4755 = vsub.f32 %v3410, %v4754
    %4756 = vmatpush1.xpose.msra.mxu0 %v4755
    %4757 = vmatprep.subr.mxu0 0.0
    %v4758 = vand.u32 %v3407, 4294901760
    %v4759 = vsub.f32 %v3407, %v4758
    %4760 = vmatpush1.xpose.msra.mxu0 %v4759
    %4761 = vmatprep.subr.mxu0 0.0
    %v4762 = vand.u32 %v3500, 4294901760
    %v4763 = vsub.f32 %v3500, %v4762
    %4764 = vmatpush2.xpose.msra.mxu0 %v4763
    %4765 = vmatprep.subr.mxu0 0.0
    %v4766 = vand.u32 %v3497, 4294901760
    %v4767 = vsub.f32 %v3497, %v4766
    %4768 = vmatpush2.xpose.msra.mxu0 %v4767
    %4769 = vmatprep.subr.mxu0 0.0
    %v4770 = vand.u32 %v3494, 4294901760
    %v4771 = vsub.f32 %v3494, %v4770
    %4772 = vmatpush2.xpose.msra.mxu0 %v4771
    %4773 = vmatprep.subr.mxu0 0.0
    %v4774 = vand.u32 %v3491, 4294901760
    %v4775 = vsub.f32 %v3491, %v4774
    %4776 = vmatpush2.xpose.msra.mxu0 %v4775
    %4777 = vmatprep.subr.mxu0 0.0
    %v4778 = vand.u32 %v3488, 4294901760
    %v4779 = vsub.f32 %v3488, %v4778
    %4780 = vmatpush2.xpose.msra.mxu0 %v4779
    %4781 = vmatprep.subr.mxu0 0.0
    %v4782 = vand.u32 %v3485, 4294901760
    %v4783 = vsub.f32 %v3485, %v4782
    %4784 = vmatpush2.xpose.msra.mxu0 %v4783
    %4785 = vmatprep.subr.mxu0 0.0
    %v4786 = vand.u32 %v3482, 4294901760
    %v4787 = vsub.f32 %v3482, %v4786
    %4788 = vmatpush2.xpose.msra.mxu0 %v4787
    %4789 = vmatprep.subr.mxu0 0.0
    %v4790 = vand.u32 %v3479, 4294901760
    %v4791 = vsub.f32 %v3479, %v4790
    %4792 = vmatpush2.xpose.msra.mxu0 %v4791
    %4793 = vmatprep.subr.mxu0 0.0
    %v4794 = vand.u32 %v3476, 4294901760
    %v4795 = vsub.f32 %v3476, %v4794
    %4796 = vmatpush2.xpose.msra.mxu0 %v4795
    %4797 = vmatprep.subr.mxu0 0.0
    %v4798 = vand.u32 %v3473, 4294901760
    %v4799 = vsub.f32 %v3473, %v4798
    %4800 = vmatpush2.xpose.msra.mxu0 %v4799
    %4801 = vmatprep.subr.mxu0 0.0
    %v4802 = vand.u32 %v3470, 4294901760
    %v4803 = vsub.f32 %v3470, %v4802
    %4804 = vmatpush2.xpose.msra.mxu0 %v4803
    %4805 = vmatprep.subr.mxu0 0.0
    %v4806 = vand.u32 %v3467, 4294901760
    %v4807 = vsub.f32 %v3467, %v4806
    %4808 = vmatpush2.xpose.msra.mxu0 %v4807
    %4809 = vmatprep.subr.mxu0 0.0
    %v4810 = vand.u32 %v3464, 4294901760
    %v4811 = vsub.f32 %v3464, %v4810
    %4812 = vmatpush2.xpose.msra.mxu0 %v4811
    %4813 = vmatprep.subr.mxu0 0.0
    %v4814 = vand.u32 %v3461, 4294901760
    %v4815 = vsub.f32 %v3461, %v4814
    %4816 = vmatpush2.xpose.msra.mxu0 %v4815
    %4817 = vmatprep.subr.mxu0 0.0
    %v4818 = vand.u32 %v3458, 4294901760
    %v4819 = vsub.f32 %v3458, %v4818
    %4820 = vmatpush2.xpose.msra.mxu0 %v4819
    %4821 = vmatprep.subr.mxu0 0.0
    %v4822 = vand.u32 %v3455, 4294901760
    %v4823 = vsub.f32 %v3455, %v4822
    %4824 = vmatpush2.xpose.msra.mxu0 %v4823
    %4825 = vmatprep.mubr.f32.mxu0 0.0
    %v4826 = vand.u32 %v3308, 4294901760
    %v4827 = vsub.f32 %v3308, %v4826
    %4828 = vmatmul.mubr.f32.gmra.mxu0 %v4827
    %v4829 = vpop.f32.mrf.mxu0
    %v4830 = vadd.f32 %v4693, %v4829
    %v4831 = vpop.f32.mrf.mxu0
    %v4832 = vadd.f32 %v4695, %v4831
    %4833 = vdwg.mxu0
    %4834 = vmatprep.subr.mxu0 0.0
    %v4835 = vand.u32 %v3452, 4294901760
    %4836 = vmatpush1.xpose.msra.mxu0 %v4835
    %4837 = vmatprep.subr.mxu0 0.0
    %v4838 = vand.u32 %v3449, 4294901760
    %4839 = vmatpush1.xpose.msra.mxu0 %v4838
    %4840 = vmatprep.subr.mxu0 0.0
    %v4841 = vand.u32 %v3446, 4294901760
    %4842 = vmatpush1.xpose.msra.mxu0 %v4841
    %4843 = vmatprep.subr.mxu0 0.0
    %v4844 = vand.u32 %v3443, 4294901760
    %4845 = vmatpush1.xpose.msra.mxu0 %v4844
    %4846 = vmatprep.subr.mxu0 0.0
    %v4847 = vand.u32 %v3440, 4294901760
    %4848 = vmatpush1.xpose.msra.mxu0 %v4847
    %4849 = vmatprep.subr.mxu0 0.0
    %v4850 = vand.u32 %v3437, 4294901760
    %4851 = vmatpush1.xpose.msra.mxu0 %v4850
    %4852 = vmatprep.subr.mxu0 0.0
    %v4853 = vand.u32 %v3434, 4294901760
    %4854 = vmatpush1.xpose.msra.mxu0 %v4853
    %4855 = vmatprep.subr.mxu0 0.0
    %v4856 = vand.u32 %v3431, 4294901760
    %4857 = vmatpush1.xpose.msra.mxu0 %v4856
    %4858 = vmatprep.subr.mxu0 0.0
    %v4859 = vand.u32 %v3428, 4294901760
    %4860 = vmatpush1.xpose.msra.mxu0 %v4859
    %4861 = vmatprep.subr.mxu0 0.0
    %v4862 = vand.u32 %v3425, 4294901760
    %4863 = vmatpush1.xpose.msra.mxu0 %v4862
    %4864 = vmatprep.subr.mxu0 0.0
    %v4865 = vand.u32 %v3422, 4294901760
    %4866 = vmatpush1.xpose.msra.mxu0 %v4865
    %4867 = vmatprep.subr.mxu0 0.0
    %v4868 = vand.u32 %v3419, 4294901760
    %4869 = vmatpush1.xpose.msra.mxu0 %v4868
    %4870 = vmatprep.subr.mxu0 0.0
    %v4871 = vand.u32 %v3416, 4294901760
    %4872 = vmatpush1.xpose.msra.mxu0 %v4871
    %4873 = vmatprep.subr.mxu0 0.0
    %v4874 = vand.u32 %v3413, 4294901760
    %4875 = vmatpush1.xpose.msra.mxu0 %v4874
    %4876 = vmatprep.subr.mxu0 0.0
    %v4877 = vand.u32 %v3410, 4294901760
    %4878 = vmatpush1.xpose.msra.mxu0 %v4877
    %4879 = vmatprep.subr.mxu0 0.0
    %v4880 = vand.u32 %v3407, 4294901760
    %4881 = vmatpush1.xpose.msra.mxu0 %v4880
    %4882 = vmatprep.subr.mxu0 0.0
    %v4883 = vand.u32 %v3500, 4294901760
    %4884 = vmatpush2.xpose.msra.mxu0 %v4883
    %4885 = vmatprep.subr.mxu0 0.0
    %v4886 = vand.u32 %v3497, 4294901760
    %4887 = vmatpush2.xpose.msra.mxu0 %v4886
    %4888 = vmatprep.subr.mxu0 0.0
    %v4889 = vand.u32 %v3494, 4294901760
    %4890 = vmatpush2.xpose.msra.mxu0 %v4889
    %4891 = vmatprep.subr.mxu0 0.0
    %v4892 = vand.u32 %v3491, 4294901760
    %4893 = vmatpush2.xpose.msra.mxu0 %v4892
    %4894 = vmatprep.subr.mxu0 0.0
    %v4895 = vand.u32 %v3488, 4294901760
    %4896 = vmatpush2.xpose.msra.mxu0 %v4895
    %4897 = vmatprep.subr.mxu0 0.0
    %v4898 = vand.u32 %v3485, 4294901760
    %4899 = vmatpush2.xpose.msra.mxu0 %v4898
    %4900 = vmatprep.subr.mxu0 0.0
    %v4901 = vand.u32 %v3482, 4294901760
    %4902 = vmatpush2.xpose.msra.mxu0 %v4901
    %4903 = vmatprep.subr.mxu0 0.0
    %v4904 = vand.u32 %v3479, 4294901760
    %4905 = vmatpush2.xpose.msra.mxu0 %v4904
    %4906 = vmatprep.subr.mxu0 0.0
    %v4907 = vand.u32 %v3476, 4294901760
    %4908 = vmatpush2.xpose.msra.mxu0 %v4907
    %4909 = vmatprep.subr.mxu0 0.0
    %v4910 = vand.u32 %v3473, 4294901760
    %4911 = vmatpush2.xpose.msra.mxu0 %v4910
    %4912 = vmatprep.subr.mxu0 0.0
    %v4913 = vand.u32 %v3470, 4294901760
    %4914 = vmatpush2.xpose.msra.mxu0 %v4913
    %4915 = vmatprep.subr.mxu0 0.0
    %v4916 = vand.u32 %v3467, 4294901760
    %4917 = vmatpush2.xpose.msra.mxu0 %v4916
    %4918 = vmatprep.subr.mxu0 0.0
    %v4919 = vand.u32 %v3464, 4294901760
    %4920 = vmatpush2.xpose.msra.mxu0 %v4919
    %4921 = vmatprep.subr.mxu0 0.0
    %v4922 = vand.u32 %v3461, 4294901760
    %4923 = vmatpush2.xpose.msra.mxu0 %v4922
    %4924 = vmatprep.subr.mxu0 0.0
    %v4925 = vand.u32 %v3458, 4294901760
    %4926 = vmatpush2.xpose.msra.mxu0 %v4925
    %4927 = vmatprep.subr.mxu0 0.0
    %v4928 = vand.u32 %v3455, 4294901760
    %4929 = vmatpush2.xpose.msra.mxu0 %v4928
    %4930 = vmatprep.mubr.f32.mxu0 0.0
    %v4931 = vand.u32 %v3308, 4294901760
    %v4932 = vsub.f32 %v3308, %v4931
    %v4933 = vand.u32 %v4932, 4294901760
    %4934 = vmatmul.mubr.f32.gmra.mxu0 %v4933
    %v4935 = vpop.f32.mrf.mxu0
    %v4936 = vadd.f32 %v4830, %v4935
    %v4937 = vpop.f32.mrf.mxu0
    %v4938 = vadd.f32 %v4832, %v4937
    %4939 = vdwg.mxu0
    %4940 = vmatprep.subr.mxu0 0.0
    %v4941 = vand.u32 %v3452, 4294901760
    %v4942 = vsub.f32 %v3452, %v4941
    %v4943 = vand.u32 %v4942, 4294901760
    %4944 = vmatpush1.xpose.msra.mxu0 %v4943
    %4945 = vmatprep.subr.mxu0 0.0
    %v4946 = vand.u32 %v3449, 4294901760
    %v4947 = vsub.f32 %v3449, %v4946
    %v4948 = vand.u32 %v4947, 4294901760
    %4949 = vmatpush1.xpose.msra.mxu0 %v4948
    %4950 = vmatprep.subr.mxu0 0.0
    %v4951 = vand.u32 %v3446, 4294901760
    %v4952 = vsub.f32 %v3446, %v4951
    %v4953 = vand.u32 %v4952, 4294901760
    %4954 = vmatpush1.xpose.msra.mxu0 %v4953
    %4955 = vmatprep.subr.mxu0 0.0
    %v4956 = vand.u32 %v3443, 4294901760
    %v4957 = vsub.f32 %v3443, %v4956
    %v4958 = vand.u32 %v4957, 4294901760
    %4959 = vmatpush1.xpose.msra.mxu0 %v4958
    %4960 = vmatprep.subr.mxu0 0.0
    %v4961 = vand.u32 %v3440, 4294901760
    %v4962 = vsub.f32 %v3440, %v4961
    %v4963 = vand.u32 %v4962, 4294901760
    %4964 = vmatpush1.xpose.msra.mxu0 %v4963
    %4965 = vmatprep.subr.mxu0 0.0
    %v4966 = vand.u32 %v3437, 4294901760
    %v4967 = vsub.f32 %v3437, %v4966
    %v4968 = vand.u32 %v4967, 4294901760
    %4969 = vmatpush1.xpose.msra.mxu0 %v4968
    %4970 = vmatprep.subr.mxu0 0.0
    %v4971 = vand.u32 %v3434, 4294901760
    %v4972 = vsub.f32 %v3434, %v4971
    %v4973 = vand.u32 %v4972, 4294901760
    %4974 = vmatpush1.xpose.msra.mxu0 %v4973
    %4975 = vmatprep.subr.mxu0 0.0
    %v4976 = vand.u32 %v3431, 4294901760
    %v4977 = vsub.f32 %v3431, %v4976
    %v4978 = vand.u32 %v4977, 4294901760
    %4979 = vmatpush1.xpose.msra.mxu0 %v4978
    %4980 = vmatprep.subr.mxu0 0.0
    %v4981 = vand.u32 %v3428, 4294901760
    %v4982 = vsub.f32 %v3428, %v4981
    %v4983 = vand.u32 %v4982, 4294901760
    %4984 = vmatpush1.xpose.msra.mxu0 %v4983
    %4985 = vmatprep.subr.mxu0 0.0
    %v4986 = vand.u32 %v3425, 4294901760
    %v4987 = vsub.f32 %v3425, %v4986
    %v4988 = vand.u32 %v4987, 4294901760
    %4989 = vmatpush1.xpose.msra.mxu0 %v4988
    %4990 = vmatprep.subr.mxu0 0.0
    %v4991 = vand.u32 %v3422, 4294901760
    %v4992 = vsub.f32 %v3422, %v4991
    %v4993 = vand.u32 %v4992, 4294901760
    %4994 = vmatpush1.xpose.msra.mxu0 %v4993
    %4995 = vmatprep.subr.mxu0 0.0
    %v4996 = vand.u32 %v3419, 4294901760
    %v4997 = vsub.f32 %v3419, %v4996
    %v4998 = vand.u32 %v4997, 4294901760
    %4999 = vmatpush1.xpose.msra.mxu0 %v4998
    %5000 = vmatprep.subr.mxu0 0.0
    %v5001 = vand.u32 %v3416, 4294901760
    %v5002 = vsub.f32 %v3416, %v5001
    %v5003 = vand.u32 %v5002, 4294901760
    %5004 = vmatpush1.xpose.msra.mxu0 %v5003
    %5005 = vmatprep.subr.mxu0 0.0
    %v5006 = vand.u32 %v3413, 4294901760
    %v5007 = vsub.f32 %v3413, %v5006
    %v5008 = vand.u32 %v5007, 4294901760
    %5009 = vmatpush1.xpose.msra.mxu0 %v5008
    %5010 = vmatprep.subr.mxu0 0.0
    %v5011 = vand.u32 %v3410, 4294901760
    %v5012 = vsub.f32 %v3410, %v5011
    %v5013 = vand.u32 %v5012, 4294901760
    %5014 = vmatpush1.xpose.msra.mxu0 %v5013
    %5015 = vmatprep.subr.mxu0 0.0
    %v5016 = vand.u32 %v3407, 4294901760
    %v5017 = vsub.f32 %v3407, %v5016
    %v5018 = vand.u32 %v5017, 4294901760
    %5019 = vmatpush1.xpose.msra.mxu0 %v5018
    %5020 = vmatprep.subr.mxu0 0.0
    %v5021 = vand.u32 %v3500, 4294901760
    %v5022 = vsub.f32 %v3500, %v5021
    %v5023 = vand.u32 %v5022, 4294901760
    %5024 = vmatpush2.xpose.msra.mxu0 %v5023
    %5025 = vmatprep.subr.mxu0 0.0
    %v5026 = vand.u32 %v3497, 4294901760
    %v5027 = vsub.f32 %v3497, %v5026
    %v5028 = vand.u32 %v5027, 4294901760
    %5029 = vmatpush2.xpose.msra.mxu0 %v5028
    %5030 = vmatprep.subr.mxu0 0.0
    %v5031 = vand.u32 %v3494, 4294901760
    %v5032 = vsub.f32 %v3494, %v5031
    %v5033 = vand.u32 %v5032, 4294901760
    %5034 = vmatpush2.xpose.msra.mxu0 %v5033
    %5035 = vmatprep.subr.mxu0 0.0
    %v5036 = vand.u32 %v3491, 4294901760
    %v5037 = vsub.f32 %v3491, %v5036
    %v5038 = vand.u32 %v5037, 4294901760
    %5039 = vmatpush2.xpose.msra.mxu0 %v5038
    %5040 = vmatprep.subr.mxu0 0.0
    %v5041 = vand.u32 %v3488, 4294901760
    %v5042 = vsub.f32 %v3488, %v5041
    %v5043 = vand.u32 %v5042, 4294901760
    %5044 = vmatpush2.xpose.msra.mxu0 %v5043
    %5045 = vmatprep.subr.mxu0 0.0
    %v5046 = vand.u32 %v3485, 4294901760
    %v5047 = vsub.f32 %v3485, %v5046
    %v5048 = vand.u32 %v5047, 4294901760
    %5049 = vmatpush2.xpose.msra.mxu0 %v5048
    %5050 = vmatprep.subr.mxu0 0.0
    %v5051 = vand.u32 %v3482, 4294901760
    %v5052 = vsub.f32 %v3482, %v5051
    %v5053 = vand.u32 %v5052, 4294901760
    %5054 = vmatpush2.xpose.msra.mxu0 %v5053
    %5055 = vmatprep.subr.mxu0 0.0
    %v5056 = vand.u32 %v3479, 4294901760
    %v5057 = vsub.f32 %v3479, %v5056
    %v5058 = vand.u32 %v5057, 4294901760
    %5059 = vmatpush2.xpose.msra.mxu0 %v5058
    %5060 = vmatprep.subr.mxu0 0.0
    %v5061 = vand.u32 %v3476, 4294901760
    %v5062 = vsub.f32 %v3476, %v5061
    %v5063 = vand.u32 %v5062, 4294901760
    %5064 = vmatpush2.xpose.msra.mxu0 %v5063
    %5065 = vmatprep.subr.mxu0 0.0
    %v5066 = vand.u32 %v3473, 4294901760
    %v5067 = vsub.f32 %v3473, %v5066
    %v5068 = vand.u32 %v5067, 4294901760
    %5069 = vmatpush2.xpose.msra.mxu0 %v5068
    %5070 = vmatprep.subr.mxu0 0.0
    %v5071 = vand.u32 %v3470, 4294901760
    %v5072 = vsub.f32 %v3470, %v5071
    %v5073 = vand.u32 %v5072, 4294901760
    %5074 = vmatpush2.xpose.msra.mxu0 %v5073
    %5075 = vmatprep.subr.mxu0 0.0
    %v5076 = vand.u32 %v3467, 4294901760
    %v5077 = vsub.f32 %v3467, %v5076
    %v5078 = vand.u32 %v5077, 4294901760
    %5079 = vmatpush2.xpose.msra.mxu0 %v5078
    %5080 = vmatprep.subr.mxu0 0.0
    %v5081 = vand.u32 %v3464, 4294901760
    %v5082 = vsub.f32 %v3464, %v5081
    %v5083 = vand.u32 %v5082, 4294901760
    %5084 = vmatpush2.xpose.msra.mxu0 %v5083
    %5085 = vmatprep.subr.mxu0 0.0
    %v5086 = vand.u32 %v3461, 4294901760
    %v5087 = vsub.f32 %v3461, %v5086
    %v5088 = vand.u32 %v5087, 4294901760
    %5089 = vmatpush2.xpose.msra.mxu0 %v5088
    %5090 = vmatprep.subr.mxu0 0.0
    %v5091 = vand.u32 %v3458, 4294901760
    %v5092 = vsub.f32 %v3458, %v5091
    %v5093 = vand.u32 %v5092, 4294901760
    %5094 = vmatpush2.xpose.msra.mxu0 %v5093
    %5095 = vmatprep.subr.mxu0 0.0
    %v5096 = vand.u32 %v3455, 4294901760
    %v5097 = vsub.f32 %v3455, %v5096
    %v5098 = vand.u32 %v5097, 4294901760
    %5099 = vmatpush2.xpose.msra.mxu0 %v5098
    %5100 = vmatprep.mubr.f32.mxu0 0.0
    %v5101 = vand.u32 %v3308, 4294901760
    %5102 = vmatmul.mubr.f32.gmra.mxu0 %v5101
    %v5103 = vpop.f32.mrf.mxu0
    %v5104 = vadd.f32 %v4936, %v5103
    %v5105 = vpop.f32.mrf.mxu0
    %v5106 = vadd.f32 %v4938, %v5105
    %5107 = vdwg.mxu0
    %5108 = vmatprep.subr.mxu0 0.0
    %v5109 = vand.u32 %v3452, 4294901760
    %5110 = vmatpush1.xpose.msra.mxu0 %v5109
    %5111 = vmatprep.subr.mxu0 0.0
    %v5112 = vand.u32 %v3449, 4294901760
    %5113 = vmatpush1.xpose.msra.mxu0 %v5112
    %5114 = vmatprep.subr.mxu0 0.0
    %v5115 = vand.u32 %v3446, 4294901760
    %5116 = vmatpush1.xpose.msra.mxu0 %v5115
    %5117 = vmatprep.subr.mxu0 0.0
    %v5118 = vand.u32 %v3443, 4294901760
    %5119 = vmatpush1.xpose.msra.mxu0 %v5118
    %5120 = vmatprep.subr.mxu0 0.0
    %v5121 = vand.u32 %v3440, 4294901760
    %5122 = vmatpush1.xpose.msra.mxu0 %v5121
    %5123 = vmatprep.subr.mxu0 0.0
    %v5124 = vand.u32 %v3437, 4294901760
    %5125 = vmatpush1.xpose.msra.mxu0 %v5124
    %5126 = vmatprep.subr.mxu0 0.0
    %v5127 = vand.u32 %v3434, 4294901760
    %5128 = vmatpush1.xpose.msra.mxu0 %v5127
    %5129 = vmatprep.subr.mxu0 0.0
    %v5130 = vand.u32 %v3431, 4294901760
    %5131 = vmatpush1.xpose.msra.mxu0 %v5130
    %5132 = vmatprep.subr.mxu0 0.0
    %v5133 = vand.u32 %v3428, 4294901760
    %5134 = vmatpush1.xpose.msra.mxu0 %v5133
    %5135 = vmatprep.subr.mxu0 0.0
    %v5136 = vand.u32 %v3425, 4294901760
    %5137 = vmatpush1.xpose.msra.mxu0 %v5136
    %5138 = vmatprep.subr.mxu0 0.0
    %v5139 = vand.u32 %v3422, 4294901760
    %5140 = vmatpush1.xpose.msra.mxu0 %v5139
    %5141 = vmatprep.subr.mxu0 0.0
    %v5142 = vand.u32 %v3419, 4294901760
    %5143 = vmatpush1.xpose.msra.mxu0 %v5142
    %5144 = vmatprep.subr.mxu0 0.0
    %v5145 = vand.u32 %v3416, 4294901760
    %5146 = vmatpush1.xpose.msra.mxu0 %v5145
    %5147 = vmatprep.subr.mxu0 0.0
    %v5148 = vand.u32 %v3413, 4294901760
    %5149 = vmatpush1.xpose.msra.mxu0 %v5148
    %5150 = vmatprep.subr.mxu0 0.0
    %v5151 = vand.u32 %v3410, 4294901760
    %5152 = vmatpush1.xpose.msra.mxu0 %v5151
    %5153 = vmatprep.subr.mxu0 0.0
    %v5154 = vand.u32 %v3407, 4294901760
    %5155 = vmatpush1.xpose.msra.mxu0 %v5154
    %5156 = vmatprep.subr.mxu0 0.0
    %v5157 = vand.u32 %v3500, 4294901760
    %5158 = vmatpush2.xpose.msra.mxu0 %v5157
    %5159 = vmatprep.subr.mxu0 0.0
    %v5160 = vand.u32 %v3497, 4294901760
    %5161 = vmatpush2.xpose.msra.mxu0 %v5160
    %5162 = vmatprep.subr.mxu0 0.0
    %v5163 = vand.u32 %v3494, 4294901760
    %5164 = vmatpush2.xpose.msra.mxu0 %v5163
    %5165 = vmatprep.subr.mxu0 0.0
    %v5166 = vand.u32 %v3491, 4294901760
    %5167 = vmatpush2.xpose.msra.mxu0 %v5166
    %5168 = vmatprep.subr.mxu0 0.0
    %v5169 = vand.u32 %v3488, 4294901760
    %5170 = vmatpush2.xpose.msra.mxu0 %v5169
    %5171 = vmatprep.subr.mxu0 0.0
    %v5172 = vand.u32 %v3485, 4294901760
    %5173 = vmatpush2.xpose.msra.mxu0 %v5172
    %5174 = vmatprep.subr.mxu0 0.0
    %v5175 = vand.u32 %v3482, 4294901760
    %5176 = vmatpush2.xpose.msra.mxu0 %v5175
    %5177 = vmatprep.subr.mxu0 0.0
    %v5178 = vand.u32 %v3479, 4294901760
    %5179 = vmatpush2.xpose.msra.mxu0 %v5178
    %5180 = vmatprep.subr.mxu0 0.0
    %v5181 = vand.u32 %v3476, 4294901760
    %5182 = vmatpush2.xpose.msra.mxu0 %v5181
    %5183 = vmatprep.subr.mxu0 0.0
    %v5184 = vand.u32 %v3473, 4294901760
    %5185 = vmatpush2.xpose.msra.mxu0 %v5184
    %5186 = vmatprep.subr.mxu0 0.0
    %v5187 = vand.u32 %v3470, 4294901760
    %5188 = vmatpush2.xpose.msra.mxu0 %v5187
    %5189 = vmatprep.subr.mxu0 0.0
    %v5190 = vand.u32 %v3467, 4294901760
    %5191 = vmatpush2.xpose.msra.mxu0 %v5190
    %5192 = vmatprep.subr.mxu0 0.0
    %v5193 = vand.u32 %v3464, 4294901760
    %5194 = vmatpush2.xpose.msra.mxu0 %v5193
    %5195 = vmatprep.subr.mxu0 0.0
    %v5196 = vand.u32 %v3461, 4294901760
    %5197 = vmatpush2.xpose.msra.mxu0 %v5196
    %5198 = vmatprep.subr.mxu0 0.0
    %v5199 = vand.u32 %v3458, 4294901760
    %5200 = vmatpush2.xpose.msra.mxu0 %v5199
    %5201 = vmatprep.subr.mxu0 0.0
    %v5202 = vand.u32 %v3455, 4294901760
    %5203 = vmatpush2.xpose.msra.mxu0 %v5202
    %5204 = vmatprep.mubr.f32.mxu0 0.0
    %v5205 = vand.u32 %v3308, 4294901760
    %5206 = vmatmul.mubr.f32.gmra.mxu0 %v5205
    %v5207 = vpop.f32.mrf.mxu0
    %v5208 = vadd.f32 %v5104, %v5207
    %v5209 = vpop.f32.mrf.mxu0
    %v5210 = vadd.f32 %v5106, %v5209
    %5211 = vdwg.mxu0
    %v5212 = vadd.f32 %v4353, %v4355
    %v5213 = vadd.f32 %v5212, %v5208
    %v5214 = vadd.f32 %v5213, %v5210
    %5215 = vadd.xlane.f32.xlu0 %v5214
    %v5216 = vpop.xlane.xlu0 %5215
    %v5217 = vmul.f32 %v5216, 0.001953125
    %v5218 = vsub.f32 %v4353, %v5217
    %v5219 = vsub.f32 %v4355, %v5217
    %v5220 = vsub.f32 %v5208, %v5217
    %v5221 = vsub.f32 %v5210, %v5217
    %v5222 = vmul.f32 %v5218, %v5218
    %v5223 = vmul.f32 %v5219, %v5219
    %v5224 = vmul.f32 %v5220, %v5220
    %v5225 = vmul.f32 %v5221, %v5221
    %v5226 = vadd.f32 %v5222, %v5223
    %v5227 = vadd.f32 %v5226, %v5224
    %v5228 = vadd.f32 %v5227, %v5225
    %5229 = vadd.xlane.f32.xlu0 %v5228
    %v5230 = vpop.xlane.xlu0 %5229
    %v5231 = vmul.f32 %v5230, 0.001953125
    %v5232 = vld [vmem:[%s3] sm:$0xff]
    %v5233 = vadd.f32 %v5231, 1e-05
    %v5234 = vrsqrt.pop %v5233
    %v5235 = vmul.f32 %v5232, %v5234
    %5237 = vset.pattern.permute.xlu0 0
    %5238 = vperm.xlu0 %5237, %v5235
    %v5239 = vpop.permute.xlu0 %5238
    %v5241 = vmul.f32 %v5218, %v5239
    %v5242 = vmul.f32 %v5219, %v5239
    %v5243 = vmul.f32 %v5220, %v5239
    %v5244 = vmul.f32 %v5221, %v5239
    %v5245 = vld [vmem:[%s4] sm:$0xff]
    %5247 = vset.pattern.permute.xlu0 0
    %5248 = vperm.xlu0 %5247, %v5245
    %v5249 = vpop.permute.xlu0 %5248
    %v5251 = vadd.f32 %v5241, %v5249
    %v5252 = vadd.f32 %v5242, %v5249
    %v5253 = vadd.f32 %v5243, %v5249
    %v5254 = vadd.f32 %v5244, %v5249
    %vm5255 = vcmp.ge.f32.partialorder %v5251, 0.0
    %vm5256 = vcmp.ge.f32.partialorder %v5252, 0.0
    %vm5257 = vcmp.ge.f32.partialorder %v5253, 0.0
    %vm5258 = vcmp.ge.f32.partialorder %v5254, 0.0
    %v5259 = vmul.f32 %v5251, 0.01
    %v5260 = vmul.f32 %v5252, 0.01
    %v5261 = vmul.f32 %v5253, 0.01
    %v5262 = vmul.f32 %v5254, 0.01
    %v5263 = vsel %vm5255, %v5251, %v5259
    %v5264 = vsel %vm5256, %v5252, %v5260
    %v5265 = vsel %vm5257, %v5253, %v5261
    %v5266 = vsel %vm5258, %v5254, %v5262
    %5267 = vst [vmem:[#allocation5] sm:$0xff] %v4353
    %5268 = vst [vmem:[#allocation5 + $0x8] sm:$0xff] %v4355
    %5269 = vst [vmem:[#allocation3] sm:$0xff] %v5263
    %5270 = vst [vmem:[#allocation3 + $0x8] sm:$0xff] %v5264
    %s5271 = scalar_lea.vmem [#allocation5], 16
    %5272 = vst [vmem:[%s5271] sm:$0xff] %v5208
    %5273 = vst [vmem:[%s5271 + $0x8] sm:$0xff] %v5210
    %s5274 = scalar_lea.vmem [#allocation3], 16
    %5275 = vst [vmem:[%s5274] sm:$0xff] %v5265
    %5276 = vst [vmem:[%s5274 + $0x8] sm:$0xff] %v5266
    // Predicated region
    $region22: #{tpu_custom_call.1} parent=1 // pred_check
      _
    $region23: #{tpu_custom_call.1} parent=1 // pred_check_branch
      %5278 = sbr.rel (0) target = $region25
    $region24: #{tpu_custom_call.1} parent=1 // pred_region
      %s5280 = ssub.s32 512, 512
      %5281 = vsyncadd [#allocation4], %s5280
      %s5282 = sshll.u32 [#allocation3], 4
      %s5283 = int_to_ptr.vmem [resolvable:$true] %s5282
      %5288 = dma.vmem_to_hbm [thread:$0]  %s5283, 512, %s5, [#allocation4], 256, 256, 16
    $region25: #{tpu_custom_call.1} parent=1 // pred_fallthru
      _
    // Predicated region
    $region26: #{tpu_custom_call.1} parent=1 // pred_check
      _
    $region27: #{tpu_custom_call.1} parent=1 // pred_check_branch
      %5290 = sbr.rel (0) target = $region29
    $region28: #{tpu_custom_call.1} parent=1 // pred_region
      %s5292 = ssub.s32 512, 512
      %5293 = vsyncadd [#allocation6], %s5292
      %s5294 = sshll.u32 [#allocation5], 4
      %s5295 = int_to_ptr.vmem [resolvable:$true] %s5294
      %5300 = dma.vmem_to_hbm [thread:$0]  %s5295, 512, %s6, [#allocation6], 256, 256, 16
    $region29: #{tpu_custom_call.1} parent=1 // pred_fallthru
      _
    // Predicated region
    $region30: #{tpu_custom_call.1} parent=1 // pred_check
      _
    $region31: #{tpu_custom_call.1} parent=1 // pred_check_branch
      %5302 = sbr.rel (0) target = $region33
    $region32: #{tpu_custom_call.1} parent=1 // pred_region
      %5303 = dma.done [#allocation4], 512
    $region33: #{tpu_custom_call.1} parent=1 // pred_fallthru
      _
    // Predicated region
    $region34: #{tpu_custom_call.1} parent=1 // pred_check
      _
    $region35: #{tpu_custom_call.1} parent=1 // pred_check_branch
      %5305 = sbr.rel (0) target = $region37
    $region36: #{tpu_custom_call.1} parent=1 // pred_region
      %5306 = dma.done [#allocation6], 512
    $region37: #{tpu_custom_call.1} parent=1 // pred_fallthru
      _
    %5307 = vsyncpa [#allocation4], 1
    %5308 = vsyncpa [#allocation6], 1

</llo_original>
